<compile_context>
chip_gen: v6e
topology: v6e:2x2x1
jax: 0.10.0
libtpu: 0.0.40
codegen_flags: <defaults>
</compile_context>

<pallas_src>
import functools
import math

import jax
import jax.numpy as jnp
from jax.experimental import pallas as pl
from jax.experimental.pallas import tpu as pltpu


# ---------------------------------------------------------------------------
# Kernel
# ---------------------------------------------------------------------------

def _layer_norm(t, w, b, eps=1e-5):
    mu = jnp.mean(t, axis=-1, keepdims=True)
    var = jnp.mean((t - mu) ** 2, axis=-1, keepdims=True)
    return (t - mu) * jax.lax.rsqrt(var + eps) * w + b


def fused_transformer_kernel(x_ref, maskf_ref,
                             in_w_ref, in_b_ref, out_w_ref, out_b_ref,
                             ln1_w_ref, ln1_b_ref,
                             ff1_w_ref, ff1_b_ref, ff2_w_ref, ff2_b_ref,
                             ln2_w_ref, ln2_b_ref,
                             cls_w_ref, cls_b_ref,
                             o_ref, *, num_heads, num_layers):
    """All encoder layers + masked mean pool + classifier in one kernel."""
    x = x_ref[...]                       # (TB, S, E)
    TB, S, E = x.shape
    H = num_heads
    Dh = E // H
    N = TB * S
    contract_last = (((1,), (1,)), ((), ()))     # row-major  x @ W.T

    maskf = maskf_ref[...]               # (TB, S); 1.0 where token is padding
    keep = 1.0 - maskf
    key_bias = jnp.where(maskf > 0.5, -1e30, 0.0)[:, None, :]   # (TB, 1, S), f32

    xf = x.reshape(N, E)                 # flatten (B,S) -> rows (layout no-op)

    for li in range(num_layers):         # static unroll; weights VMEM-resident
        # ---- fused QKV projection: single (N,E)x(E,3E) matmul --------------
        # 1/sqrt(Dh) is already folded into the q rows of in_w / in_b.
        qkv = jax.lax.dot_general(xf, in_w_ref[li], contract_last,
                                  preferred_element_type=jnp.float32)
        qkv = qkv + in_b_ref[li]                         # (N, 3E)

        out_w = out_w_ref[li]                            # (E, E)
        attn_out = jnp.zeros((N, E), jnp.float32) + out_b_ref[li]
        for h in range(H):               # static loop; no lane concatenation
            lo = h * Dh
            qh = qkv[:, lo:lo + Dh].reshape(TB, S, Dh)
            kh = qkv[:, E + lo:E + lo + Dh].reshape(TB, S, Dh)
            vh = qkv[:, 2 * E + lo:2 * E + lo + Dh].reshape(TB, S, Dh)

            s = jnp.einsum('bqd,bkd->bqk', qh, kh,
                           preferred_element_type=jnp.float32)   # (TB, S, S)
            s = s + key_bias
            s = s - jnp.max(s, axis=-1, keepdims=True)
            p = jnp.exp(s)
            p = p * pl.reciprocal(jnp.sum(p, axis=-1, keepdims=True),
                                  approx=True)
            ctx = jnp.einsum('bqk,bkd->bqd', p, vh,
                             preferred_element_type=jnp.float32)  # (TB, S, Dh)
            # fold this head's contribution through its out-projection slice
            attn_out = attn_out + jax.lax.dot_general(
                ctx.reshape(N, Dh), out_w[:, lo:lo + Dh], contract_last,
                preferred_element_type=jnp.float32)

        # ---- residual + LayerNorm 1 ----------------------------------------
        x1 = _layer_norm(xf + attn_out, ln1_w_ref[li], ln1_b_ref[li])

        # ---- feed forward: Linear -> ReLU -> Linear -------------------------
        hdn = jax.lax.dot_general(x1, ff1_w_ref[li], contract_last,
                                  preferred_element_type=jnp.float32)
        hdn = jnp.maximum(hdn + ff1_b_ref[li], 0.0)
        ff_out = jax.lax.dot_general(hdn, ff2_w_ref[li], contract_last,
                                     preferred_element_type=jnp.float32)
        ff_out = ff_out + ff2_b_ref[li]

        # ---- residual + LayerNorm 2 ----------------------------------------
        xf = _layer_norm(x1 + ff_out, ln2_w_ref[li], ln2_b_ref[li])

    # ---- masked mean pooling + classifier (lane-dense padded logits) -------
    xe = xf.reshape(TB, S, E)
    num = jnp.sum(xe * keep[:, :, None], axis=1)                    # (TB, E)
    den = jnp.maximum(jnp.sum(keep, axis=1, keepdims=True), 1e-9)   # (TB, 1)
    pooled = num * pl.reciprocal(den, approx=True)
    logits = jax.lax.dot_general(pooled, cls_w_ref[...], contract_last,
                                 preferred_element_type=jnp.float32)
    o_ref[...] = (logits + cls_b_ref[...]).astype(o_ref.dtype)


# ---------------------------------------------------------------------------
# Wrapper
# ---------------------------------------------------------------------------

def run_fused_transformer(x, maskf, stacked, cls_w_pad, cls_b_pad, num_heads):
    B, S, E = x.shape
    L = stacked[0].shape[0]
    F = stacked[6].shape[1]
    CP = cls_w_pad.shape[0]
    H = num_heads

    block_b = B if B <= 8 else 8
    assert B % block_b == 0, "batch must be divisible by the batch tile"
    grid = (B // block_b,)

    def batch_spec(shape):
        nd = len(shape)
        return pl.BlockSpec((block_b,) + tuple(shape[1:]),
                            lambda i, nd=nd: (i,) + (0,) * (nd - 1))

    def weight_spec(arr):
        nd = arr.ndim
        # full array, constant index -> stays VMEM-resident across grid steps
        return pl.BlockSpec(arr.shape, lambda i, nd=nd: (0,) * nd)

    weights = list(stacked) + [cls_w_pad, cls_b_pad]
    in_specs = ([batch_spec(x.shape), batch_spec(maskf.shape)]
                + [weight_spec(w) for w in weights])
    out_specs = pl.BlockSpec((block_b, CP), lambda i: (i, 0))

    flops = (L * (2 * B * S * (3 * E * E + E * E + 2 * E * F)
                  + 4 * B * S * S * E)
             + 2 * B * E * CP)
    transcendentals = L * B * H * S * S
    bytes_accessed = (sum(int(a.size) * a.dtype.itemsize
                          for a in [x, maskf] + weights) + B * CP * 4)

    return pl.pallas_call(
        functools.partial(fused_transformer_kernel,
                          num_heads=num_heads, num_layers=L),
        grid=grid,
        out_shape=jax.ShapeDtypeStruct((B, CP), jnp.float32),
        in_specs=in_specs,
        out_specs=out_specs,
        compiler_params=pltpu.CompilerParams(
            dimension_semantics=("parallel",),
            vmem_limit_bytes=32 * 1024 * 1024),
        cost_estimate=pl.CostEstimate(
            flops=int(flops), transcendentals=int(transcendentals),
            bytes_accessed=int(bytes_accessed)),
    )(x, maskf, *weights)


def prepare_params(params, num_heads, lane_pad=128):
    """One-time weight prep: fold attention scale, stack layers, pad classes."""
    E = params['token_embedding'].shape[1]
    scale = 1.0 / math.sqrt(E // num_heads)

    folded = []
    for lp in params['layers']:
        (in_w, in_b, out_w, out_b, ln1_w, ln1_b,
         ff1_w, ff1_b, ff2_w, ff2_b, ln2_w, ln2_b) = lp
        # fold 1/sqrt(Dh) into q rows of the in-projection (weight AND bias)
        in_w = in_w.at[:E, :].multiply(scale)
        in_b = in_b.at[:, :E].multiply(scale)
        folded.append((in_w, in_b, out_w, out_b, ln1_w, ln1_b,
                       ff1_w, ff1_b, ff2_w, ff2_b, ln2_w, ln2_b))
    stacked = tuple(jnp.stack([lp[j] for lp in folded], axis=0)
                    for j in range(12))

    C = params['cls_w'].shape[0]
    CP = lane_pad * pl.cdiv(C, lane_pad)          # lane-dense classifier width
    cls_w_pad = jnp.zeros((CP, E), jnp.float32).at[:C].set(params['cls_w'])
    cls_b_pad = jnp.zeros((1, CP), jnp.float32).at[:, :C].set(params['cls_b'])

    return {'stacked': stacked, 'cls_w_pad': cls_w_pad, 'cls_b_pad': cls_b_pad,
            'num_classes': C,
            'token_embedding': params['token_embedding'],
            'position_embedding': params['position_embedding']}


def transformer_classifier_forward(tokens, lengths, prepped, num_heads):
    """tokens: (B, S) int32; lengths accepted but unused (matches PyTorch)."""
    del lengths
    B, S = tokens.shape
    maskf = (tokens == 0).astype(jnp.float32)       # create_padding_mask
    # Embedding gather + positional add (data-dependent vocab gather; plain JAX glue)
    x = jnp.take(prepped['token_embedding'], tokens, axis=0)
    x = (x + prepped['position_embedding'][:S, :]).astype(jnp.float32)
    logits_pad = run_fused_transformer(x, maskf, prepped['stacked'],
                                       prepped['cls_w_pad'],
                                       prepped['cls_b_pad'], num_heads)
    return logits_pad[:, :prepped['num_classes']]


# ---------------------------------------------------------------------------
# Deterministic parameter init (PyTorch-equivalent parameterization)
# ---------------------------------------------------------------------------

def make_params(key, vocab_size, embed_dim, num_layers, ff_dim, num_classes,
                max_len):
    keys = jax.random.split(key, 4 + num_layers)
    params = {
        'token_embedding': 0.05 * jax.random.normal(
            keys[0], (vocab_size, embed_dim), jnp.float32),
        'position_embedding': 0.02 * jax.random.normal(
            keys[1], (max_len, embed_dim), jnp.float32),
        'cls_w': 0.05 * jax.random.normal(
            keys[2], (num_classes, embed_dim), jnp.float32),
        'cls_b': 0.01 * jax.random.normal(
            keys[3], (1, num_classes), jnp.float32),
        'layers': [],
    }
    for li in range(num_layers):
        lk = jax.random.split(keys[4 + li], 6)
        E, F = embed_dim, ff_dim
        layer = (
            0.05 * jax.random.normal(lk[0], (3 * E, E), jnp.float32),   # in_proj_w
            0.01 * jax.random.normal(lk[1], (1, 3 * E), jnp.float32),   # in_proj_b
            0.05 * jax.random.normal(lk[2], (E, E), jnp.float32),       # out_proj_w
            0.01 * jax.random.normal(lk[3], (1, E), jnp.float32),       # out_proj_b
            jnp.ones((1, E), jnp.float32),                              # ln1_w
            jnp.zeros((1, E), jnp.float32),                             # ln1_b
            0.05 * jax.random.normal(lk[4], (F, E), jnp.float32),       # ff1_w
            jnp.zeros((1, F), jnp.float32),                             # ff1_b
            0.05 * jax.random.normal(lk[5], (E, F), jnp.float32),       # ff2_w
            jnp.zeros((1, E), jnp.float32),                             # ff2_b
            jnp.ones((1, E), jnp.float32),                              # ln2_w
            jnp.zeros((1, E), jnp.float32),                             # ln2_b
        )
        params['layers'].append(layer)
    return params


# ---------------------------------------------------------------------------
# Main
# ---------------------------------------------------------------------------

if __name__ == "__main__":
    VOCAB, EMBED, HEADS, LAYERS, FF, CLASSES, MAX_LEN = 50, 32, 4, 2, 64, 3, 16
    B, S = 2, 8

    key = jax.random.PRNGKey(0)
    pkey, tkey = jax.random.split(key)
    params = make_params(pkey, VOCAB, EMBED, LAYERS, FF, CLASSES, MAX_LEN)
    prepped = prepare_params(params, HEADS)

    tokens = jax.random.randint(tkey, (B, S), 1, VOCAB, dtype=jnp.int32)
    # introduce padding (token id 0) at the tail of each sequence
    tokens = tokens.at[0, 6:].set(0)
    tokens = tokens.at[1, 4:].set(0)
    lengths = jnp.array([6, 4], dtype=jnp.int32)   # unused by forward, kept for parity

    logits = transformer_classifier_forward(tokens, lengths, prepped, HEADS)
    logits = jax.block_until_ready(logits)
    assert logits.shape == (B, CLASSES) and logits.dtype == jnp.float32
    print("KERNEL_OK")
</pallas_src>

<mosaic_0001>
module attributes {stable_mosaic.version = 11 : i64} {
  func.func @fused_transformer_kernel(%arg0: i32, %arg1: memref<2x8x32xf32, #tpu.memory_space<vmem>>, %arg2: memref<2x8xf32, #tpu.memory_space<vmem>>, %arg3: memref<2x96x32xf32, #tpu.memory_space<vmem>>, %arg4: memref<2x1x96xf32, #tpu.memory_space<vmem>>, %arg5: memref<2x32x32xf32, #tpu.memory_space<vmem>>, %arg6: memref<2x1x32xf32, #tpu.memory_space<vmem>>, %arg7: memref<2x1x32xf32, #tpu.memory_space<vmem>>, %arg8: memref<2x1x32xf32, #tpu.memory_space<vmem>>, %arg9: memref<2x64x32xf32, #tpu.memory_space<vmem>>, %arg10: memref<2x1x64xf32, #tpu.memory_space<vmem>>, %arg11: memref<2x32x64xf32, #tpu.memory_space<vmem>>, %arg12: memref<2x1x32xf32, #tpu.memory_space<vmem>>, %arg13: memref<2x1x32xf32, #tpu.memory_space<vmem>>, %arg14: memref<2x1x32xf32, #tpu.memory_space<vmem>>, %arg15: memref<128x32xf32, #tpu.memory_space<vmem>>, %arg16: memref<1x128xf32, #tpu.memory_space<vmem>>, %arg17: memref<2x128xf32, #tpu.memory_space<vmem>>) attributes {dimension_semantics = [#tpu.dimension_semantics<parallel>], iteration_bounds = array<i64: 1>, scalar_prefetch = 0 : i64, scratch_operands = 0 : i64, tpu.core_type = #tpu.core_type<tc>, window_params = [{transform_indices = @transform_0, window_bounds = array<i64: 2, 8, 32>}, {transform_indices = @transform_1, window_bounds = array<i64: 2, 8>}, {pipeline_mode = #tpu.pipeline_mode<synchronous>, transform_indices = @transform_2, window_bounds = array<i64: 2, 96, 32>}, {pipeline_mode = #tpu.pipeline_mode<synchronous>, transform_indices = @transform_3, window_bounds = array<i64: 2, 1, 96>}, {pipeline_mode = #tpu.pipeline_mode<synchronous>, transform_indices = @transform_4, window_bounds = array<i64: 2, 32, 32>}, {pipeline_mode = #tpu.pipeline_mode<synchronous>, transform_indices = @transform_5, window_bounds = array<i64: 2, 1, 32>}, {pipeline_mode = #tpu.pipeline_mode<synchronous>, transform_indices = @transform_6, window_bounds = array<i64: 2, 1, 32>}, {pipeline_mode = #tpu.pipeline_mode<synchronous>, transform_indices = @transform_7, window_bounds = array<i64: 2, 1, 32>}, {pipeline_mode = #tpu.pipeline_mode<synchronous>, transform_indices = @transform_8, window_bounds = array<i64: 2, 64, 32>}, {pipeline_mode = #tpu.pipeline_mode<synchronous>, transform_indices = @transform_9, window_bounds = array<i64: 2, 1, 64>}, {pipeline_mode = #tpu.pipeline_mode<synchronous>, transform_indices = @transform_10, window_bounds = array<i64: 2, 32, 64>}, {pipeline_mode = #tpu.pipeline_mode<synchronous>, transform_indices = @transform_11, window_bounds = array<i64: 2, 1, 32>}, {pipeline_mode = #tpu.pipeline_mode<synchronous>, transform_indices = @transform_12, window_bounds = array<i64: 2, 1, 32>}, {pipeline_mode = #tpu.pipeline_mode<synchronous>, transform_indices = @transform_13, window_bounds = array<i64: 2, 1, 32>}, {pipeline_mode = #tpu.pipeline_mode<synchronous>, transform_indices = @transform_14, window_bounds = array<i64: 128, 32>}, {pipeline_mode = #tpu.pipeline_mode<synchronous>, transform_indices = @transform_15, window_bounds = array<i64: 1, 128>}, {transform_indices = @transform_16, window_bounds = array<i64: 2, 128>}]} {
    %c0 = arith.constant 0 : index
    %c0_0 = arith.constant 0 : index
    %c0_1 = arith.constant 0 : index
    %0 = vector.load %arg1[%c0, %c0_0, %c0_1] : memref<2x8x32xf32, #tpu.memory_space<vmem>>, vector<2x8x32xf32>
    %c0_2 = arith.constant 0 : index
    %c0_3 = arith.constant 0 : index
    %1 = vector.load %arg2[%c0_2, %c0_3] : memref<2x8xf32, #tpu.memory_space<vmem>>, vector<2x8xf32>
    %cst = arith.constant 1.000000e+00 : f32
    %2 = vector.broadcast %cst : f32 to vector<2x8xf32>
    %3 = arith.subf %2, %1 : vector<2x8xf32>
    %cst_4 = arith.constant 5.000000e-01 : f32
    %4 = vector.broadcast %cst_4 : f32 to vector<2x8xf32>
    %5 = arith.cmpf ogt, %1, %4 : vector<2x8xf32>
    %cst_5 = arith.constant -1.000000e+30 : f32
    %cst_6 = arith.constant 0.000000e+00 : f32
    %6 = vector.broadcast %cst_5 : f32 to vector<2x8xf32>
    %7 = vector.broadcast %cst_6 : f32 to vector<2x8xf32>
    %8 = arith.select %5, %6, %7 : vector<2x8xi1>, vector<2x8xf32>
    %9 = vector.shape_cast %8 : vector<2x8xf32> to vector<2x1x8xf32>
    %10 = vector.shape_cast %0 : vector<2x8x32xf32> to vector<16x32xf32>
    %c0_7 = arith.constant 0 : index
    %c0_8 = arith.constant 0 : index
    %c0_9 = arith.constant 0 : index
    %11 = vector.load %arg3[%c0_7, %c0_8, %c0_9] : memref<2x96x32xf32, #tpu.memory_space<vmem>>, vector<1x96x32xf32>
    %12 = vector.shape_cast %11 : vector<1x96x32xf32> to vector<96x32xf32>
    %cst_10 = arith.constant dense<0.000000e+00> : vector<16x96xf32>
    %13 = tpu.matmul %10, %12, %cst_10 {dimension_numbers = #tpu.dot_dimension_numbers<[1], [1], [0], [0], [0, 0, 1, 0], [], []>} : vector<16x32xf32>, vector<96x32xf32>, vector<16x96xf32> -> vector<16x96xf32>
    %c0_11 = arith.constant 0 : index
    %c0_12 = arith.constant 0 : index
    %c0_13 = arith.constant 0 : index
    %14 = vector.load %arg4[%c0_11, %c0_12, %c0_13] : memref<2x1x96xf32, #tpu.memory_space<vmem>>, vector<1x1x96xf32>
    %15 = vector.shape_cast %14 : vector<1x1x96xf32> to vector<1x96xf32>
    %16 = vector.broadcast %15 : vector<1x96xf32> to vector<16x96xf32>
    %17 = arith.addf %13, %16 : vector<16x96xf32>
    %c0_14 = arith.constant 0 : index
    %c0_15 = arith.constant 0 : index
    %c0_16 = arith.constant 0 : index
    %18 = vector.load %arg5[%c0_14, %c0_15, %c0_16] : memref<2x32x32xf32, #tpu.memory_space<vmem>>, vector<1x32x32xf32>
    %19 = vector.shape_cast %18 : vector<1x32x32xf32> to vector<32x32xf32>
    %cst_17 = arith.constant 0.000000e+00 : f32
    %20 = vector.broadcast %cst_17 : f32 to vector<16x32xf32>
    %c0_18 = arith.constant 0 : index
    %c0_19 = arith.constant 0 : index
    %c0_20 = arith.constant 0 : index
    %21 = vector.load %arg6[%c0_18, %c0_19, %c0_20] : memref<2x1x32xf32, #tpu.memory_space<vmem>>, vector<1x1x32xf32>
    %22 = vector.shape_cast %21 : vector<1x1x32xf32> to vector<1x32xf32>
    %23 = vector.broadcast %22 : vector<1x32xf32> to vector<16x32xf32>
    %24 = arith.addf %20, %23 : vector<16x32xf32>
    %25 = vector.extract_strided_slice %17 {offsets = [0, 0], sizes = [16, 8], strides = [1, 1]} : vector<16x96xf32> to vector<16x8xf32>
    %26 = vector.shape_cast %25 : vector<16x8xf32> to vector<2x8x8xf32>
    %27 = vector.extract_strided_slice %17 {offsets = [0, 32], sizes = [16, 8], strides = [1, 1]} : vector<16x96xf32> to vector<16x8xf32>
    %28 = vector.shape_cast %27 : vector<16x8xf32> to vector<2x8x8xf32>
    %29 = vector.extract_strided_slice %17 {offsets = [0, 64], sizes = [16, 8], strides = [1, 1]} : vector<16x96xf32> to vector<16x8xf32>
    %30 = vector.shape_cast %29 : vector<16x8xf32> to vector<2x8x8xf32>
    "tpu.trace_start"() <{level = 10 : i32, message = "bqd,bkd->bqk"}> : () -> ()
    %cst_21 = arith.constant dense<0.000000e+00> : vector<2x8x8xf32>
    %31 = tpu.matmul %26, %28, %cst_21 {dimension_numbers = #tpu.dot_dimension_numbers<[2], [2], [1], [1], [0, 0, 0, 1, 1, 1], [0], [0]>} : vector<2x8x8xf32>, vector<2x8x8xf32>, vector<2x8x8xf32> -> vector<2x8x8xf32>
    "tpu.trace_stop"() : () -> ()
    %32 = vector.broadcast %9 : vector<2x1x8xf32> to vector<2x8x8xf32>
    %33 = arith.addf %31, %32 : vector<2x8x8xf32>
    %cst_22 = arith.constant dense<0xFF800000> : vector<2x8xf32>
    %34 = vector.multi_reduction <maximumf>, %33, %cst_22 [2] : vector<2x8x8xf32> to vector<2x8xf32>
    %35 = vector.shape_cast %34 : vector<2x8xf32> to vector<2x8x1xf32>
    %36 = vector.broadcast %35 : vector<2x8x1xf32> to vector<2x8x8xf32>
    %37 = arith.subf %33, %36 : vector<2x8x8xf32>
    %38 = math.exp %37 : vector<2x8x8xf32>
    %cst_23 = arith.constant dense<0.000000e+00> : vector<2x8xf32>
    %39 = vector.multi_reduction <add>, %38, %cst_23 [2] : vector<2x8x8xf32> to vector<2x8xf32>
    %40 = vector.shape_cast %39 : vector<2x8xf32> to vector<2x8x1xf32>
    %41 = tpu.reciprocal %40 {approx = true} : vector<2x8x1xf32> -> vector<2x8x1xf32>
    %42 = vector.broadcast %41 : vector<2x8x1xf32> to vector<2x8x8xf32>
    %43 = arith.mulf %38, %42 : vector<2x8x8xf32>
    "tpu.trace_start"() <{level = 10 : i32, message = "bqk,bkd->bqd"}> : () -> ()
    %cst_24 = arith.constant dense<0.000000e+00> : vector<2x8x8xf32>
    %44 = tpu.matmul %43, %30, %cst_24 {dimension_numbers = #tpu.dot_dimension_numbers<[2], [1], [1], [2], [0, 0, 0, 1, 1, 2], [0], [0]>} : vector<2x8x8xf32>, vector<2x8x8xf32>, vector<2x8x8xf32> -> vector<2x8x8xf32>
    "tpu.trace_stop"() : () -> ()
    %45 = vector.shape_cast %44 : vector<2x8x8xf32> to vector<16x8xf32>
    %46 = vector.extract_strided_slice %19 {offsets = [0, 0], sizes = [32, 8], strides = [1, 1]} : vector<32x32xf32> to vector<32x8xf32>
    %cst_25 = arith.constant dense<0.000000e+00> : vector<16x32xf32>
    %47 = tpu.matmul %45, %46, %cst_25 {dimension_numbers = #tpu.dot_dimension_numbers<[1], [1], [0], [0], [0, 0, 1, 0], [], []>} : vector<16x8xf32>, vector<32x8xf32>, vector<16x32xf32> -> vector<16x32xf32>
    %48 = arith.addf %24, %47 : vector<16x32xf32>
    %49 = vector.extract_strided_slice %17 {offsets = [0, 8], sizes = [16, 8], strides = [1, 1]} : vector<16x96xf32> to vector<16x8xf32>
    %50 = vector.shape_cast %49 : vector<16x8xf32> to vector<2x8x8xf32>
    %51 = vector.extract_strided_slice %17 {offsets = [0, 40], sizes = [16, 8], strides = [1, 1]} : vector<16x96xf32> to vector<16x8xf32>
    %52 = vector.shape_cast %51 : vector<16x8xf32> to vector<2x8x8xf32>
    %53 = vector.extract_strided_slice %17 {offsets = [0, 72], sizes = [16, 8], strides = [1, 1]} : vector<16x96xf32> to vector<16x8xf32>
    %54 = vector.shape_cast %53 : vector<16x8xf32> to vector<2x8x8xf32>
    "tpu.trace_start"() <{level = 10 : i32, message = "bqd,bkd->bqk"}> : () -> ()
    %cst_26 = arith.constant dense<0.000000e+00> : vector<2x8x8xf32>
    %55 = tpu.matmul %50, %52, %cst_26 {dimension_numbers = #tpu.dot_dimension_numbers<[2], [2], [1], [1], [0, 0, 0, 1, 1, 1], [0], [0]>} : vector<2x8x8xf32>, vector<2x8x8xf32>, vector<2x8x8xf32> -> vector<2x8x8xf32>
    "tpu.trace_stop"() : () -> ()
    %56 = vector.broadcast %9 : vector<2x1x8xf32> to vector<2x8x8xf32>
    %57 = arith.addf %55, %56 : vector<2x8x8xf32>
    %cst_27 = arith.constant dense<0xFF800000> : vector<2x8xf32>
    %58 = vector.multi_reduction <maximumf>, %57, %cst_27 [2] : vector<2x8x8xf32> to vector<2x8xf32>
    %59 = vector.shape_cast %58 : vector<2x8xf32> to vector<2x8x1xf32>
    %60 = vector.broadcast %59 : vector<2x8x1xf32> to vector<2x8x8xf32>
    %61 = arith.subf %57, %60 : vector<2x8x8xf32>
    %62 = math.exp %61 : vector<2x8x8xf32>
    %cst_28 = arith.constant dense<0.000000e+00> : vector<2x8xf32>
    %63 = vector.multi_reduction <add>, %62, %cst_28 [2] : vector<2x8x8xf32> to vector<2x8xf32>
    %64 = vector.shape_cast %63 : vector<2x8xf32> to vector<2x8x1xf32>
    %65 = tpu.reciprocal %64 {approx = true} : vector<2x8x1xf32> -> vector<2x8x1xf32>
    %66 = vector.broadcast %65 : vector<2x8x1xf32> to vector<2x8x8xf32>
    %67 = arith.mulf %62, %66 : vector<2x8x8xf32>
    "tpu.trace_start"() <{level = 10 : i32, message = "bqk,bkd->bqd"}> : () -> ()
    %cst_29 = arith.constant dense<0.000000e+00> : vector<2x8x8xf32>
    %68 = tpu.matmul %67, %54, %cst_29 {dimension_numbers = #tpu.dot_dimension_numbers<[2], [1], [1], [2], [0, 0, 0, 1, 1, 2], [0], [0]>} : vector<2x8x8xf32>, vector<2x8x8xf32>, vector<2x8x8xf32> -> vector<2x8x8xf32>
    "tpu.trace_stop"() : () -> ()
    %69 = vector.shape_cast %68 : vector<2x8x8xf32> to vector<16x8xf32>
    %70 = vector.extract_strided_slice %19 {offsets = [0, 8], sizes = [32, 8], strides = [1, 1]} : vector<32x32xf32> to vector<32x8xf32>
    %cst_30 = arith.constant dense<0.000000e+00> : vector<16x32xf32>
    %71 = tpu.matmul %69, %70, %cst_30 {dimension_numbers = #tpu.dot_dimension_numbers<[1], [1], [0], [0], [0, 0, 1, 0], [], []>} : vector<16x8xf32>, vector<32x8xf32>, vector<16x32xf32> -> vector<16x32xf32>
    %72 = arith.addf %48, %71 : vector<16x32xf32>
    %73 = vector.extract_strided_slice %17 {offsets = [0, 16], sizes = [16, 8], strides = [1, 1]} : vector<16x96xf32> to vector<16x8xf32>
    %74 = vector.shape_cast %73 : vector<16x8xf32> to vector<2x8x8xf32>
    %75 = vector.extract_strided_slice %17 {offsets = [0, 48], sizes = [16, 8], strides = [1, 1]} : vector<16x96xf32> to vector<16x8xf32>
    %76 = vector.shape_cast %75 : vector<16x8xf32> to vector<2x8x8xf32>
    %77 = vector.extract_strided_slice %17 {offsets = [0, 80], sizes = [16, 8], strides = [1, 1]} : vector<16x96xf32> to vector<16x8xf32>
    %78 = vector.shape_cast %77 : vector<16x8xf32> to vector<2x8x8xf32>
    "tpu.trace_start"() <{level = 10 : i32, message = "bqd,bkd->bqk"}> : () -> ()
    %cst_31 = arith.constant dense<0.000000e+00> : vector<2x8x8xf32>
    %79 = tpu.matmul %74, %76, %cst_31 {dimension_numbers = #tpu.dot_dimension_numbers<[2], [2], [1], [1], [0, 0, 0, 1, 1, 1], [0], [0]>} : vector<2x8x8xf32>, vector<2x8x8xf32>, vector<2x8x8xf32> -> vector<2x8x8xf32>
    "tpu.trace_stop"() : () -> ()
    %80 = vector.broadcast %9 : vector<2x1x8xf32> to vector<2x8x8xf32>
    %81 = arith.addf %79, %80 : vector<2x8x8xf32>
    %cst_32 = arith.constant dense<0xFF800000> : vector<2x8xf32>
    %82 = vector.multi_reduction <maximumf>, %81, %cst_32 [2] : vector<2x8x8xf32> to vector<2x8xf32>
    %83 = vector.shape_cast %82 : vector<2x8xf32> to vector<2x8x1xf32>
    %84 = vector.broadcast %83 : vector<2x8x1xf32> to vector<2x8x8xf32>
    %85 = arith.subf %81, %84 : vector<2x8x8xf32>
    %86 = math.exp %85 : vector<2x8x8xf32>
    %cst_33 = arith.constant dense<0.000000e+00> : vector<2x8xf32>
    %87 = vector.multi_reduction <add>, %86, %cst_33 [2] : vector<2x8x8xf32> to vector<2x8xf32>
    %88 = vector.shape_cast %87 : vector<2x8xf32> to vector<2x8x1xf32>
    %89 = tpu.reciprocal %88 {approx = true} : vector<2x8x1xf32> -> vector<2x8x1xf32>
    %90 = vector.broadcast %89 : vector<2x8x1xf32> to vector<2x8x8xf32>
    %91 = arith.mulf %86, %90 : vector<2x8x8xf32>
    "tpu.trace_start"() <{level = 10 : i32, message = "bqk,bkd->bqd"}> : () -> ()
    %cst_34 = arith.constant dense<0.000000e+00> : vector<2x8x8xf32>
    %92 = tpu.matmul %91, %78, %cst_34 {dimension_numbers = #tpu.dot_dimension_numbers<[2], [1], [1], [2], [0, 0, 0, 1, 1, 2], [0], [0]>} : vector<2x8x8xf32>, vector<2x8x8xf32>, vector<2x8x8xf32> -> vector<2x8x8xf32>
    "tpu.trace_stop"() : () -> ()
    %93 = vector.shape_cast %92 : vector<2x8x8xf32> to vector<16x8xf32>
    %94 = vector.extract_strided_slice %19 {offsets = [0, 16], sizes = [32, 8], strides = [1, 1]} : vector<32x32xf32> to vector<32x8xf32>
    %cst_35 = arith.constant dense<0.000000e+00> : vector<16x32xf32>
    %95 = tpu.matmul %93, %94, %cst_35 {dimension_numbers = #tpu.dot_dimension_numbers<[1], [1], [0], [0], [0, 0, 1, 0], [], []>} : vector<16x8xf32>, vector<32x8xf32>, vector<16x32xf32> -> vector<16x32xf32>
    %96 = arith.addf %72, %95 : vector<16x32xf32>
    %97 = vector.extract_strided_slice %17 {offsets = [0, 24], sizes = [16, 8], strides = [1, 1]} : vector<16x96xf32> to vector<16x8xf32>
    %98 = vector.shape_cast %97 : vector<16x8xf32> to vector<2x8x8xf32>
    %99 = vector.extract_strided_slice %17 {offsets = [0, 56], sizes = [16, 8], strides = [1, 1]} : vector<16x96xf32> to vector<16x8xf32>
    %100 = vector.shape_cast %99 : vector<16x8xf32> to vector<2x8x8xf32>
    %101 = vector.extract_strided_slice %17 {offsets = [0, 88], sizes = [16, 8], strides = [1, 1]} : vector<16x96xf32> to vector<16x8xf32>
    %102 = vector.shape_cast %101 : vector<16x8xf32> to vector<2x8x8xf32>
    "tpu.trace_start"() <{level = 10 : i32, message = "bqd,bkd->bqk"}> : () -> ()
    %cst_36 = arith.constant dense<0.000000e+00> : vector<2x8x8xf32>
    %103 = tpu.matmul %98, %100, %cst_36 {dimension_numbers = #tpu.dot_dimension_numbers<[2], [2], [1], [1], [0, 0, 0, 1, 1, 1], [0], [0]>} : vector<2x8x8xf32>, vector<2x8x8xf32>, vector<2x8x8xf32> -> vector<2x8x8xf32>
    "tpu.trace_stop"() : () -> ()
    %104 = vector.broadcast %9 : vector<2x1x8xf32> to vector<2x8x8xf32>
    %105 = arith.addf %103, %104 : vector<2x8x8xf32>
    %cst_37 = arith.constant dense<0xFF800000> : vector<2x8xf32>
    %106 = vector.multi_reduction <maximumf>, %105, %cst_37 [2] : vector<2x8x8xf32> to vector<2x8xf32>
    %107 = vector.shape_cast %106 : vector<2x8xf32> to vector<2x8x1xf32>
    %108 = vector.broadcast %107 : vector<2x8x1xf32> to vector<2x8x8xf32>
    %109 = arith.subf %105, %108 : vector<2x8x8xf32>
    %110 = math.exp %109 : vector<2x8x8xf32>
    %cst_38 = arith.constant dense<0.000000e+00> : vector<2x8xf32>
    %111 = vector.multi_reduction <add>, %110, %cst_38 [2] : vector<2x8x8xf32> to vector<2x8xf32>
    %112 = vector.shape_cast %111 : vector<2x8xf32> to vector<2x8x1xf32>
    %113 = tpu.reciprocal %112 {approx = true} : vector<2x8x1xf32> -> vector<2x8x1xf32>
    %114 = vector.broadcast %113 : vector<2x8x1xf32> to vector<2x8x8xf32>
    %115 = arith.mulf %110, %114 : vector<2x8x8xf32>
    "tpu.trace_start"() <{level = 10 : i32, message = "bqk,bkd->bqd"}> : () -> ()
    %cst_39 = arith.constant dense<0.000000e+00> : vector<2x8x8xf32>
    %116 = tpu.matmul %115, %102, %cst_39 {dimension_numbers = #tpu.dot_dimension_numbers<[2], [1], [1], [2], [0, 0, 0, 1, 1, 2], [0], [0]>} : vector<2x8x8xf32>, vector<2x8x8xf32>, vector<2x8x8xf32> -> vector<2x8x8xf32>
    "tpu.trace_stop"() : () -> ()
    %117 = vector.shape_cast %116 : vector<2x8x8xf32> to vector<16x8xf32>
    %118 = vector.extract_strided_slice %19 {offsets = [0, 24], sizes = [32, 8], strides = [1, 1]} : vector<32x32xf32> to vector<32x8xf32>
    %cst_40 = arith.constant dense<0.000000e+00> : vector<16x32xf32>
    %119 = tpu.matmul %117, %118, %cst_40 {dimension_numbers = #tpu.dot_dimension_numbers<[1], [1], [0], [0], [0, 0, 1, 0], [], []>} : vector<16x8xf32>, vector<32x8xf32>, vector<16x32xf32> -> vector<16x32xf32>
    %120 = arith.addf %96, %119 : vector<16x32xf32>
    %121 = arith.addf %10, %120 : vector<16x32xf32>
    %c0_41 = arith.constant 0 : index
    %c0_42 = arith.constant 0 : index
    %c0_43 = arith.constant 0 : index
    %122 = vector.load %arg7[%c0_41, %c0_42, %c0_43] : memref<2x1x32xf32, #tpu.memory_space<vmem>>, vector<1x1x32xf32>
    %123 = vector.shape_cast %122 : vector<1x1x32xf32> to vector<1x32xf32>
    %c0_44 = arith.constant 0 : index
    %c0_45 = arith.constant 0 : index
    %c0_46 = arith.constant 0 : index
    %124 = vector.load %arg8[%c0_44, %c0_45, %c0_46] : memref<2x1x32xf32, #tpu.memory_space<vmem>>, vector<1x1x32xf32>
    %125 = vector.shape_cast %124 : vector<1x1x32xf32> to vector<1x32xf32>
    %cst_47 = arith.constant dense<0.000000e+00> : vector<16xf32>
    %126 = vector.multi_reduction <add>, %121, %cst_47 [1] : vector<16x32xf32> to vector<16xf32>
    %127 = vector.shape_cast %126 : vector<16xf32> to vector<16x1xf32>
    %cst_48 = arith.constant 3.200000e+01 : f32
    %128 = vector.broadcast %cst_48 : f32 to vector<16x1xf32>
    %129 = arith.divf %127, %128 : vector<16x1xf32>
    %130 = vector.broadcast %129 : vector<16x1xf32> to vector<16x32xf32>
    %131 = arith.subf %121, %130 : vector<16x32xf32>
    %132 = arith.mulf %131, %131 : vector<16x32xf32>
    %cst_49 = arith.constant dense<0.000000e+00> : vector<16xf32>
    %133 = vector.multi_reduction <add>, %132, %cst_49 [1] : vector<16x32xf32> to vector<16xf32>
    %134 = vector.shape_cast %133 : vector<16xf32> to vector<16x1xf32>
    %cst_50 = arith.constant 3.200000e+01 : f32
    %135 = vector.broadcast %cst_50 : f32 to vector<16x1xf32>
    %136 = arith.divf %134, %135 : vector<16x1xf32>
    %137 = vector.broadcast %129 : vector<16x1xf32> to vector<16x32xf32>
    %138 = arith.subf %121, %137 : vector<16x32xf32>
    %cst_51 = arith.constant 9.99999974E-6 : f32
    %139 = vector.broadcast %cst_51 : f32 to vector<16x1xf32>
    %140 = arith.addf %136, %139 : vector<16x1xf32>
    %141 = math.rsqrt %140 : vector<16x1xf32>
    %142 = vector.broadcast %141 : vector<16x1xf32> to vector<16x32xf32>
    %143 = arith.mulf %138, %142 : vector<16x32xf32>
    %144 = vector.broadcast %123 : vector<1x32xf32> to vector<16x32xf32>
    %145 = arith.mulf %143, %144 : vector<16x32xf32>
    %146 = vector.broadcast %125 : vector<1x32xf32> to vector<16x32xf32>
    %147 = arith.addf %145, %146 : vector<16x32xf32>
    %c0_52 = arith.constant 0 : index
    %c0_53 = arith.constant 0 : index
    %c0_54 = arith.constant 0 : index
    %148 = vector.load %arg9[%c0_52, %c0_53, %c0_54] : memref<2x64x32xf32, #tpu.memory_space<vmem>>, vector<1x64x32xf32>
    %149 = vector.shape_cast %148 : vector<1x64x32xf32> to vector<64x32xf32>
    %cst_55 = arith.constant dense<0.000000e+00> : vector<16x64xf32>
    %150 = tpu.matmul %147, %149, %cst_55 {dimension_numbers = #tpu.dot_dimension_numbers<[1], [1], [0], [0], [0, 0, 1, 0], [], []>} : vector<16x32xf32>, vector<64x32xf32>, vector<16x64xf32> -> vector<16x64xf32>
    %c0_56 = arith.constant 0 : index
    %c0_57 = arith.constant 0 : index
    %c0_58 = arith.constant 0 : index
    %151 = vector.load %arg10[%c0_56, %c0_57, %c0_58] : memref<2x1x64xf32, #tpu.memory_space<vmem>>, vector<1x1x64xf32>
    %152 = vector.shape_cast %151 : vector<1x1x64xf32> to vector<1x64xf32>
    %153 = vector.broadcast %152 : vector<1x64xf32> to vector<16x64xf32>
    %154 = arith.addf %150, %153 : vector<16x64xf32>
    %cst_59 = arith.constant 0.000000e+00 : f32
    %155 = vector.broadcast %cst_59 : f32 to vector<16x64xf32>
    %156 = arith.maximumf %154, %155 : vector<16x64xf32>
    %c0_60 = arith.constant 0 : index
    %c0_61 = arith.constant 0 : index
    %c0_62 = arith.constant 0 : index
    %157 = vector.load %arg11[%c0_60, %c0_61, %c0_62] : memref<2x32x64xf32, #tpu.memory_space<vmem>>, vector<1x32x64xf32>
    %158 = vector.shape_cast %157 : vector<1x32x64xf32> to vector<32x64xf32>
    %cst_63 = arith.constant dense<0.000000e+00> : vector<16x32xf32>
    %159 = tpu.matmul %156, %158, %cst_63 {dimension_numbers = #tpu.dot_dimension_numbers<[1], [1], [0], [0], [0, 0, 1, 0], [], []>} : vector<16x64xf32>, vector<32x64xf32>, vector<16x32xf32> -> vector<16x32xf32>
    %c0_64 = arith.constant 0 : index
    %c0_65 = arith.constant 0 : index
    %c0_66 = arith.constant 0 : index
    %160 = vector.load %arg12[%c0_64, %c0_65, %c0_66] : memref<2x1x32xf32, #tpu.memory_space<vmem>>, vector<1x1x32xf32>
    %161 = vector.shape_cast %160 : vector<1x1x32xf32> to vector<1x32xf32>
    %162 = vector.broadcast %161 : vector<1x32xf32> to vector<16x32xf32>
    %163 = arith.addf %159, %162 : vector<16x32xf32>
    %164 = arith.addf %147, %163 : vector<16x32xf32>
    %c0_67 = arith.constant 0 : index
    %c0_68 = arith.constant 0 : index
    %c0_69 = arith.constant 0 : index
    %165 = vector.load %arg13[%c0_67, %c0_68, %c0_69] : memref<2x1x32xf32, #tpu.memory_space<vmem>>, vector<1x1x32xf32>
    %166 = vector.shape_cast %165 : vector<1x1x32xf32> to vector<1x32xf32>
    %c0_70 = arith.constant 0 : index
    %c0_71 = arith.constant 0 : index
    %c0_72 = arith.constant 0 : index
    %167 = vector.load %arg14[%c0_70, %c0_71, %c0_72] : memref<2x1x32xf32, #tpu.memory_space<vmem>>, vector<1x1x32xf32>
    %168 = vector.shape_cast %167 : vector<1x1x32xf32> to vector<1x32xf32>
    %cst_73 = arith.constant dense<0.000000e+00> : vector<16xf32>
    %169 = vector.multi_reduction <add>, %164, %cst_73 [1] : vector<16x32xf32> to vector<16xf32>
    %170 = vector.shape_cast %169 : vector<16xf32> to vector<16x1xf32>
    %cst_74 = arith.constant 3.200000e+01 : f32
    %171 = vector.broadcast %cst_74 : f32 to vector<16x1xf32>
    %172 = arith.divf %170, %171 : vector<16x1xf32>
    %173 = vector.broadcast %172 : vector<16x1xf32> to vector<16x32xf32>
    %174 = arith.subf %164, %173 : vector<16x32xf32>
    %175 = arith.mulf %174, %174 : vector<16x32xf32>
    %cst_75 = arith.constant dense<0.000000e+00> : vector<16xf32>
    %176 = vector.multi_reduction <add>, %175, %cst_75 [1] : vector<16x32xf32> to vector<16xf32>
    %177 = vector.shape_cast %176 : vector<16xf32> to vector<16x1xf32>
    %cst_76 = arith.constant 3.200000e+01 : f32
    %178 = vector.broadcast %cst_76 : f32 to vector<16x1xf32>
    %179 = arith.divf %177, %178 : vector<16x1xf32>
    %180 = vector.broadcast %172 : vector<16x1xf32> to vector<16x32xf32>
    %181 = arith.subf %164, %180 : vector<16x32xf32>
    %cst_77 = arith.constant 9.99999974E-6 : f32
    %182 = vector.broadcast %cst_77 : f32 to vector<16x1xf32>
    %183 = arith.addf %179, %182 : vector<16x1xf32>
    %184 = math.rsqrt %183 : vector<16x1xf32>
    %185 = vector.broadcast %184 : vector<16x1xf32> to vector<16x32xf32>
    %186 = arith.mulf %181, %185 : vector<16x32xf32>
    %187 = vector.broadcast %166 : vector<1x32xf32> to vector<16x32xf32>
    %188 = arith.mulf %186, %187 : vector<16x32xf32>
    %189 = vector.broadcast %168 : vector<1x32xf32> to vector<16x32xf32>
    %190 = arith.addf %188, %189 : vector<16x32xf32>
    %c1 = arith.constant 1 : index
    %c0_78 = arith.constant 0 : index
    %c0_79 = arith.constant 0 : index
    %191 = vector.load %arg3[%c1, %c0_78, %c0_79] : memref<2x96x32xf32, #tpu.memory_space<vmem>>, vector<1x96x32xf32>
    %192 = vector.shape_cast %191 : vector<1x96x32xf32> to vector<96x32xf32>
    %cst_80 = arith.constant dense<0.000000e+00> : vector<16x96xf32>
    %193 = tpu.matmul %190, %192, %cst_80 {dimension_numbers = #tpu.dot_dimension_numbers<[1], [1], [0], [0], [0, 0, 1, 0], [], []>} : vector<16x32xf32>, vector<96x32xf32>, vector<16x96xf32> -> vector<16x96xf32>
    %c1_81 = arith.constant 1 : index
    %c0_82 = arith.constant 0 : index
    %c0_83 = arith.constant 0 : index
    %194 = vector.load %arg4[%c1_81, %c0_82, %c0_83] : memref<2x1x96xf32, #tpu.memory_space<vmem>>, vector<1x1x96xf32>
    %195 = vector.shape_cast %194 : vector<1x1x96xf32> to vector<1x96xf32>
    %196 = vector.broadcast %195 : vector<1x96xf32> to vector<16x96xf32>
    %197 = arith.addf %193, %196 : vector<16x96xf32>
    %c1_84 = arith.constant 1 : index
    %c0_85 = arith.constant 0 : index
    %c0_86 = arith.constant 0 : index
    %198 = vector.load %arg5[%c1_84, %c0_85, %c0_86] : memref<2x32x32xf32, #tpu.memory_space<vmem>>, vector<1x32x32xf32>
    %199 = vector.shape_cast %198 : vector<1x32x32xf32> to vector<32x32xf32>
    %cst_87 = arith.constant 0.000000e+00 : f32
    %200 = vector.broadcast %cst_87 : f32 to vector<16x32xf32>
    %c1_88 = arith.constant 1 : index
    %c0_89 = arith.constant 0 : index
    %c0_90 = arith.constant 0 : index
    %201 = vector.load %arg6[%c1_88, %c0_89, %c0_90] : memref<2x1x32xf32, #tpu.memory_space<vmem>>, vector<1x1x32xf32>
    %202 = vector.shape_cast %201 : vector<1x1x32xf32> to vector<1x32xf32>
    %203 = vector.broadcast %202 : vector<1x32xf32> to vector<16x32xf32>
    %204 = arith.addf %200, %203 : vector<16x32xf32>
    %205 = vector.extract_strided_slice %197 {offsets = [0, 0], sizes = [16, 8], strides = [1, 1]} : vector<16x96xf32> to vector<16x8xf32>
    %206 = vector.shape_cast %205 : vector<16x8xf32> to vector<2x8x8xf32>
    %207 = vector.extract_strided_slice %197 {offsets = [0, 32], sizes = [16, 8], strides = [1, 1]} : vector<16x96xf32> to vector<16x8xf32>
    %208 = vector.shape_cast %207 : vector<16x8xf32> to vector<2x8x8xf32>
    %209 = vector.extract_strided_slice %197 {offsets = [0, 64], sizes = [16, 8], strides = [1, 1]} : vector<16x96xf32> to vector<16x8xf32>
    %210 = vector.shape_cast %209 : vector<16x8xf32> to vector<2x8x8xf32>
    "tpu.trace_start"() <{level = 10 : i32, message = "bqd,bkd->bqk"}> : () -> ()
    %cst_91 = arith.constant dense<0.000000e+00> : vector<2x8x8xf32>
    %211 = tpu.matmul %206, %208, %cst_91 {dimension_numbers = #tpu.dot_dimension_numbers<[2], [2], [1], [1], [0, 0, 0, 1, 1, 1], [0], [0]>} : vector<2x8x8xf32>, vector<2x8x8xf32>, vector<2x8x8xf32> -> vector<2x8x8xf32>
    "tpu.trace_stop"() : () -> ()
    %212 = vector.broadcast %9 : vector<2x1x8xf32> to vector<2x8x8xf32>
    %213 = arith.addf %211, %212 : vector<2x8x8xf32>
    %cst_92 = arith.constant dense<0xFF800000> : vector<2x8xf32>
    %214 = vector.multi_reduction <maximumf>, %213, %cst_92 [2] : vector<2x8x8xf32> to vector<2x8xf32>
    %215 = vector.shape_cast %214 : vector<2x8xf32> to vector<2x8x1xf32>
    %216 = vector.broadcast %215 : vector<2x8x1xf32> to vector<2x8x8xf32>
    %217 = arith.subf %213, %216 : vector<2x8x8xf32>
    %218 = math.exp %217 : vector<2x8x8xf32>
    %cst_93 = arith.constant dense<0.000000e+00> : vector<2x8xf32>
    %219 = vector.multi_reduction <add>, %218, %cst_93 [2] : vector<2x8x8xf32> to vector<2x8xf32>
    %220 = vector.shape_cast %219 : vector<2x8xf32> to vector<2x8x1xf32>
    %221 = tpu.reciprocal %220 {approx = true} : vector<2x8x1xf32> -> vector<2x8x1xf32>
    %222 = vector.broadcast %221 : vector<2x8x1xf32> to vector<2x8x8xf32>
    %223 = arith.mulf %218, %222 : vector<2x8x8xf32>
    "tpu.trace_start"() <{level = 10 : i32, message = "bqk,bkd->bqd"}> : () -> ()
    %cst_94 = arith.constant dense<0.000000e+00> : vector<2x8x8xf32>
    %224 = tpu.matmul %223, %210, %cst_94 {dimension_numbers = #tpu.dot_dimension_numbers<[2], [1], [1], [2], [0, 0, 0, 1, 1, 2], [0], [0]>} : vector<2x8x8xf32>, vector<2x8x8xf32>, vector<2x8x8xf32> -> vector<2x8x8xf32>
    "tpu.trace_stop"() : () -> ()
    %225 = vector.shape_cast %224 : vector<2x8x8xf32> to vector<16x8xf32>
    %226 = vector.extract_strided_slice %199 {offsets = [0, 0], sizes = [32, 8], strides = [1, 1]} : vector<32x32xf32> to vector<32x8xf32>
    %cst_95 = arith.constant dense<0.000000e+00> : vector<16x32xf32>
    %227 = tpu.matmul %225, %226, %cst_95 {dimension_numbers = #tpu.dot_dimension_numbers<[1], [1], [0], [0], [0, 0, 1, 0], [], []>} : vector<16x8xf32>, vector<32x8xf32>, vector<16x32xf32> -> vector<16x32xf32>
    %228 = arith.addf %204, %227 : vector<16x32xf32>
    %229 = vector.extract_strided_slice %197 {offsets = [0, 8], sizes = [16, 8], strides = [1, 1]} : vector<16x96xf32> to vector<16x8xf32>
    %230 = vector.shape_cast %229 : vector<16x8xf32> to vector<2x8x8xf32>
    %231 = vector.extract_strided_slice %197 {offsets = [0, 40], sizes = [16, 8], strides = [1, 1]} : vector<16x96xf32> to vector<16x8xf32>
    %232 = vector.shape_cast %231 : vector<16x8xf32> to vector<2x8x8xf32>
    %233 = vector.extract_strided_slice %197 {offsets = [0, 72], sizes = [16, 8], strides = [1, 1]} : vector<16x96xf32> to vector<16x8xf32>
    %234 = vector.shape_cast %233 : vector<16x8xf32> to vector<2x8x8xf32>
    "tpu.trace_start"() <{level = 10 : i32, message = "bqd,bkd->bqk"}> : () -> ()
    %cst_96 = arith.constant dense<0.000000e+00> : vector<2x8x8xf32>
    %235 = tpu.matmul %230, %232, %cst_96 {dimension_numbers = #tpu.dot_dimension_numbers<[2], [2], [1], [1], [0, 0, 0, 1, 1, 1], [0], [0]>} : vector<2x8x8xf32>, vector<2x8x8xf32>, vector<2x8x8xf32> -> vector<2x8x8xf32>
    "tpu.trace_stop"() : () -> ()
    %236 = vector.broadcast %9 : vector<2x1x8xf32> to vector<2x8x8xf32>
    %237 = arith.addf %235, %236 : vector<2x8x8xf32>
    %cst_97 = arith.constant dense<0xFF800000> : vector<2x8xf32>
    %238 = vector.multi_reduction <maximumf>, %237, %cst_97 [2] : vector<2x8x8xf32> to vector<2x8xf32>
    %239 = vector.shape_cast %238 : vector<2x8xf32> to vector<2x8x1xf32>
    %240 = vector.broadcast %239 : vector<2x8x1xf32> to vector<2x8x8xf32>
    %241 = arith.subf %237, %240 : vector<2x8x8xf32>
    %242 = math.exp %241 : vector<2x8x8xf32>
    %cst_98 = arith.constant dense<0.000000e+00> : vector<2x8xf32>
    %243 = vector.multi_reduction <add>, %242, %cst_98 [2] : vector<2x8x8xf32> to vector<2x8xf32>
    %244 = vector.shape_cast %243 : vector<2x8xf32> to vector<2x8x1xf32>
    %245 = tpu.reciprocal %244 {approx = true} : vector<2x8x1xf32> -> vector<2x8x1xf32>
    %246 = vector.broadcast %245 : vector<2x8x1xf32> to vector<2x8x8xf32>
    %247 = arith.mulf %242, %246 : vector<2x8x8xf32>
    "tpu.trace_start"() <{level = 10 : i32, message = "bqk,bkd->bqd"}> : () -> ()
    %cst_99 = arith.constant dense<0.000000e+00> : vector<2x8x8xf32>
    %248 = tpu.matmul %247, %234, %cst_99 {dimension_numbers = #tpu.dot_dimension_numbers<[2], [1], [1], [2], [0, 0, 0, 1, 1, 2], [0], [0]>} : vector<2x8x8xf32>, vector<2x8x8xf32>, vector<2x8x8xf32> -> vector<2x8x8xf32>
    "tpu.trace_stop"() : () -> ()
    %249 = vector.shape_cast %248 : vector<2x8x8xf32> to vector<16x8xf32>
    %250 = vector.extract_strided_slice %199 {offsets = [0, 8], sizes = [32, 8], strides = [1, 1]} : vector<32x32xf32> to vector<32x8xf32>
    %cst_100 = arith.constant dense<0.000000e+00> : vector<16x32xf32>
    %251 = tpu.matmul %249, %250, %cst_100 {dimension_numbers = #tpu.dot_dimension_numbers<[1], [1], [0], [0], [0, 0, 1, 0], [], []>} : vector<16x8xf32>, vector<32x8xf32>, vector<16x32xf32> -> vector<16x32xf32>
    %252 = arith.addf %228, %251 : vector<16x32xf32>
    %253 = vector.extract_strided_slice %197 {offsets = [0, 16], sizes = [16, 8], strides = [1, 1]} : vector<16x96xf32> to vector<16x8xf32>
    %254 = vector.shape_cast %253 : vector<16x8xf32> to vector<2x8x8xf32>
    %255 = vector.extract_strided_slice %197 {offsets = [0, 48], sizes = [16, 8], strides = [1, 1]} : vector<16x96xf32> to vector<16x8xf32>
    %256 = vector.shape_cast %255 : vector<16x8xf32> to vector<2x8x8xf32>
    %257 = vector.extract_strided_slice %197 {offsets = [0, 80], sizes = [16, 8], strides = [1, 1]} : vector<16x96xf32> to vector<16x8xf32>
    %258 = vector.shape_cast %257 : vector<16x8xf32> to vector<2x8x8xf32>
    "tpu.trace_start"() <{level = 10 : i32, message = "bqd,bkd->bqk"}> : () -> ()
    %cst_101 = arith.constant dense<0.000000e+00> : vector<2x8x8xf32>
    %259 = tpu.matmul %254, %256, %cst_101 {dimension_numbers = #tpu.dot_dimension_numbers<[2], [2], [1], [1], [0, 0, 0, 1, 1, 1], [0], [0]>} : vector<2x8x8xf32>, vector<2x8x8xf32>, vector<2x8x8xf32> -> vector<2x8x8xf32>
    "tpu.trace_stop"() : () -> ()
    %260 = vector.broadcast %9 : vector<2x1x8xf32> to vector<2x8x8xf32>
    %261 = arith.addf %259, %260 : vector<2x8x8xf32>
    %cst_102 = arith.constant dense<0xFF800000> : vector<2x8xf32>
    %262 = vector.multi_reduction <maximumf>, %261, %cst_102 [2] : vector<2x8x8xf32> to vector<2x8xf32>
    %263 = vector.shape_cast %262 : vector<2x8xf32> to vector<2x8x1xf32>
    %264 = vector.broadcast %263 : vector<2x8x1xf32> to vector<2x8x8xf32>
    %265 = arith.subf %261, %264 : vector<2x8x8xf32>
    %266 = math.exp %265 : vector<2x8x8xf32>
    %cst_103 = arith.constant dense<0.000000e+00> : vector<2x8xf32>
    %267 = vector.multi_reduction <add>, %266, %cst_103 [2] : vector<2x8x8xf32> to vector<2x8xf32>
    %268 = vector.shape_cast %267 : vector<2x8xf32> to vector<2x8x1xf32>
    %269 = tpu.reciprocal %268 {approx = true} : vector<2x8x1xf32> -> vector<2x8x1xf32>
    %270 = vector.broadcast %269 : vector<2x8x1xf32> to vector<2x8x8xf32>
    %271 = arith.mulf %266, %270 : vector<2x8x8xf32>
    "tpu.trace_start"() <{level = 10 : i32, message = "bqk,bkd->bqd"}> : () -> ()
    %cst_104 = arith.constant dense<0.000000e+00> : vector<2x8x8xf32>
    %272 = tpu.matmul %271, %258, %cst_104 {dimension_numbers = #tpu.dot_dimension_numbers<[2], [1], [1], [2], [0, 0, 0, 1, 1, 2], [0], [0]>} : vector<2x8x8xf32>, vector<2x8x8xf32>, vector<2x8x8xf32> -> vector<2x8x8xf32>
    "tpu.trace_stop"() : () -> ()
    %273 = vector.shape_cast %272 : vector<2x8x8xf32> to vector<16x8xf32>
    %274 = vector.extract_strided_slice %199 {offsets = [0, 16], sizes = [32, 8], strides = [1, 1]} : vector<32x32xf32> to vector<32x8xf32>
    %cst_105 = arith.constant dense<0.000000e+00> : vector<16x32xf32>
    %275 = tpu.matmul %273, %274, %cst_105 {dimension_numbers = #tpu.dot_dimension_numbers<[1], [1], [0], [0], [0, 0, 1, 0], [], []>} : vector<16x8xf32>, vector<32x8xf32>, vector<16x32xf32> -> vector<16x32xf32>
    %276 = arith.addf %252, %275 : vector<16x32xf32>
    %277 = vector.extract_strided_slice %197 {offsets = [0, 24], sizes = [16, 8], strides = [1, 1]} : vector<16x96xf32> to vector<16x8xf32>
    %278 = vector.shape_cast %277 : vector<16x8xf32> to vector<2x8x8xf32>
    %279 = vector.extract_strided_slice %197 {offsets = [0, 56], sizes = [16, 8], strides = [1, 1]} : vector<16x96xf32> to vector<16x8xf32>
    %280 = vector.shape_cast %279 : vector<16x8xf32> to vector<2x8x8xf32>
    %281 = vector.extract_strided_slice %197 {offsets = [0, 88], sizes = [16, 8], strides = [1, 1]} : vector<16x96xf32> to vector<16x8xf32>
    %282 = vector.shape_cast %281 : vector<16x8xf32> to vector<2x8x8xf32>
    "tpu.trace_start"() <{level = 10 : i32, message = "bqd,bkd->bqk"}> : () -> ()
    %cst_106 = arith.constant dense<0.000000e+00> : vector<2x8x8xf32>
    %283 = tpu.matmul %278, %280, %cst_106 {dimension_numbers = #tpu.dot_dimension_numbers<[2], [2], [1], [1], [0, 0, 0, 1, 1, 1], [0], [0]>} : vector<2x8x8xf32>, vector<2x8x8xf32>, vector<2x8x8xf32> -> vector<2x8x8xf32>
    "tpu.trace_stop"() : () -> ()
    %284 = vector.broadcast %9 : vector<2x1x8xf32> to vector<2x8x8xf32>
    %285 = arith.addf %283, %284 : vector<2x8x8xf32>
    %cst_107 = arith.constant dense<0xFF800000> : vector<2x8xf32>
    %286 = vector.multi_reduction <maximumf>, %285, %cst_107 [2] : vector<2x8x8xf32> to vector<2x8xf32>
    %287 = vector.shape_cast %286 : vector<2x8xf32> to vector<2x8x1xf32>
    %288 = vector.broadcast %287 : vector<2x8x1xf32> to vector<2x8x8xf32>
    %289 = arith.subf %285, %288 : vector<2x8x8xf32>
    %290 = math.exp %289 : vector<2x8x8xf32>
    %cst_108 = arith.constant dense<0.000000e+00> : vector<2x8xf32>
    %291 = vector.multi_reduction <add>, %290, %cst_108 [2] : vector<2x8x8xf32> to vector<2x8xf32>
    %292 = vector.shape_cast %291 : vector<2x8xf32> to vector<2x8x1xf32>
    %293 = tpu.reciprocal %292 {approx = true} : vector<2x8x1xf32> -> vector<2x8x1xf32>
    %294 = vector.broadcast %293 : vector<2x8x1xf32> to vector<2x8x8xf32>
    %295 = arith.mulf %290, %294 : vector<2x8x8xf32>
    "tpu.trace_start"() <{level = 10 : i32, message = "bqk,bkd->bqd"}> : () -> ()
    %cst_109 = arith.constant dense<0.000000e+00> : vector<2x8x8xf32>
    %296 = tpu.matmul %295, %282, %cst_109 {dimension_numbers = #tpu.dot_dimension_numbers<[2], [1], [1], [2], [0, 0, 0, 1, 1, 2], [0], [0]>} : vector<2x8x8xf32>, vector<2x8x8xf32>, vector<2x8x8xf32> -> vector<2x8x8xf32>
    "tpu.trace_stop"() : () -> ()
    %297 = vector.shape_cast %296 : vector<2x8x8xf32> to vector<16x8xf32>
    %298 = vector.extract_strided_slice %199 {offsets = [0, 24], sizes = [32, 8], strides = [1, 1]} : vector<32x32xf32> to vector<32x8xf32>
    %cst_110 = arith.constant dense<0.000000e+00> : vector<16x32xf32>
    %299 = tpu.matmul %297, %298, %cst_110 {dimension_numbers = #tpu.dot_dimension_numbers<[1], [1], [0], [0], [0, 0, 1, 0], [], []>} : vector<16x8xf32>, vector<32x8xf32>, vector<16x32xf32> -> vector<16x32xf32>
    %300 = arith.addf %276, %299 : vector<16x32xf32>
    %301 = arith.addf %190, %300 : vector<16x32xf32>
    %c1_111 = arith.constant 1 : index
    %c0_112 = arith.constant 0 : index
    %c0_113 = arith.constant 0 : index
    %302 = vector.load %arg7[%c1_111, %c0_112, %c0_113] : memref<2x1x32xf32, #tpu.memory_space<vmem>>, vector<1x1x32xf32>
    %303 = vector.shape_cast %302 : vector<1x1x32xf32> to vector<1x32xf32>
    %c1_114 = arith.constant 1 : index
    %c0_115 = arith.constant 0 : index
    %c0_116 = arith.constant 0 : index
    %304 = vector.load %arg8[%c1_114, %c0_115, %c0_116] : memref<2x1x32xf32, #tpu.memory_space<vmem>>, vector<1x1x32xf32>
    %305 = vector.shape_cast %304 : vector<1x1x32xf32> to vector<1x32xf32>
    %cst_117 = arith.constant dense<0.000000e+00> : vector<16xf32>
    %306 = vector.multi_reduction <add>, %301, %cst_117 [1] : vector<16x32xf32> to vector<16xf32>
    %307 = vector.shape_cast %306 : vector<16xf32> to vector<16x1xf32>
    %cst_118 = arith.constant 3.200000e+01 : f32
    %308 = vector.broadcast %cst_118 : f32 to vector<16x1xf32>
    %309 = arith.divf %307, %308 : vector<16x1xf32>
    %310 = vector.broadcast %309 : vector<16x1xf32> to vector<16x32xf32>
    %311 = arith.subf %301, %310 : vector<16x32xf32>
    %312 = arith.mulf %311, %311 : vector<16x32xf32>
    %cst_119 = arith.constant dense<0.000000e+00> : vector<16xf32>
    %313 = vector.multi_reduction <add>, %312, %cst_119 [1] : vector<16x32xf32> to vector<16xf32>
    %314 = vector.shape_cast %313 : vector<16xf32> to vector<16x1xf32>
    %cst_120 = arith.constant 3.200000e+01 : f32
    %315 = vector.broadcast %cst_120 : f32 to vector<16x1xf32>
    %316 = arith.divf %314, %315 : vector<16x1xf32>
    %317 = vector.broadcast %309 : vector<16x1xf32> to vector<16x32xf32>
    %318 = arith.subf %301, %317 : vector<16x32xf32>
    %cst_121 = arith.constant 9.99999974E-6 : f32
    %319 = vector.broadcast %cst_121 : f32 to vector<16x1xf32>
    %320 = arith.addf %316, %319 : vector<16x1xf32>
    %321 = math.rsqrt %320 : vector<16x1xf32>
    %322 = vector.broadcast %321 : vector<16x1xf32> to vector<16x32xf32>
    %323 = arith.mulf %318, %322 : vector<16x32xf32>
    %324 = vector.broadcast %303 : vector<1x32xf32> to vector<16x32xf32>
    %325 = arith.mulf %323, %324 : vector<16x32xf32>
    %326 = vector.broadcast %305 : vector<1x32xf32> to vector<16x32xf32>
    %327 = arith.addf %325, %326 : vector<16x32xf32>
    %c1_122 = arith.constant 1 : index
    %c0_123 = arith.constant 0 : index
    %c0_124 = arith.constant 0 : index
    %328 = vector.load %arg9[%c1_122, %c0_123, %c0_124] : memref<2x64x32xf32, #tpu.memory_space<vmem>>, vector<1x64x32xf32>
    %329 = vector.shape_cast %328 : vector<1x64x32xf32> to vector<64x32xf32>
    %cst_125 = arith.constant dense<0.000000e+00> : vector<16x64xf32>
    %330 = tpu.matmul %327, %329, %cst_125 {dimension_numbers = #tpu.dot_dimension_numbers<[1], [1], [0], [0], [0, 0, 1, 0], [], []>} : vector<16x32xf32>, vector<64x32xf32>, vector<16x64xf32> -> vector<16x64xf32>
    %c1_126 = arith.constant 1 : index
    %c0_127 = arith.constant 0 : index
    %c0_128 = arith.constant 0 : index
    %331 = vector.load %arg10[%c1_126, %c0_127, %c0_128] : memref<2x1x64xf32, #tpu.memory_space<vmem>>, vector<1x1x64xf32>
    %332 = vector.shape_cast %331 : vector<1x1x64xf32> to vector<1x64xf32>
    %333 = vector.broadcast %332 : vector<1x64xf32> to vector<16x64xf32>
    %334 = arith.addf %330, %333 : vector<16x64xf32>
    %cst_129 = arith.constant 0.000000e+00 : f32
    %335 = vector.broadcast %cst_129 : f32 to vector<16x64xf32>
    %336 = arith.maximumf %334, %335 : vector<16x64xf32>
    %c1_130 = arith.constant 1 : index
    %c0_131 = arith.constant 0 : index
    %c0_132 = arith.constant 0 : index
    %337 = vector.load %arg11[%c1_130, %c0_131, %c0_132] : memref<2x32x64xf32, #tpu.memory_space<vmem>>, vector<1x32x64xf32>
    %338 = vector.shape_cast %337 : vector<1x32x64xf32> to vector<32x64xf32>
    %cst_133 = arith.constant dense<0.000000e+00> : vector<16x32xf32>
    %339 = tpu.matmul %336, %338, %cst_133 {dimension_numbers = #tpu.dot_dimension_numbers<[1], [1], [0], [0], [0, 0, 1, 0], [], []>} : vector<16x64xf32>, vector<32x64xf32>, vector<16x32xf32> -> vector<16x32xf32>
    %c1_134 = arith.constant 1 : index
    %c0_135 = arith.constant 0 : index
    %c0_136 = arith.constant 0 : index
    %340 = vector.load %arg12[%c1_134, %c0_135, %c0_136] : memref<2x1x32xf32, #tpu.memory_space<vmem>>, vector<1x1x32xf32>
    %341 = vector.shape_cast %340 : vector<1x1x32xf32> to vector<1x32xf32>
    %342 = vector.broadcast %341 : vector<1x32xf32> to vector<16x32xf32>
    %343 = arith.addf %339, %342 : vector<16x32xf32>
    %344 = arith.addf %327, %343 : vector<16x32xf32>
    %c1_137 = arith.constant 1 : index
    %c0_138 = arith.constant 0 : index
    %c0_139 = arith.constant 0 : index
    %345 = vector.load %arg13[%c1_137, %c0_138, %c0_139] : memref<2x1x32xf32, #tpu.memory_space<vmem>>, vector<1x1x32xf32>
    %346 = vector.shape_cast %345 : vector<1x1x32xf32> to vector<1x32xf32>
    %c1_140 = arith.constant 1 : index
    %c0_141 = arith.constant 0 : index
    %c0_142 = arith.constant 0 : index
    %347 = vector.load %arg14[%c1_140, %c0_141, %c0_142] : memref<2x1x32xf32, #tpu.memory_space<vmem>>, vector<1x1x32xf32>
    %348 = vector.shape_cast %347 : vector<1x1x32xf32> to vector<1x32xf32>
    %cst_143 = arith.constant dense<0.000000e+00> : vector<16xf32>
    %349 = vector.multi_reduction <add>, %344, %cst_143 [1] : vector<16x32xf32> to vector<16xf32>
    %350 = vector.shape_cast %349 : vector<16xf32> to vector<16x1xf32>
    %cst_144 = arith.constant 3.200000e+01 : f32
    %351 = vector.broadcast %cst_144 : f32 to vector<16x1xf32>
    %352 = arith.divf %350, %351 : vector<16x1xf32>
    %353 = vector.broadcast %352 : vector<16x1xf32> to vector<16x32xf32>
    %354 = arith.subf %344, %353 : vector<16x32xf32>
    %355 = arith.mulf %354, %354 : vector<16x32xf32>
    %cst_145 = arith.constant dense<0.000000e+00> : vector<16xf32>
    %356 = vector.multi_reduction <add>, %355, %cst_145 [1] : vector<16x32xf32> to vector<16xf32>
    %357 = vector.shape_cast %356 : vector<16xf32> to vector<16x1xf32>
    %cst_146 = arith.constant 3.200000e+01 : f32
    %358 = vector.broadcast %cst_146 : f32 to vector<16x1xf32>
    %359 = arith.divf %357, %358 : vector<16x1xf32>
    %360 = vector.broadcast %352 : vector<16x1xf32> to vector<16x32xf32>
    %361 = arith.subf %344, %360 : vector<16x32xf32>
    %cst_147 = arith.constant 9.99999974E-6 : f32
    %362 = vector.broadcast %cst_147 : f32 to vector<16x1xf32>
    %363 = arith.addf %359, %362 : vector<16x1xf32>
    %364 = math.rsqrt %363 : vector<16x1xf32>
    %365 = vector.broadcast %364 : vector<16x1xf32> to vector<16x32xf32>
    %366 = arith.mulf %361, %365 : vector<16x32xf32>
    %367 = vector.broadcast %346 : vector<1x32xf32> to vector<16x32xf32>
    %368 = arith.mulf %366, %367 : vector<16x32xf32>
    %369 = vector.broadcast %348 : vector<1x32xf32> to vector<16x32xf32>
    %370 = arith.addf %368, %369 : vector<16x32xf32>
    %371 = vector.shape_cast %370 : vector<16x32xf32> to vector<2x8x32xf32>
    %372 = vector.shape_cast %3 : vector<2x8xf32> to vector<2x8x1xf32>
    %373 = vector.broadcast %372 : vector<2x8x1xf32> to vector<2x8x32xf32>
    %374 = arith.mulf %371, %373 : vector<2x8x32xf32>
    %cst_148 = arith.constant dense<0.000000e+00> : vector<2x32xf32>
    %375 = vector.multi_reduction <add>, %374, %cst_148 [1] : vector<2x8x32xf32> to vector<2x32xf32>
    %cst_149 = arith.constant dense<0.000000e+00> : vector<2xf32>
    %376 = vector.multi_reduction <add>, %3, %cst_149 [1] : vector<2x8xf32> to vector<2xf32>
    %377 = vector.shape_cast %376 : vector<2xf32> to vector<2x1xf32>
    %cst_150 = arith.constant 9.99999971E-10 : f32
    %378 = vector.broadcast %cst_150 : f32 to vector<2x1xf32>
    %379 = arith.maximumf %377, %378 : vector<2x1xf32>
    %380 = tpu.reciprocal %379 {approx = true} : vector<2x1xf32> -> vector<2x1xf32>
    %381 = vector.broadcast %380 : vector<2x1xf32> to vector<2x32xf32>
    %382 = arith.mulf %375, %381 : vector<2x32xf32>
    %c0_151 = arith.constant 0 : index
    %c0_152 = arith.constant 0 : index
    %383 = vector.load %arg15[%c0_151, %c0_152] : memref<128x32xf32, #tpu.memory_space<vmem>>, vector<128x32xf32>
    %cst_153 = arith.constant dense<0.000000e+00> : vector<2x128xf32>
    %384 = tpu.matmul %382, %383, %cst_153 {dimension_numbers = #tpu.dot_dimension_numbers<[1], [1], [0], [0], [0, 0, 1, 0], [], []>} : vector<2x32xf32>, vector<128x32xf32>, vector<2x128xf32> -> vector<2x128xf32>
    %c0_154 = arith.constant 0 : index
    %c0_155 = arith.constant 0 : index
    %385 = vector.load %arg16[%c0_154, %c0_155] : memref<1x128xf32, #tpu.memory_space<vmem>>, vector<1x128xf32>
    %386 = vector.broadcast %385 : vector<1x128xf32> to vector<2x128xf32>
    %387 = arith.addf %384, %386 : vector<2x128xf32>
    %c0_156 = arith.constant 0 : index
    %c0_157 = arith.constant 0 : index
    %388 = vector.load %arg17[%c0_156, %c0_157] : memref<2x128xf32, #tpu.memory_space<vmem>>, vector<2x128xf32>
    tpu.vector_store %arg17[%c0_156, %c0_157], %387 {strides = array<i32>} : memref<2x128xf32, #tpu.memory_space<vmem>>, vector<2x128xf32>,
    return
  }
  func.func @transform_0(%arg0: i32) -> (i32, i32, i32) {
    %c0_i32 = arith.constant 0 : i32
    %c0_i32_0 = arith.constant 0 : i32
    %c0_i32_1 = arith.constant 0 : i32
    return %arg0, %c0_i32, %c0_i32_0 : i32, i32, i32
  }
  func.func @transform_1(%arg0: i32) -> (i32, i32) {
    %c0_i32 = arith.constant 0 : i32
    %c0_i32_0 = arith.constant 0 : i32
    return %arg0, %c0_i32 : i32, i32
  }
  func.func @transform_2(%arg0: i32) -> (i32, i32, i32) {
    %c0_i32 = arith.constant 0 : i32
    %c0_i32_0 = arith.constant 0 : i32
    %c0_i32_1 = arith.constant 0 : i32
    %c0_i32_2 = arith.constant 0 : i32
    return %c0_i32, %c0_i32_0, %c0_i32_1 : i32, i32, i32
  }
  func.func @transform_3(%arg0: i32) -> (i32, i32, i32) {
    %c0_i32 = arith.constant 0 : i32
    %c0_i32_0 = arith.constant 0 : i32
    %c0_i32_1 = arith.constant 0 : i32
    %c0_i32_2 = arith.constant 0 : i32
    return %c0_i32, %c0_i32_0, %c0_i32_1 : i32, i32, i32
  }
  func.func @transform_4(%arg0: i32) -> (i32, i32, i32) {
    %c0_i32 = arith.constant 0 : i32
    %c0_i32_0 = arith.constant 0 : i32
    %c0_i32_1 = arith.constant 0 : i32
    %c0_i32_2 = arith.constant 0 : i32
    return %c0_i32, %c0_i32_0, %c0_i32_1 : i32, i32, i32
  }
  func.func @transform_5(%arg0: i32) -> (i32, i32, i32) {
    %c0_i32 = arith.constant 0 : i32
    %c0_i32_0 = arith.constant 0 : i32
    %c0_i32_1 = arith.constant 0 : i32
    %c0_i32_2 = arith.constant 0 : i32
    return %c0_i32, %c0_i32_0, %c0_i32_1 : i32, i32, i32
  }
  func.func @transform_6(%arg0: i32) -> (i32, i32, i32) {
    %c0_i32 = arith.constant 0 : i32
    %c0_i32_0 = arith.constant 0 : i32
    %c0_i32_1 = arith.constant 0 : i32
    %c0_i32_2 = arith.constant 0 : i32
    return %c0_i32, %c0_i32_0, %c0_i32_1 : i32, i32, i32
  }
  func.func @transform_7(%arg0: i32) -> (i32, i32, i32) {
    %c0_i32 = arith.constant 0 : i32
    %c0_i32_0 = arith.constant 0 : i32
    %c0_i32_1 = arith.constant 0 : i32
    %c0_i32_2 = arith.constant 0 : i32
    return %c0_i32, %c0_i32_0, %c0_i32_1 : i32, i32, i32
  }
  func.func @transform_8(%arg0: i32) -> (i32, i32, i32) {
    %c0_i32 = arith.constant 0 : i32
    %c0_i32_0 = arith.constant 0 : i32
    %c0_i32_1 = arith.constant 0 : i32
    %c0_i32_2 = arith.constant 0 : i32
    return %c0_i32, %c0_i32_0, %c0_i32_1 : i32, i32, i32
  }
  func.func @transform_9(%arg0: i32) -> (i32, i32, i32) {
    %c0_i32 = arith.constant 0 : i32
    %c0_i32_0 = arith.constant 0 : i32
    %c0_i32_1 = arith.constant 0 : i32
    %c0_i32_2 = arith.constant 0 : i32
    return %c0_i32, %c0_i32_0, %c0_i32_1 : i32, i32, i32
  }
  func.func @transform_10(%arg0: i32) -> (i32, i32, i32) {
    %c0_i32 = arith.constant 0 : i32
    %c0_i32_0 = arith.constant 0 : i32
    %c0_i32_1 = arith.constant 0 : i32
    %c0_i32_2 = arith.constant 0 : i32
    return %c0_i32, %c0_i32_0, %c0_i32_1 : i32, i32, i32
  }
  func.func @transform_11(%arg0: i32) -> (i32, i32, i32) {
    %c0_i32 = arith.constant 0 : i32
    %c0_i32_0 = arith.constant 0 : i32
    %c0_i32_1 = arith.constant 0 : i32
    %c0_i32_2 = arith.constant 0 : i32
    return %c0_i32, %c0_i32_0, %c0_i32_1 : i32, i32, i32
  }
  func.func @transform_12(%arg0: i32) -> (i32, i32, i32) {
    %c0_i32 = arith.constant 0 : i32
    %c0_i32_0 = arith.constant 0 : i32
    %c0_i32_1 = arith.constant 0 : i32
    %c0_i32_2 = arith.constant 0 : i32
    return %c0_i32, %c0_i32_0, %c0_i32_1 : i32, i32, i32
  }
  func.func @transform_13(%arg0: i32) -> (i32, i32, i32) {
    %c0_i32 = arith.constant 0 : i32
    %c0_i32_0 = arith.constant 0 : i32
    %c0_i32_1 = arith.constant 0 : i32
    %c0_i32_2 = arith.constant 0 : i32
    return %c0_i32, %c0_i32_0, %c0_i32_1 : i32, i32, i32
  }
  func.func @transform_14(%arg0: i32) -> (i32, i32) {
    %c0_i32 = arith.constant 0 : i32
    %c0_i32_0 = arith.constant 0 : i32
    %c0_i32_1 = arith.constant 0 : i32
    return %c0_i32, %c0_i32_0 : i32, i32
  }
  func.func @transform_15(%arg0: i32) -> (i32, i32) {
    %c0_i32 = arith.constant 0 : i32
    %c0_i32_0 = arith.constant 0 : i32
    %c0_i32_1 = arith.constant 0 : i32
    return %c0_i32, %c0_i32_0 : i32, i32
  }
  func.func @transform_16(%arg0: i32) -> (i32, i32) {
    %c0_i32 = arith.constant 0 : i32
    %c0_i32_0 = arith.constant 0 : i32
    return %arg0, %c0_i32 : i32, i32
  }
}

</mosaic_0001>

<llo_original>
// kernel: tpu_custom_call.1
$region0: #{tpu_custom_call.1}
  #allocation0 [shape = 'u32[]', space=smem, size = 0x4, offset = 0x4, fixed_abs, tag = 'smem constant byte address 0x4 - core index']
  #allocation1 [shape = 'u32[144,128]{1,0:T(1,128)}', space=vmem, size = 0x12000, scoped, tag = 'internal scratch']
  %s0 = inlined_call_operand.vmem [shape: f32[2,8,32], index: 0, kind: input, shape index: {}]
  %s1 = inlined_call_operand.vmem [shape: f32[2,8], index: 1, kind: input, shape index: {}]
  %s2 = inlined_call_operand.vmem [shape: f32[2,96,32], index: 2, kind: input, shape index: {}]
  %s3 = inlined_call_operand.vmem [shape: f32[2,1,96], index: 3, kind: input, shape index: {}]
  %s4 = inlined_call_operand.vmem [shape: f32[2,32,32], index: 4, kind: input, shape index: {}]
  %s5 = inlined_call_operand.vmem [shape: f32[2,1,32], index: 5, kind: input, shape index: {}]
  %s6 = inlined_call_operand.vmem [shape: f32[2,1,32], index: 6, kind: input, shape index: {}]
  %s7 = inlined_call_operand.vmem [shape: f32[2,1,32], index: 7, kind: input, shape index: {}]
  %s8 = inlined_call_operand.vmem [shape: f32[2,64,32], index: 8, kind: input, shape index: {}]
  %s9 = inlined_call_operand.vmem [shape: f32[2,1,64], index: 9, kind: input, shape index: {}]
  %s10 = inlined_call_operand.vmem [shape: f32[2,32,64], index: 10, kind: input, shape index: {}]
  %s11 = inlined_call_operand.vmem [shape: f32[2,1,32], index: 11, kind: input, shape index: {}]
  %s12 = inlined_call_operand.vmem [shape: f32[2,1,32], index: 12, kind: input, shape index: {}]
  %s13 = inlined_call_operand.vmem [shape: f32[2,1,32], index: 13, kind: input, shape index: {}]
  %s14 = inlined_call_operand.vmem [shape: f32[128,32], index: 14, kind: input, shape index: {}]
  %s15 = inlined_call_operand.vmem [shape: f32[1,128], index: 15, kind: input, shape index: {}]
  %s16 = inlined_call_operand.hbm [shape: f32[2,128], index: 16, kind: output, shape index: {}]
  %s17 = sld [smem:[#allocation0]]
  $region74: #{tpu_custom_call.1} parent=0
    _
  %s19 = ssub.s32 1, %s17
  %s20 = scalar_select 0, %s19, %s17
  $region1: #{tpu_custom_call.1} parent=0
    #allocation2 [shape = 'u8[1024]{0}', space=vmem, size = 0x400, scoped, tag = 'output window, operand 0, single buffered']
    #allocation3 [shape = 's32[1]{0}', space=sflag, size = 0x4, scoped, tag = 'scoped memory for tpu_custom_call.1']
    %21 = vsyncpa [#allocation3], 0
    // Predicated region
    $region2: #{tpu_custom_call.1} parent=1 // pred_check
      _
    $region3: #{tpu_custom_call.1} parent=1 // pred_check_branch
      %23 = sbr.rel (0) target = $region5
    $region4: #{tpu_custom_call.1} parent=1 // pred_region
      _
    $region5: #{tpu_custom_call.1} parent=1 // pred_fallthru
      _
    // Predicated region
    $region6: #{tpu_custom_call.1} parent=1 // pred_check
      _
    $region7: #{tpu_custom_call.1} parent=1 // pred_check_branch
      %25 = sbr.rel (0) target = $region9
    $region8: #{tpu_custom_call.1} parent=1 // pred_region
      _
    $region9: #{tpu_custom_call.1} parent=1 // pred_fallthru
      _
    // Predicated region
    $region10: #{tpu_custom_call.1} parent=1 // pred_check
      _
    $region11: #{tpu_custom_call.1} parent=1 // pred_check_branch
      %27 = sbr.rel (0) target = $region13
    $region12: #{tpu_custom_call.1} parent=1 // pred_region
      _
    $region13: #{tpu_custom_call.1} parent=1 // pred_fallthru
      _
    // Predicated region
    $region14: #{tpu_custom_call.1} parent=1 // pred_check
      _
    $region15: #{tpu_custom_call.1} parent=1 // pred_check_branch
      %29 = sbr.rel (0) target = $region17
    $region16: #{tpu_custom_call.1} parent=1 // pred_region
      _
    $region17: #{tpu_custom_call.1} parent=1 // pred_fallthru
      _
    // Predicated region
    $region18: #{tpu_custom_call.1} parent=1 // pred_check
      _
    $region19: #{tpu_custom_call.1} parent=1 // pred_check_branch
      %31 = sbr.rel (0) target = $region21
    $region20: #{tpu_custom_call.1} parent=1 // pred_region
      _
    $region21: #{tpu_custom_call.1} parent=1 // pred_fallthru
      _
    // Predicated region
    $region22: #{tpu_custom_call.1} parent=1 // pred_check
      _
    $region23: #{tpu_custom_call.1} parent=1 // pred_check_branch
      %33 = sbr.rel (0) target = $region25
    $region24: #{tpu_custom_call.1} parent=1 // pred_region
      _
    $region25: #{tpu_custom_call.1} parent=1 // pred_fallthru
      _
    // Predicated region
    $region26: #{tpu_custom_call.1} parent=1 // pred_check
      _
    $region27: #{tpu_custom_call.1} parent=1 // pred_check_branch
      %35 = sbr.rel (0) target = $region29
    $region28: #{tpu_custom_call.1} parent=1 // pred_region
      _
    $region29: #{tpu_custom_call.1} parent=1 // pred_fallthru
      _
    // Predicated region
    $region30: #{tpu_custom_call.1} parent=1 // pred_check
      _
    $region31: #{tpu_custom_call.1} parent=1 // pred_check_branch
      %37 = sbr.rel (0) target = $region33
    $region32: #{tpu_custom_call.1} parent=1 // pred_region
      _
    $region33: #{tpu_custom_call.1} parent=1 // pred_fallthru
      _
    // Predicated region
    $region34: #{tpu_custom_call.1} parent=1 // pred_check
      _
    $region35: #{tpu_custom_call.1} parent=1 // pred_check_branch
      %39 = sbr.rel (0) target = $region37
    $region36: #{tpu_custom_call.1} parent=1 // pred_region
      _
    $region37: #{tpu_custom_call.1} parent=1 // pred_fallthru
      _
    // Predicated region
    $region38: #{tpu_custom_call.1} parent=1 // pred_check
      _
    $region39: #{tpu_custom_call.1} parent=1 // pred_check_branch
      %41 = sbr.rel (0) target = $region41
    $region40: #{tpu_custom_call.1} parent=1 // pred_region
      _
    $region41: #{tpu_custom_call.1} parent=1 // pred_fallthru
      _
    // Predicated region
    $region42: #{tpu_custom_call.1} parent=1 // pred_check
      _
    $region43: #{tpu_custom_call.1} parent=1 // pred_check_branch
      %43 = sbr.rel (0) target = $region45
    $region44: #{tpu_custom_call.1} parent=1 // pred_region
      _
    $region45: #{tpu_custom_call.1} parent=1 // pred_fallthru
      _
    // Predicated region
    $region46: #{tpu_custom_call.1} parent=1 // pred_check
      _
    $region47: #{tpu_custom_call.1} parent=1 // pred_check_branch
      %45 = sbr.rel (0) target = $region49
    $region48: #{tpu_custom_call.1} parent=1 // pred_region
      _
    $region49: #{tpu_custom_call.1} parent=1 // pred_fallthru
      _
    // Predicated region
    $region50: #{tpu_custom_call.1} parent=1 // pred_check
      _
    $region51: #{tpu_custom_call.1} parent=1 // pred_check_branch
      %47 = sbr.rel (0) target = $region53
    $region52: #{tpu_custom_call.1} parent=1 // pred_region
      _
    $region53: #{tpu_custom_call.1} parent=1 // pred_fallthru
      _
    // Predicated region
    $region54: #{tpu_custom_call.1} parent=1 // pred_check
      _
    $region55: #{tpu_custom_call.1} parent=1 // pred_check_branch
      %49 = sbr.rel (0) target = $region57
    $region56: #{tpu_custom_call.1} parent=1 // pred_region
      _
    $region57: #{tpu_custom_call.1} parent=1 // pred_fallthru
      _
    // Predicated region
    $region58: #{tpu_custom_call.1} parent=1 // pred_check
      _
    $region59: #{tpu_custom_call.1} parent=1 // pred_check_branch
      %51 = sbr.rel (0) target = $region61
    $region60: #{tpu_custom_call.1} parent=1 // pred_region
      _
    $region61: #{tpu_custom_call.1} parent=1 // pred_fallthru
      _
    // Predicated region
    $region62: #{tpu_custom_call.1} parent=1 // pred_check
      _
    $region63: #{tpu_custom_call.1} parent=1 // pred_check_branch
      %53 = sbr.rel (0) target = $region65
    $region64: #{tpu_custom_call.1} parent=1 // pred_region
      _
    $region65: #{tpu_custom_call.1} parent=1 // pred_fallthru
      _
    %v54 = vld [vmem:[%s0] sm:$0xff]
    %v55 = vld [vmem:[%s0 + $0x8] sm:$0xff]
    %v56 = vld [vmem:[%s1] sm:$0x3]
    %v57 = vsub.f32 1.0, %v56
    %vm58 = vcmp.gt.f32.partialorder %v56, 0.5
    %v59 = vsel %vm58, -1e+30, 0.0
    %v62 = vunpack.c.l.s4 1966171168
    %v63 = vunpack.c.0.s8 %v62
    %v64 = vlaneseq
    %v65 = vshrl.u32 %v64, 7
    %v66 = vsub.s32 %v63, %v65
    %v67 = vrot.slane %v59, %v66
    %v68 = vcombine.high %v67, %v67
    %v70 = vunpack.c.l.s4 1966171168
    %v71 = vunpack.c.0.s8 %v70
    %v72 = vlaneseq
    %v73 = vshrl.u32 %v72, 7
    %v74 = vsub.s32 %v71, %v73
    %v75 = vrot.slane %v67, %v74
    %v77 = vunpack.c.l.s4 1966171168
    %v78 = vunpack.c.0.s8 %v77
    %v79 = vlaneseq
    %v80 = vshrl.u32 %v79, 7
    %v81 = vsub.s32 %v78, %v80
    %v82 = vrot.slane %v68, %v81
    %v83 = vld [vmem:[%s2] sm:$0xff]
    %v84 = vld [vmem:[%s2 + $0x8] sm:$0xff]
    %v85 = vld [vmem:[%s2 + $0x10] sm:$0xff]
    %v86 = vld [vmem:[%s2 + $0x18] sm:$0xff]
    %v87 = vld [vmem:[%s2 + $0x20] sm:$0xff]
    %v88 = vld [vmem:[%s2 + $0x28] sm:$0xff]
    %v89 = vld [vmem:[%s2 + $0x30] sm:$0xff]
    %v90 = vld [vmem:[%s2 + $0x38] sm:$0xff]
    %v91 = vld [vmem:[%s2 + $0x40] sm:$0xff]
    %v92 = vld [vmem:[%s2 + $0x48] sm:$0xff]
    %v93 = vld [vmem:[%s2 + $0x50] sm:$0xff]
    %v94 = vld [vmem:[%s2 + $0x58] sm:$0xff]
    %v95 = vld [vmem:[%s3] sm:$0x1]
    %v97 = vlaneseq
    %v98 = vshrl.u32 %v97, 7
    %v99 = vsub.s32 0, %v98
    %v100 = vrot.slane %v95, %v99
    %vm102 = vcmask 261120
    %v104 = vsel %vm102, %v54, 0
    %v107 = vsel %vm102, %v55, 0
    %v110 = vsel %vm102, %v83, 0
    %v113 = vsel %vm102, %v84, 0
    %v116 = vsel %vm102, %v85, 0
    %v119 = vsel %vm102, %v86, 0
    %v122 = vsel %vm102, %v87, 0
    %v125 = vsel %vm102, %v88, 0
    %v128 = vsel %vm102, %v89, 0
    %v131 = vsel %vm102, %v90, 0
    %v134 = vsel %vm102, %v91, 0
    %v137 = vsel %vm102, %v92, 0
    %v140 = vsel %vm102, %v93, 0
    %v143 = vsel %vm102, %v94, 0
    %145 = vmatprep.subr.mxu0 0.0
    %146 = vmatpush1.xpose.msra.mxu0 0.0
    %147 = vmatprep.subr.mxu0 0.0
    %148 = vmatpush1.xpose.msra.mxu0 0.0
    %149 = vmatprep.subr.mxu0 0.0
    %150 = vmatpush1.xpose.msra.mxu0 0.0
    %151 = vmatprep.subr.mxu0 0.0
    %152 = vmatpush1.xpose.msra.mxu0 0.0
    %153 = vmatprep.subr.mxu0 0.0
    %154 = vmatpush1.xpose.msra.mxu0 %v143
    %155 = vmatprep.subr.mxu0 0.0
    %156 = vmatpush1.xpose.msra.mxu0 %v140
    %157 = vmatprep.subr.mxu0 0.0
    %158 = vmatpush1.xpose.msra.mxu0 %v137
    %159 = vmatprep.subr.mxu0 0.0
    %160 = vmatpush1.xpose.msra.mxu0 %v134
    %161 = vmatprep.subr.mxu0 0.0
    %162 = vmatpush1.xpose.msra.mxu0 %v131
    %163 = vmatprep.subr.mxu0 0.0
    %164 = vmatpush1.xpose.msra.mxu0 %v128
    %165 = vmatprep.subr.mxu0 0.0
    %166 = vmatpush1.xpose.msra.mxu0 %v125
    %167 = vmatprep.subr.mxu0 0.0
    %168 = vmatpush1.xpose.msra.mxu0 %v122
    %169 = vmatprep.subr.mxu0 0.0
    %170 = vmatpush1.xpose.msra.mxu0 %v119
    %171 = vmatprep.subr.mxu0 0.0
    %172 = vmatpush1.xpose.msra.mxu0 %v116
    %173 = vmatprep.subr.mxu0 0.0
    %174 = vmatpush1.xpose.msra.mxu0 %v113
    %175 = vmatprep.subr.mxu0 0.0
    %176 = vmatpush1.xpose.msra.mxu0 %v110
    %177 = vmatprep.subr.mxu0 0.0
    %178 = vmatpush2.xpose.msra.mxu0 0.0
    %179 = vmatprep.subr.mxu0 0.0
    %180 = vmatpush2.xpose.msra.mxu0 0.0
    %181 = vmatprep.subr.mxu0 0.0
    %182 = vmatpush2.xpose.msra.mxu0 0.0
    %183 = vmatprep.subr.mxu0 0.0
    %184 = vmatpush2.xpose.msra.mxu0 0.0
    %185 = vmatprep.subr.mxu0 0.0
    %186 = vmatpush2.xpose.msra.mxu0 0.0
    %187 = vmatprep.subr.mxu0 0.0
    %188 = vmatpush2.xpose.msra.mxu0 0.0
    %189 = vmatprep.subr.mxu0 0.0
    %190 = vmatpush2.xpose.msra.mxu0 0.0
    %191 = vmatprep.subr.mxu0 0.0
    %192 = vmatpush2.xpose.msra.mxu0 0.0
    %193 = vmatprep.subr.mxu0 0.0
    %194 = vmatpush2.xpose.msra.mxu0 0.0
    %195 = vmatprep.subr.mxu0 0.0
    %196 = vmatpush2.xpose.msra.mxu0 0.0
    %197 = vmatprep.subr.mxu0 0.0
    %198 = vmatpush2.xpose.msra.mxu0 0.0
    %199 = vmatprep.subr.mxu0 0.0
    %200 = vmatpush2.xpose.msra.mxu0 0.0
    %201 = vmatprep.subr.mxu0 0.0
    %202 = vmatpush2.xpose.msra.mxu0 0.0
    %203 = vmatprep.subr.mxu0 0.0
    %204 = vmatpush2.xpose.msra.mxu0 0.0
    %205 = vmatprep.subr.mxu0 0.0
    %206 = vmatpush2.xpose.msra.mxu0 0.0
    %207 = vmatprep.subr.mxu0 0.0
    %208 = vmatpush2.xpose.msra.mxu0 0.0
    %209 = vmatprep.mubr.f32.mxu0 0.0
    %210 = vmatmul.mubr.f32.gmra.mxu0 %v104
    %v211 = vpop.f32.mrf.mxu0
    %v212 = vadd.f32 %v100, %v211
    %v213 = vpop.f32.mrf.mxu0
    %214 = vmatprep.mubr.f32.mxu0 0.0
    %215 = vmatmul.mubr.f32.gmra.mxu0 %v107
    %v216 = vpop.f32.mrf.mxu0
    %v217 = vadd.f32 %v100, %v216
    %v218 = vpop.f32.mrf.mxu0
    %219 = vdwg.mxu0
    %v220 = vld [vmem:[%s4] sm:$0xff]
    %v221 = vld [vmem:[%s4 + $0x8] sm:$0xff]
    %v222 = vld [vmem:[%s4 + $0x10] sm:$0xff]
    %v223 = vld [vmem:[%s4 + $0x18] sm:$0xff]
    %v224 = vld [vmem:[%s5] sm:$0x1]
    %v226 = vlaneseq
    %v227 = vshrl.u32 %v226, 7
    %v228 = vsub.s32 0, %v227
    %v229 = vrot.slane %v224, %v228
    %v231 = vadd.f32 %v229, 0.0
    %v232 = vlaneseq
    %v233 = vshrl.u32 %v232, 7
    %v234 = vsub.s32 0, %v233
    %v235 = vrot.slane %v75, %v234
    %v236 = vlaneseq
    %v237 = vshrl.u32 %v236, 7
    %v238 = vsub.s32 0, %v237
    %v239 = vrot.slane %v82, %v238
    %243 = vrot.lane.b32.xlu0 %v212, 96
    %v244 = vpop.permute.xlu0 %243
    %vm245 = vcmask 64512
    %v246 = vsel %vm245, %v212, 0
    %v248 = vsel %vm245, %v244, 0
    %250 = vmatprep.subr.mxu0 0.0
    %251 = vmatpush1.xpose.msra.mxu0 0.0
    %252 = vmatprep.subr.mxu0 0.0
    %253 = vmatpush1.xpose.msra.mxu0 0.0
    %254 = vmatprep.subr.mxu0 0.0
    %255 = vmatpush1.xpose.msra.mxu0 0.0
    %256 = vmatprep.subr.mxu0 0.0
    %257 = vmatpush1.xpose.msra.mxu0 0.0
    %258 = vmatprep.subr.mxu0 0.0
    %259 = vmatpush1.xpose.msra.mxu0 0.0
    %260 = vmatprep.subr.mxu0 0.0
    %261 = vmatpush1.xpose.msra.mxu0 0.0
    %262 = vmatprep.subr.mxu0 0.0
    %263 = vmatpush1.xpose.msra.mxu0 0.0
    %264 = vmatprep.subr.mxu0 0.0
    %265 = vmatpush1.xpose.msra.mxu0 0.0
    %266 = vmatprep.subr.mxu0 0.0
    %267 = vmatpush1.xpose.msra.mxu0 0.0
    %268 = vmatprep.subr.mxu0 0.0
    %269 = vmatpush1.xpose.msra.mxu0 0.0
    %270 = vmatprep.subr.mxu0 0.0
    %271 = vmatpush1.xpose.msra.mxu0 0.0
    %272 = vmatprep.subr.mxu0 0.0
    %273 = vmatpush1.xpose.msra.mxu0 0.0
    %274 = vmatprep.subr.mxu0 0.0
    %275 = vmatpush1.xpose.msra.mxu0 0.0
    %276 = vmatprep.subr.mxu0 0.0
    %277 = vmatpush1.xpose.msra.mxu0 0.0
    %278 = vmatprep.subr.mxu0 0.0
    %279 = vmatpush1.xpose.msra.mxu0 0.0
    %280 = vmatprep.subr.mxu0 0.0
    %281 = vmatpush1.xpose.msra.mxu0 %v248
    %282 = vmatprep.subr.mxu0 0.0
    %283 = vmatpush2.xpose.msra.mxu0 0.0
    %284 = vmatprep.subr.mxu0 0.0
    %285 = vmatpush2.xpose.msra.mxu0 0.0
    %286 = vmatprep.subr.mxu0 0.0
    %287 = vmatpush2.xpose.msra.mxu0 0.0
    %288 = vmatprep.subr.mxu0 0.0
    %289 = vmatpush2.xpose.msra.mxu0 0.0
    %290 = vmatprep.subr.mxu0 0.0
    %291 = vmatpush2.xpose.msra.mxu0 0.0
    %292 = vmatprep.subr.mxu0 0.0
    %293 = vmatpush2.xpose.msra.mxu0 0.0
    %294 = vmatprep.subr.mxu0 0.0
    %295 = vmatpush2.xpose.msra.mxu0 0.0
    %296 = vmatprep.subr.mxu0 0.0
    %297 = vmatpush2.xpose.msra.mxu0 0.0
    %298 = vmatprep.subr.mxu0 0.0
    %299 = vmatpush2.xpose.msra.mxu0 0.0
    %300 = vmatprep.subr.mxu0 0.0
    %301 = vmatpush2.xpose.msra.mxu0 0.0
    %302 = vmatprep.subr.mxu0 0.0
    %303 = vmatpush2.xpose.msra.mxu0 0.0
    %304 = vmatprep.subr.mxu0 0.0
    %305 = vmatpush2.xpose.msra.mxu0 0.0
    %306 = vmatprep.subr.mxu0 0.0
    %307 = vmatpush2.xpose.msra.mxu0 0.0
    %308 = vmatprep.subr.mxu0 0.0
    %309 = vmatpush2.xpose.msra.mxu0 0.0
    %310 = vmatprep.subr.mxu0 0.0
    %311 = vmatpush2.xpose.msra.mxu0 0.0
    %312 = vmatprep.subr.mxu0 0.0
    %313 = vmatpush2.xpose.msra.mxu0 0.0
    %314 = vmatprep.mubr.f32.mxu0 0.0
    %315 = vmatmul.mubr.f32.gmra.mxu0 %v246
    %v316 = vpop.f32.mrf.mxu0
    %v317 = vadd.f32 %v235, %v316
    %v318 = vpop.f32.mrf.mxu0
    %319 = vdwg.mxu0
    %321 = vrot.lane.b32.xlu0 %v217, 96
    %v322 = vpop.permute.xlu0 %321
    %v323 = vsel %vm245, %v217, 0
    %v325 = vsel %vm245, %v322, 0
    %327 = vmatprep.subr.mxu0 0.0
    %328 = vmatpush1.xpose.msra.mxu0 0.0
    %329 = vmatprep.subr.mxu0 0.0
    %330 = vmatpush1.xpose.msra.mxu0 0.0
    %331 = vmatprep.subr.mxu0 0.0
    %332 = vmatpush1.xpose.msra.mxu0 0.0
    %333 = vmatprep.subr.mxu0 0.0
    %334 = vmatpush1.xpose.msra.mxu0 0.0
    %335 = vmatprep.subr.mxu0 0.0
    %336 = vmatpush1.xpose.msra.mxu0 0.0
    %337 = vmatprep.subr.mxu0 0.0
    %338 = vmatpush1.xpose.msra.mxu0 0.0
    %339 = vmatprep.subr.mxu0 0.0
    %340 = vmatpush1.xpose.msra.mxu0 0.0
    %341 = vmatprep.subr.mxu0 0.0
    %342 = vmatpush1.xpose.msra.mxu0 0.0
    %343 = vmatprep.subr.mxu0 0.0
    %344 = vmatpush1.xpose.msra.mxu0 0.0
    %345 = vmatprep.subr.mxu0 0.0
    %346 = vmatpush1.xpose.msra.mxu0 0.0
    %347 = vmatprep.subr.mxu0 0.0
    %348 = vmatpush1.xpose.msra.mxu0 0.0
    %349 = vmatprep.subr.mxu0 0.0
    %350 = vmatpush1.xpose.msra.mxu0 0.0
    %351 = vmatprep.subr.mxu0 0.0
    %352 = vmatpush1.xpose.msra.mxu0 0.0
    %353 = vmatprep.subr.mxu0 0.0
    %354 = vmatpush1.xpose.msra.mxu0 0.0
    %355 = vmatprep.subr.mxu0 0.0
    %356 = vmatpush1.xpose.msra.mxu0 0.0
    %357 = vmatprep.subr.mxu0 0.0
    %358 = vmatpush1.xpose.msra.mxu0 %v325
    %359 = vmatprep.subr.mxu0 0.0
    %360 = vmatpush2.xpose.msra.mxu0 0.0
    %361 = vmatprep.subr.mxu0 0.0
    %362 = vmatpush2.xpose.msra.mxu0 0.0
    %363 = vmatprep.subr.mxu0 0.0
    %364 = vmatpush2.xpose.msra.mxu0 0.0
    %365 = vmatprep.subr.mxu0 0.0
    %366 = vmatpush2.xpose.msra.mxu0 0.0
    %367 = vmatprep.subr.mxu0 0.0
    %368 = vmatpush2.xpose.msra.mxu0 0.0
    %369 = vmatprep.subr.mxu0 0.0
    %370 = vmatpush2.xpose.msra.mxu0 0.0
    %371 = vmatprep.subr.mxu0 0.0
    %372 = vmatpush2.xpose.msra.mxu0 0.0
    %373 = vmatprep.subr.mxu0 0.0
    %374 = vmatpush2.xpose.msra.mxu0 0.0
    %375 = vmatprep.subr.mxu0 0.0
    %376 = vmatpush2.xpose.msra.mxu0 0.0
    %377 = vmatprep.subr.mxu0 0.0
    %378 = vmatpush2.xpose.msra.mxu0 0.0
    %379 = vmatprep.subr.mxu0 0.0
    %380 = vmatpush2.xpose.msra.mxu0 0.0
    %381 = vmatprep.subr.mxu0 0.0
    %382 = vmatpush2.xpose.msra.mxu0 0.0
    %383 = vmatprep.subr.mxu0 0.0
    %384 = vmatpush2.xpose.msra.mxu0 0.0
    %385 = vmatprep.subr.mxu0 0.0
    %386 = vmatpush2.xpose.msra.mxu0 0.0
    %387 = vmatprep.subr.mxu0 0.0
    %388 = vmatpush2.xpose.msra.mxu0 0.0
    %389 = vmatprep.subr.mxu0 0.0
    %390 = vmatpush2.xpose.msra.mxu0 0.0
    %391 = vmatprep.mubr.f32.mxu0 0.0
    %392 = vmatmul.mubr.f32.gmra.mxu0 %v323
    %v393 = vpop.f32.mrf.mxu0
    %v394 = vadd.f32 %v239, %v393
    %v395 = vpop.f32.mrf.mxu0
    %396 = vdwg.mxu0
    %v397 = vsel %vm245, %v317, -inf
    %398 = vmax.xlane.f32.xlu0 %v397
    %v399 = vpop.xlane.xlu0 %398
    %v400 = vsel %vm245, %v394, -inf
    %401 = vmax.xlane.f32.xlu0 %v400
    %v402 = vpop.xlane.xlu0 %401
    %v403 = vsub.f32 %v317, %v399
    %v404 = vsub.f32 %v394, %v402
    %v405 = vmul.f32 %v403, 1.442695
    %v406 = vpow.pop %v405
    %v407 = vmul.f32 %v404, 1.442695
    %v408 = vpow.pop %v407
    %v409 = vsel %vm245, %v406, 0.0
    %410 = vadd.xlane.f32.xlu0 %v409
    %v411 = vpop.xlane.xlu0 %410
    %v412 = vsel %vm245, %v408, 0.0
    %413 = vadd.xlane.f32.xlu0 %v412
    %v414 = vpop.xlane.xlu0 %413
    %v415 = vrcp.pop %v411
    %v416 = vrcp.pop %v414
    %v417 = vmul.f32 %v406, %v415
    %v418 = vmul.f32 %v408, %v416
    %419 = vrot.lane.b32.xlu0 %v212, 64
    %v420 = vpop.permute.xlu0 %419
    %v423 = vsel %vm245, %v417, 0
    %425 = vmatprep.subr.mxu0 0.0
    %426 = vmatpush1.msra.mxu0 0.0
    %427 = vmatprep.subr.mxu0 0.0
    %428 = vmatpush1.msra.mxu0 0.0
    %429 = vmatprep.subr.mxu0 0.0
    %430 = vmatpush1.msra.mxu0 0.0
    %431 = vmatprep.subr.mxu0 0.0
    %432 = vmatpush1.msra.mxu0 0.0
    %433 = vmatprep.subr.mxu0 0.0
    %434 = vmatpush1.msra.mxu0 0.0
    %435 = vmatprep.subr.mxu0 0.0
    %436 = vmatpush1.msra.mxu0 0.0
    %437 = vmatprep.subr.mxu0 0.0
    %438 = vmatpush1.msra.mxu0 0.0
    %439 = vmatprep.subr.mxu0 0.0
    %440 = vmatpush1.msra.mxu0 0.0
    %441 = vmatprep.subr.mxu0 0.0
    %442 = vmatpush1.msra.mxu0 0.0
    %443 = vmatprep.subr.mxu0 0.0
    %444 = vmatpush1.msra.mxu0 0.0
    %445 = vmatprep.subr.mxu0 0.0
    %446 = vmatpush1.msra.mxu0 0.0
    %447 = vmatprep.subr.mxu0 0.0
    %448 = vmatpush1.msra.mxu0 0.0
    %449 = vmatprep.subr.mxu0 0.0
    %450 = vmatpush1.msra.mxu0 0.0
    %451 = vmatprep.subr.mxu0 0.0
    %452 = vmatpush1.msra.mxu0 0.0
    %453 = vmatprep.subr.mxu0 0.0
    %454 = vmatpush1.msra.mxu0 0.0
    %455 = vmatprep.subr.mxu0 0.0
    %456 = vmatpush1.msra.mxu0 %v420
    %457 = vmatprep.subr.mxu0 0.0
    %458 = vmatpush2.msra.mxu0 0.0
    %459 = vmatprep.subr.mxu0 0.0
    %460 = vmatpush2.msra.mxu0 0.0
    %461 = vmatprep.subr.mxu0 0.0
    %462 = vmatpush2.msra.mxu0 0.0
    %463 = vmatprep.subr.mxu0 0.0
    %464 = vmatpush2.msra.mxu0 0.0
    %465 = vmatprep.subr.mxu0 0.0
    %466 = vmatpush2.msra.mxu0 0.0
    %467 = vmatprep.subr.mxu0 0.0
    %468 = vmatpush2.msra.mxu0 0.0
    %469 = vmatprep.subr.mxu0 0.0
    %470 = vmatpush2.msra.mxu0 0.0
    %471 = vmatprep.subr.mxu0 0.0
    %472 = vmatpush2.msra.mxu0 0.0
    %473 = vmatprep.subr.mxu0 0.0
    %474 = vmatpush2.msra.mxu0 0.0
    %475 = vmatprep.subr.mxu0 0.0
    %476 = vmatpush2.msra.mxu0 0.0
    %477 = vmatprep.subr.mxu0 0.0
    %478 = vmatpush2.msra.mxu0 0.0
    %479 = vmatprep.subr.mxu0 0.0
    %480 = vmatpush2.msra.mxu0 0.0
    %481 = vmatprep.subr.mxu0 0.0
    %482 = vmatpush2.msra.mxu0 0.0
    %483 = vmatprep.subr.mxu0 0.0
    %484 = vmatpush2.msra.mxu0 0.0
    %485 = vmatprep.subr.mxu0 0.0
    %486 = vmatpush2.msra.mxu0 0.0
    %487 = vmatprep.subr.mxu0 0.0
    %488 = vmatpush2.msra.mxu0 0.0
    %489 = vmatprep.mubr.f32.mxu0 0.0
    %490 = vmatmul.mubr.f32.gmra.mxu0 %v423
    %v491 = vpop.f32.mrf.mxu0
    %v492 = vadd.f32 0.0, %v491
    %v493 = vpop.f32.mrf.mxu0
    %494 = vdwg.mxu0
    %495 = vrot.lane.b32.xlu0 %v217, 64
    %v496 = vpop.permute.xlu0 %495
    %v499 = vsel %vm245, %v418, 0
    %501 = vmatprep.subr.mxu0 0.0
    %502 = vmatpush1.msra.mxu0 0.0
    %503 = vmatprep.subr.mxu0 0.0
    %504 = vmatpush1.msra.mxu0 0.0
    %505 = vmatprep.subr.mxu0 0.0
    %506 = vmatpush1.msra.mxu0 0.0
    %507 = vmatprep.subr.mxu0 0.0
    %508 = vmatpush1.msra.mxu0 0.0
    %509 = vmatprep.subr.mxu0 0.0
    %510 = vmatpush1.msra.mxu0 0.0
    %511 = vmatprep.subr.mxu0 0.0
    %512 = vmatpush1.msra.mxu0 0.0
    %513 = vmatprep.subr.mxu0 0.0
    %514 = vmatpush1.msra.mxu0 0.0
    %515 = vmatprep.subr.mxu0 0.0
    %516 = vmatpush1.msra.mxu0 0.0
    %517 = vmatprep.subr.mxu0 0.0
    %518 = vmatpush1.msra.mxu0 0.0
    %519 = vmatprep.subr.mxu0 0.0
    %520 = vmatpush1.msra.mxu0 0.0
    %521 = vmatprep.subr.mxu0 0.0
    %522 = vmatpush1.msra.mxu0 0.0
    %523 = vmatprep.subr.mxu0 0.0
    %524 = vmatpush1.msra.mxu0 0.0
    %525 = vmatprep.subr.mxu0 0.0
    %526 = vmatpush1.msra.mxu0 0.0
    %527 = vmatprep.subr.mxu0 0.0
    %528 = vmatpush1.msra.mxu0 0.0
    %529 = vmatprep.subr.mxu0 0.0
    %530 = vmatpush1.msra.mxu0 0.0
    %531 = vmatprep.subr.mxu0 0.0
    %532 = vmatpush1.msra.mxu0 %v496
    %533 = vmatprep.subr.mxu0 0.0
    %534 = vmatpush2.msra.mxu0 0.0
    %535 = vmatprep.subr.mxu0 0.0
    %536 = vmatpush2.msra.mxu0 0.0
    %537 = vmatprep.subr.mxu0 0.0
    %538 = vmatpush2.msra.mxu0 0.0
    %539 = vmatprep.subr.mxu0 0.0
    %540 = vmatpush2.msra.mxu0 0.0
    %541 = vmatprep.subr.mxu0 0.0
    %542 = vmatpush2.msra.mxu0 0.0
    %543 = vmatprep.subr.mxu0 0.0
    %544 = vmatpush2.msra.mxu0 0.0
    %545 = vmatprep.subr.mxu0 0.0
    %546 = vmatpush2.msra.mxu0 0.0
    %547 = vmatprep.subr.mxu0 0.0
    %548 = vmatpush2.msra.mxu0 0.0
    %549 = vmatprep.subr.mxu0 0.0
    %550 = vmatpush2.msra.mxu0 0.0
    %551 = vmatprep.subr.mxu0 0.0
    %552 = vmatpush2.msra.mxu0 0.0
    %553 = vmatprep.subr.mxu0 0.0
    %554 = vmatpush2.msra.mxu0 0.0
    %555 = vmatprep.subr.mxu0 0.0
    %556 = vmatpush2.msra.mxu0 0.0
    %557 = vmatprep.subr.mxu0 0.0
    %558 = vmatpush2.msra.mxu0 0.0
    %559 = vmatprep.subr.mxu0 0.0
    %560 = vmatpush2.msra.mxu0 0.0
    %561 = vmatprep.subr.mxu0 0.0
    %562 = vmatpush2.msra.mxu0 0.0
    %563 = vmatprep.subr.mxu0 0.0
    %564 = vmatpush2.msra.mxu0 0.0
    %565 = vmatprep.mubr.f32.mxu0 0.0
    %566 = vmatmul.mubr.f32.gmra.mxu0 %v499
    %v567 = vpop.f32.mrf.mxu0
    %v568 = vadd.f32 0.0, %v567
    %v569 = vpop.f32.mrf.mxu0
    %570 = vdwg.mxu0
    %v572 = vsel %vm245, %v492, 0
    %v575 = vsel %vm245, %v568, 0
    %v578 = vsel %vm245, %v220, 0
    %v581 = vsel %vm245, %v221, 0
    %v584 = vsel %vm245, %v222, 0
    %v587 = vsel %vm245, %v223, 0
    %589 = vmatprep.subr.mxu0 0.0
    %590 = vmatpush1.xpose.msra.mxu0 0.0
    %591 = vmatprep.subr.mxu0 0.0
    %592 = vmatpush1.xpose.msra.mxu0 0.0
    %593 = vmatprep.subr.mxu0 0.0
    %594 = vmatpush1.xpose.msra.mxu0 0.0
    %595 = vmatprep.subr.mxu0 0.0
    %596 = vmatpush1.xpose.msra.mxu0 0.0
    %597 = vmatprep.subr.mxu0 0.0
    %598 = vmatpush1.xpose.msra.mxu0 0.0
    %599 = vmatprep.subr.mxu0 0.0
    %600 = vmatpush1.xpose.msra.mxu0 0.0
    %601 = vmatprep.subr.mxu0 0.0
    %602 = vmatpush1.xpose.msra.mxu0 0.0
    %603 = vmatprep.subr.mxu0 0.0
    %604 = vmatpush1.xpose.msra.mxu0 0.0
    %605 = vmatprep.subr.mxu0 0.0
    %606 = vmatpush1.xpose.msra.mxu0 0.0
    %607 = vmatprep.subr.mxu0 0.0
    %608 = vmatpush1.xpose.msra.mxu0 0.0
    %609 = vmatprep.subr.mxu0 0.0
    %610 = vmatpush1.xpose.msra.mxu0 0.0
    %611 = vmatprep.subr.mxu0 0.0
    %612 = vmatpush1.xpose.msra.mxu0 0.0
    %613 = vmatprep.subr.mxu0 0.0
    %614 = vmatpush1.xpose.msra.mxu0 %v587
    %615 = vmatprep.subr.mxu0 0.0
    %616 = vmatpush1.xpose.msra.mxu0 %v584
    %617 = vmatprep.subr.mxu0 0.0
    %618 = vmatpush1.xpose.msra.mxu0 %v581
    %619 = vmatprep.subr.mxu0 0.0
    %620 = vmatpush1.xpose.msra.mxu0 %v578
    %621 = vmatprep.subr.mxu0 0.0
    %622 = vmatpush2.xpose.msra.mxu0 0.0
    %623 = vmatprep.subr.mxu0 0.0
    %624 = vmatpush2.xpose.msra.mxu0 0.0
    %625 = vmatprep.subr.mxu0 0.0
    %626 = vmatpush2.xpose.msra.mxu0 0.0
    %627 = vmatprep.subr.mxu0 0.0
    %628 = vmatpush2.xpose.msra.mxu0 0.0
    %629 = vmatprep.subr.mxu0 0.0
    %630 = vmatpush2.xpose.msra.mxu0 0.0
    %631 = vmatprep.subr.mxu0 0.0
    %632 = vmatpush2.xpose.msra.mxu0 0.0
    %633 = vmatprep.subr.mxu0 0.0
    %634 = vmatpush2.xpose.msra.mxu0 0.0
    %635 = vmatprep.subr.mxu0 0.0
    %636 = vmatpush2.xpose.msra.mxu0 0.0
    %637 = vmatprep.subr.mxu0 0.0
    %638 = vmatpush2.xpose.msra.mxu0 0.0
    %639 = vmatprep.subr.mxu0 0.0
    %640 = vmatpush2.xpose.msra.mxu0 0.0
    %641 = vmatprep.subr.mxu0 0.0
    %642 = vmatpush2.xpose.msra.mxu0 0.0
    %643 = vmatprep.subr.mxu0 0.0
    %644 = vmatpush2.xpose.msra.mxu0 0.0
    %645 = vmatprep.subr.mxu0 0.0
    %646 = vmatpush2.xpose.msra.mxu0 0.0
    %647 = vmatprep.subr.mxu0 0.0
    %648 = vmatpush2.xpose.msra.mxu0 0.0
    %649 = vmatprep.subr.mxu0 0.0
    %650 = vmatpush2.xpose.msra.mxu0 0.0
    %651 = vmatprep.subr.mxu0 0.0
    %652 = vmatpush2.xpose.msra.mxu0 0.0
    %653 = vmatprep.mubr.f32.mxu0 0.0
    %654 = vmatmul.mubr.f32.gmra.mxu0 %v572
    %v655 = vpop.f32.mrf.mxu0
    %v656 = vadd.f32 0.0, %v655
    %v657 = vpop.f32.mrf.mxu0
    %658 = vmatprep.mubr.f32.mxu0 0.0
    %659 = vmatmul.mubr.f32.gmra.mxu0 %v575
    %v660 = vpop.f32.mrf.mxu0
    %v661 = vadd.f32 0.0, %v660
    %v662 = vpop.f32.mrf.mxu0
    %663 = vdwg.mxu0
    %v664 = vadd.f32 %v231, %v656
    %v665 = vadd.f32 %v231, %v661
    %666 = vrot.lane.b32.xlu0 %v212, 120
    %v667 = vpop.permute.xlu0 %666
    %668 = vrot.lane.b32.xlu0 %v212, 88
    %v669 = vpop.permute.xlu0 %668
    %v670 = vsel %vm245, %v667, 0
    %v672 = vsel %vm245, %v669, 0
    %674 = vmatprep.subr.mxu0 0.0
    %675 = vmatpush1.xpose.msra.mxu0 0.0
    %676 = vmatprep.subr.mxu0 0.0
    %677 = vmatpush1.xpose.msra.mxu0 0.0
    %678 = vmatprep.subr.mxu0 0.0
    %679 = vmatpush1.xpose.msra.mxu0 0.0
    %680 = vmatprep.subr.mxu0 0.0
    %681 = vmatpush1.xpose.msra.mxu0 0.0
    %682 = vmatprep.subr.mxu0 0.0
    %683 = vmatpush1.xpose.msra.mxu0 0.0
    %684 = vmatprep.subr.mxu0 0.0
    %685 = vmatpush1.xpose.msra.mxu0 0.0
    %686 = vmatprep.subr.mxu0 0.0
    %687 = vmatpush1.xpose.msra.mxu0 0.0
    %688 = vmatprep.subr.mxu0 0.0
    %689 = vmatpush1.xpose.msra.mxu0 0.0
    %690 = vmatprep.subr.mxu0 0.0
    %691 = vmatpush1.xpose.msra.mxu0 0.0
    %692 = vmatprep.subr.mxu0 0.0
    %693 = vmatpush1.xpose.msra.mxu0 0.0
    %694 = vmatprep.subr.mxu0 0.0
    %695 = vmatpush1.xpose.msra.mxu0 0.0
    %696 = vmatprep.subr.mxu0 0.0
    %697 = vmatpush1.xpose.msra.mxu0 0.0
    %698 = vmatprep.subr.mxu0 0.0
    %699 = vmatpush1.xpose.msra.mxu0 0.0
    %700 = vmatprep.subr.mxu0 0.0
    %701 = vmatpush1.xpose.msra.mxu0 0.0
    %702 = vmatprep.subr.mxu0 0.0
    %703 = vmatpush1.xpose.msra.mxu0 0.0
    %704 = vmatprep.subr.mxu0 0.0
    %705 = vmatpush1.xpose.msra.mxu0 %v672
    %706 = vmatprep.subr.mxu0 0.0
    %707 = vmatpush2.xpose.msra.mxu0 0.0
    %708 = vmatprep.subr.mxu0 0.0
    %709 = vmatpush2.xpose.msra.mxu0 0.0
    %710 = vmatprep.subr.mxu0 0.0
    %711 = vmatpush2.xpose.msra.mxu0 0.0
    %712 = vmatprep.subr.mxu0 0.0
    %713 = vmatpush2.xpose.msra.mxu0 0.0
    %714 = vmatprep.subr.mxu0 0.0
    %715 = vmatpush2.xpose.msra.mxu0 0.0
    %716 = vmatprep.subr.mxu0 0.0
    %717 = vmatpush2.xpose.msra.mxu0 0.0
    %718 = vmatprep.subr.mxu0 0.0
    %719 = vmatpush2.xpose.msra.mxu0 0.0
    %720 = vmatprep.subr.mxu0 0.0
    %721 = vmatpush2.xpose.msra.mxu0 0.0
    %722 = vmatprep.subr.mxu0 0.0
    %723 = vmatpush2.xpose.msra.mxu0 0.0
    %724 = vmatprep.subr.mxu0 0.0
    %725 = vmatpush2.xpose.msra.mxu0 0.0
    %726 = vmatprep.subr.mxu0 0.0
    %727 = vmatpush2.xpose.msra.mxu0 0.0
    %728 = vmatprep.subr.mxu0 0.0
    %729 = vmatpush2.xpose.msra.mxu0 0.0
    %730 = vmatprep.subr.mxu0 0.0
    %731 = vmatpush2.xpose.msra.mxu0 0.0
    %732 = vmatprep.subr.mxu0 0.0
    %733 = vmatpush2.xpose.msra.mxu0 0.0
    %734 = vmatprep.subr.mxu0 0.0
    %735 = vmatpush2.xpose.msra.mxu0 0.0
    %736 = vmatprep.subr.mxu0 0.0
    %737 = vmatpush2.xpose.msra.mxu0 0.0
    %738 = vmatprep.mubr.f32.mxu0 0.0
    %739 = vmatmul.mubr.f32.gmra.mxu0 %v670
    %v740 = vpop.f32.mrf.mxu0
    %v741 = vadd.f32 %v235, %v740
    %v742 = vpop.f32.mrf.mxu0
    %743 = vdwg.mxu0
    %744 = vrot.lane.b32.xlu0 %v217, 120
    %v745 = vpop.permute.xlu0 %744
    %746 = vrot.lane.b32.xlu0 %v217, 88
    %v747 = vpop.permute.xlu0 %746
    %v748 = vsel %vm245, %v745, 0
    %v750 = vsel %vm245, %v747, 0
    %752 = vmatprep.subr.mxu0 0.0
    %753 = vmatpush1.xpose.msra.mxu0 0.0
    %754 = vmatprep.subr.mxu0 0.0
    %755 = vmatpush1.xpose.msra.mxu0 0.0
    %756 = vmatprep.subr.mxu0 0.0
    %757 = vmatpush1.xpose.msra.mxu0 0.0
    %758 = vmatprep.subr.mxu0 0.0
    %759 = vmatpush1.xpose.msra.mxu0 0.0
    %760 = vmatprep.subr.mxu0 0.0
    %761 = vmatpush1.xpose.msra.mxu0 0.0
    %762 = vmatprep.subr.mxu0 0.0
    %763 = vmatpush1.xpose.msra.mxu0 0.0
    %764 = vmatprep.subr.mxu0 0.0
    %765 = vmatpush1.xpose.msra.mxu0 0.0
    %766 = vmatprep.subr.mxu0 0.0
    %767 = vmatpush1.xpose.msra.mxu0 0.0
    %768 = vmatprep.subr.mxu0 0.0
    %769 = vmatpush1.xpose.msra.mxu0 0.0
    %770 = vmatprep.subr.mxu0 0.0
    %771 = vmatpush1.xpose.msra.mxu0 0.0
    %772 = vmatprep.subr.mxu0 0.0
    %773 = vmatpush1.xpose.msra.mxu0 0.0
    %774 = vmatprep.subr.mxu0 0.0
    %775 = vmatpush1.xpose.msra.mxu0 0.0
    %776 = vmatprep.subr.mxu0 0.0
    %777 = vmatpush1.xpose.msra.mxu0 0.0
    %778 = vmatprep.subr.mxu0 0.0
    %779 = vmatpush1.xpose.msra.mxu0 0.0
    %780 = vmatprep.subr.mxu0 0.0
    %781 = vmatpush1.xpose.msra.mxu0 0.0
    %782 = vmatprep.subr.mxu0 0.0
    %783 = vmatpush1.xpose.msra.mxu0 %v750
    %784 = vmatprep.subr.mxu0 0.0
    %785 = vmatpush2.xpose.msra.mxu0 0.0
    %786 = vmatprep.subr.mxu0 0.0
    %787 = vmatpush2.xpose.msra.mxu0 0.0
    %788 = vmatprep.subr.mxu0 0.0
    %789 = vmatpush2.xpose.msra.mxu0 0.0
    %790 = vmatprep.subr.mxu0 0.0
    %791 = vmatpush2.xpose.msra.mxu0 0.0
    %792 = vmatprep.subr.mxu0 0.0
    %793 = vmatpush2.xpose.msra.mxu0 0.0
    %794 = vmatprep.subr.mxu0 0.0
    %795 = vmatpush2.xpose.msra.mxu0 0.0
    %796 = vmatprep.subr.mxu0 0.0
    %797 = vmatpush2.xpose.msra.mxu0 0.0
    %798 = vmatprep.subr.mxu0 0.0
    %799 = vmatpush2.xpose.msra.mxu0 0.0
    %800 = vmatprep.subr.mxu0 0.0
    %801 = vmatpush2.xpose.msra.mxu0 0.0
    %802 = vmatprep.subr.mxu0 0.0
    %803 = vmatpush2.xpose.msra.mxu0 0.0
    %804 = vmatprep.subr.mxu0 0.0
    %805 = vmatpush2.xpose.msra.mxu0 0.0
    %806 = vmatprep.subr.mxu0 0.0
    %807 = vmatpush2.xpose.msra.mxu0 0.0
    %808 = vmatprep.subr.mxu0 0.0
    %809 = vmatpush2.xpose.msra.mxu0 0.0
    %810 = vmatprep.subr.mxu0 0.0
    %811 = vmatpush2.xpose.msra.mxu0 0.0
    %812 = vmatprep.subr.mxu0 0.0
    %813 = vmatpush2.xpose.msra.mxu0 0.0
    %814 = vmatprep.subr.mxu0 0.0
    %815 = vmatpush2.xpose.msra.mxu0 0.0
    %816 = vmatprep.mubr.f32.mxu0 0.0
    %817 = vmatmul.mubr.f32.gmra.mxu0 %v748
    %v818 = vpop.f32.mrf.mxu0
    %v819 = vadd.f32 %v239, %v818
    %v820 = vpop.f32.mrf.mxu0
    %821 = vdwg.mxu0
    %v822 = vsel %vm245, %v741, -inf
    %823 = vmax.xlane.f32.xlu0 %v822
    %v824 = vpop.xlane.xlu0 %823
    %v825 = vsel %vm245, %v819, -inf
    %826 = vmax.xlane.f32.xlu0 %v825
    %v827 = vpop.xlane.xlu0 %826
    %v828 = vsub.f32 %v741, %v824
    %v829 = vsub.f32 %v819, %v827
    %v830 = vmul.f32 %v828, 1.442695
    %v831 = vpow.pop %v830
    %v832 = vmul.f32 %v829, 1.442695
    %v833 = vpow.pop %v832
    %v834 = vsel %vm245, %v831, 0.0
    %835 = vadd.xlane.f32.xlu0 %v834
    %v836 = vpop.xlane.xlu0 %835
    %v837 = vsel %vm245, %v833, 0.0
    %838 = vadd.xlane.f32.xlu0 %v837
    %v839 = vpop.xlane.xlu0 %838
    %v840 = vrcp.pop %v836
    %v841 = vrcp.pop %v839
    %v842 = vmul.f32 %v831, %v840
    %v843 = vmul.f32 %v833, %v841
    %844 = vrot.lane.b32.xlu0 %v212, 56
    %v845 = vpop.permute.xlu0 %844
    %v848 = vsel %vm245, %v842, 0
    %850 = vmatprep.subr.mxu0 0.0
    %851 = vmatpush1.msra.mxu0 0.0
    %852 = vmatprep.subr.mxu0 0.0
    %853 = vmatpush1.msra.mxu0 0.0
    %854 = vmatprep.subr.mxu0 0.0
    %855 = vmatpush1.msra.mxu0 0.0
    %856 = vmatprep.subr.mxu0 0.0
    %857 = vmatpush1.msra.mxu0 0.0
    %858 = vmatprep.subr.mxu0 0.0
    %859 = vmatpush1.msra.mxu0 0.0
    %860 = vmatprep.subr.mxu0 0.0
    %861 = vmatpush1.msra.mxu0 0.0
    %862 = vmatprep.subr.mxu0 0.0
    %863 = vmatpush1.msra.mxu0 0.0
    %864 = vmatprep.subr.mxu0 0.0
    %865 = vmatpush1.msra.mxu0 0.0
    %866 = vmatprep.subr.mxu0 0.0
    %867 = vmatpush1.msra.mxu0 0.0
    %868 = vmatprep.subr.mxu0 0.0
    %869 = vmatpush1.msra.mxu0 0.0
    %870 = vmatprep.subr.mxu0 0.0
    %871 = vmatpush1.msra.mxu0 0.0
    %872 = vmatprep.subr.mxu0 0.0
    %873 = vmatpush1.msra.mxu0 0.0
    %874 = vmatprep.subr.mxu0 0.0
    %875 = vmatpush1.msra.mxu0 0.0
    %876 = vmatprep.subr.mxu0 0.0
    %877 = vmatpush1.msra.mxu0 0.0
    %878 = vmatprep.subr.mxu0 0.0
    %879 = vmatpush1.msra.mxu0 0.0
    %880 = vmatprep.subr.mxu0 0.0
    %881 = vmatpush1.msra.mxu0 %v845
    %882 = vmatprep.subr.mxu0 0.0
    %883 = vmatpush2.msra.mxu0 0.0
    %884 = vmatprep.subr.mxu0 0.0
    %885 = vmatpush2.msra.mxu0 0.0
    %886 = vmatprep.subr.mxu0 0.0
    %887 = vmatpush2.msra.mxu0 0.0
    %888 = vmatprep.subr.mxu0 0.0
    %889 = vmatpush2.msra.mxu0 0.0
    %890 = vmatprep.subr.mxu0 0.0
    %891 = vmatpush2.msra.mxu0 0.0
    %892 = vmatprep.subr.mxu0 0.0
    %893 = vmatpush2.msra.mxu0 0.0
    %894 = vmatprep.subr.mxu0 0.0
    %895 = vmatpush2.msra.mxu0 0.0
    %896 = vmatprep.subr.mxu0 0.0
    %897 = vmatpush2.msra.mxu0 0.0
    %898 = vmatprep.subr.mxu0 0.0
    %899 = vmatpush2.msra.mxu0 0.0
    %900 = vmatprep.subr.mxu0 0.0
    %901 = vmatpush2.msra.mxu0 0.0
    %902 = vmatprep.subr.mxu0 0.0
    %903 = vmatpush2.msra.mxu0 0.0
    %904 = vmatprep.subr.mxu0 0.0
    %905 = vmatpush2.msra.mxu0 0.0
    %906 = vmatprep.subr.mxu0 0.0
    %907 = vmatpush2.msra.mxu0 0.0
    %908 = vmatprep.subr.mxu0 0.0
    %909 = vmatpush2.msra.mxu0 0.0
    %910 = vmatprep.subr.mxu0 0.0
    %911 = vmatpush2.msra.mxu0 0.0
    %912 = vmatprep.subr.mxu0 0.0
    %913 = vmatpush2.msra.mxu0 0.0
    %914 = vmatprep.mubr.f32.mxu0 0.0
    %915 = vmatmul.mubr.f32.gmra.mxu0 %v848
    %v916 = vpop.f32.mrf.mxu0
    %v917 = vadd.f32 0.0, %v916
    %v918 = vpop.f32.mrf.mxu0
    %919 = vdwg.mxu0
    %920 = vrot.lane.b32.xlu0 %v217, 56
    %v921 = vpop.permute.xlu0 %920
    %v924 = vsel %vm245, %v843, 0
    %926 = vmatprep.subr.mxu0 0.0
    %927 = vmatpush1.msra.mxu0 0.0
    %928 = vmatprep.subr.mxu0 0.0
    %929 = vmatpush1.msra.mxu0 0.0
    %930 = vmatprep.subr.mxu0 0.0
    %931 = vmatpush1.msra.mxu0 0.0
    %932 = vmatprep.subr.mxu0 0.0
    %933 = vmatpush1.msra.mxu0 0.0
    %934 = vmatprep.subr.mxu0 0.0
    %935 = vmatpush1.msra.mxu0 0.0
    %936 = vmatprep.subr.mxu0 0.0
    %937 = vmatpush1.msra.mxu0 0.0
    %938 = vmatprep.subr.mxu0 0.0
    %939 = vmatpush1.msra.mxu0 0.0
    %940 = vmatprep.subr.mxu0 0.0
    %941 = vmatpush1.msra.mxu0 0.0
    %942 = vmatprep.subr.mxu0 0.0
    %943 = vmatpush1.msra.mxu0 0.0
    %944 = vmatprep.subr.mxu0 0.0
    %945 = vmatpush1.msra.mxu0 0.0
    %946 = vmatprep.subr.mxu0 0.0
    %947 = vmatpush1.msra.mxu0 0.0
    %948 = vmatprep.subr.mxu0 0.0
    %949 = vmatpush1.msra.mxu0 0.0
    %950 = vmatprep.subr.mxu0 0.0
    %951 = vmatpush1.msra.mxu0 0.0
    %952 = vmatprep.subr.mxu0 0.0
    %953 = vmatpush1.msra.mxu0 0.0
    %954 = vmatprep.subr.mxu0 0.0
    %955 = vmatpush1.msra.mxu0 0.0
    %956 = vmatprep.subr.mxu0 0.0
    %957 = vmatpush1.msra.mxu0 %v921
    %958 = vmatprep.subr.mxu0 0.0
    %959 = vmatpush2.msra.mxu0 0.0
    %960 = vmatprep.subr.mxu0 0.0
    %961 = vmatpush2.msra.mxu0 0.0
    %962 = vmatprep.subr.mxu0 0.0
    %963 = vmatpush2.msra.mxu0 0.0
    %964 = vmatprep.subr.mxu0 0.0
    %965 = vmatpush2.msra.mxu0 0.0
    %966 = vmatprep.subr.mxu0 0.0
    %967 = vmatpush2.msra.mxu0 0.0
    %968 = vmatprep.subr.mxu0 0.0
    %969 = vmatpush2.msra.mxu0 0.0
    %970 = vmatprep.subr.mxu0 0.0
    %971 = vmatpush2.msra.mxu0 0.0
    %972 = vmatprep.subr.mxu0 0.0
    %973 = vmatpush2.msra.mxu0 0.0
    %974 = vmatprep.subr.mxu0 0.0
    %975 = vmatpush2.msra.mxu0 0.0
    %976 = vmatprep.subr.mxu0 0.0
    %977 = vmatpush2.msra.mxu0 0.0
    %978 = vmatprep.subr.mxu0 0.0
    %979 = vmatpush2.msra.mxu0 0.0
    %980 = vmatprep.subr.mxu0 0.0
    %981 = vmatpush2.msra.mxu0 0.0
    %982 = vmatprep.subr.mxu0 0.0
    %983 = vmatpush2.msra.mxu0 0.0
    %984 = vmatprep.subr.mxu0 0.0
    %985 = vmatpush2.msra.mxu0 0.0
    %986 = vmatprep.subr.mxu0 0.0
    %987 = vmatpush2.msra.mxu0 0.0
    %988 = vmatprep.subr.mxu0 0.0
    %989 = vmatpush2.msra.mxu0 0.0
    %990 = vmatprep.mubr.f32.mxu0 0.0
    %991 = vmatmul.mubr.f32.gmra.mxu0 %v924
    %v992 = vpop.f32.mrf.mxu0
    %v993 = vadd.f32 0.0, %v992
    %v994 = vpop.f32.mrf.mxu0
    %995 = vdwg.mxu0
    %996 = vrot.lane.b32.xlu0 %v220, 120
    %v997 = vpop.permute.xlu0 %996
    %998 = vrot.lane.b32.xlu0 %v221, 120
    %v999 = vpop.permute.xlu0 %998
    %1000 = vrot.lane.b32.xlu0 %v222, 120
    %v1001 = vpop.permute.xlu0 %1000
    %1002 = vrot.lane.b32.xlu0 %v223, 120
    %v1003 = vpop.permute.xlu0 %1002
    %v1005 = vsel %vm245, %v917, 0
    %v1008 = vsel %vm245, %v993, 0
    %v1010 = vsel %vm245, %v997, 0
    %v1012 = vsel %vm245, %v999, 0
    %v1014 = vsel %vm245, %v1001, 0
    %v1016 = vsel %vm245, %v1003, 0
    %1018 = vmatprep.subr.mxu0 0.0
    %1019 = vmatpush1.xpose.msra.mxu0 0.0
    %1020 = vmatprep.subr.mxu0 0.0
    %1021 = vmatpush1.xpose.msra.mxu0 0.0
    %1022 = vmatprep.subr.mxu0 0.0
    %1023 = vmatpush1.xpose.msra.mxu0 0.0
    %1024 = vmatprep.subr.mxu0 0.0
    %1025 = vmatpush1.xpose.msra.mxu0 0.0
    %1026 = vmatprep.subr.mxu0 0.0
    %1027 = vmatpush1.xpose.msra.mxu0 0.0
    %1028 = vmatprep.subr.mxu0 0.0
    %1029 = vmatpush1.xpose.msra.mxu0 0.0
    %1030 = vmatprep.subr.mxu0 0.0
    %1031 = vmatpush1.xpose.msra.mxu0 0.0
    %1032 = vmatprep.subr.mxu0 0.0
    %1033 = vmatpush1.xpose.msra.mxu0 0.0
    %1034 = vmatprep.subr.mxu0 0.0
    %1035 = vmatpush1.xpose.msra.mxu0 0.0
    %1036 = vmatprep.subr.mxu0 0.0
    %1037 = vmatpush1.xpose.msra.mxu0 0.0
    %1038 = vmatprep.subr.mxu0 0.0
    %1039 = vmatpush1.xpose.msra.mxu0 0.0
    %1040 = vmatprep.subr.mxu0 0.0
    %1041 = vmatpush1.xpose.msra.mxu0 0.0
    %1042 = vmatprep.subr.mxu0 0.0
    %1043 = vmatpush1.xpose.msra.mxu0 %v1016
    %1044 = vmatprep.subr.mxu0 0.0
    %1045 = vmatpush1.xpose.msra.mxu0 %v1014
    %1046 = vmatprep.subr.mxu0 0.0
    %1047 = vmatpush1.xpose.msra.mxu0 %v1012
    %1048 = vmatprep.subr.mxu0 0.0
    %1049 = vmatpush1.xpose.msra.mxu0 %v1010
    %1050 = vmatprep.subr.mxu0 0.0
    %1051 = vmatpush2.xpose.msra.mxu0 0.0
    %1052 = vmatprep.subr.mxu0 0.0
    %1053 = vmatpush2.xpose.msra.mxu0 0.0
    %1054 = vmatprep.subr.mxu0 0.0
    %1055 = vmatpush2.xpose.msra.mxu0 0.0
    %1056 = vmatprep.subr.mxu0 0.0
    %1057 = vmatpush2.xpose.msra.mxu0 0.0
    %1058 = vmatprep.subr.mxu0 0.0
    %1059 = vmatpush2.xpose.msra.mxu0 0.0
    %1060 = vmatprep.subr.mxu0 0.0
    %1061 = vmatpush2.xpose.msra.mxu0 0.0
    %1062 = vmatprep.subr.mxu0 0.0
    %1063 = vmatpush2.xpose.msra.mxu0 0.0
    %1064 = vmatprep.subr.mxu0 0.0
    %1065 = vmatpush2.xpose.msra.mxu0 0.0
    %1066 = vmatprep.subr.mxu0 0.0
    %1067 = vmatpush2.xpose.msra.mxu0 0.0
    %1068 = vmatprep.subr.mxu0 0.0
    %1069 = vmatpush2.xpose.msra.mxu0 0.0
    %1070 = vmatprep.subr.mxu0 0.0
    %1071 = vmatpush2.xpose.msra.mxu0 0.0
    %1072 = vmatprep.subr.mxu0 0.0
    %1073 = vmatpush2.xpose.msra.mxu0 0.0
    %1074 = vmatprep.subr.mxu0 0.0
    %1075 = vmatpush2.xpose.msra.mxu0 0.0
    %1076 = vmatprep.subr.mxu0 0.0
    %1077 = vmatpush2.xpose.msra.mxu0 0.0
    %1078 = vmatprep.subr.mxu0 0.0
    %1079 = vmatpush2.xpose.msra.mxu0 0.0
    %1080 = vmatprep.subr.mxu0 0.0
    %1081 = vmatpush2.xpose.msra.mxu0 0.0
    %1082 = vmatprep.mubr.f32.mxu0 0.0
    %1083 = vmatmul.mubr.f32.gmra.mxu0 %v1005
    %v1084 = vpop.f32.mrf.mxu0
    %v1085 = vadd.f32 0.0, %v1084
    %v1086 = vpop.f32.mrf.mxu0
    %1087 = vmatprep.mubr.f32.mxu0 0.0
    %1088 = vmatmul.mubr.f32.gmra.mxu0 %v1008
    %v1089 = vpop.f32.mrf.mxu0
    %v1090 = vadd.f32 0.0, %v1089
    %v1091 = vpop.f32.mrf.mxu0
    %1092 = vdwg.mxu0
    %v1093 = vadd.f32 %v664, %v1085
    %v1094 = vadd.f32 %v665, %v1090
    %1095 = vrot.lane.b32.xlu0 %v212, 112
    %v1096 = vpop.permute.xlu0 %1095
    %1097 = vrot.lane.b32.xlu0 %v212, 80
    %v1098 = vpop.permute.xlu0 %1097
    %v1099 = vsel %vm245, %v1096, 0
    %v1101 = vsel %vm245, %v1098, 0
    %1103 = vmatprep.subr.mxu0 0.0
    %1104 = vmatpush1.xpose.msra.mxu0 0.0
    %1105 = vmatprep.subr.mxu0 0.0
    %1106 = vmatpush1.xpose.msra.mxu0 0.0
    %1107 = vmatprep.subr.mxu0 0.0
    %1108 = vmatpush1.xpose.msra.mxu0 0.0
    %1109 = vmatprep.subr.mxu0 0.0
    %1110 = vmatpush1.xpose.msra.mxu0 0.0
    %1111 = vmatprep.subr.mxu0 0.0
    %1112 = vmatpush1.xpose.msra.mxu0 0.0
    %1113 = vmatprep.subr.mxu0 0.0
    %1114 = vmatpush1.xpose.msra.mxu0 0.0
    %1115 = vmatprep.subr.mxu0 0.0
    %1116 = vmatpush1.xpose.msra.mxu0 0.0
    %1117 = vmatprep.subr.mxu0 0.0
    %1118 = vmatpush1.xpose.msra.mxu0 0.0
    %1119 = vmatprep.subr.mxu0 0.0
    %1120 = vmatpush1.xpose.msra.mxu0 0.0
    %1121 = vmatprep.subr.mxu0 0.0
    %1122 = vmatpush1.xpose.msra.mxu0 0.0
    %1123 = vmatprep.subr.mxu0 0.0
    %1124 = vmatpush1.xpose.msra.mxu0 0.0
    %1125 = vmatprep.subr.mxu0 0.0
    %1126 = vmatpush1.xpose.msra.mxu0 0.0
    %1127 = vmatprep.subr.mxu0 0.0
    %1128 = vmatpush1.xpose.msra.mxu0 0.0
    %1129 = vmatprep.subr.mxu0 0.0
    %1130 = vmatpush1.xpose.msra.mxu0 0.0
    %1131 = vmatprep.subr.mxu0 0.0
    %1132 = vmatpush1.xpose.msra.mxu0 0.0
    %1133 = vmatprep.subr.mxu0 0.0
    %1134 = vmatpush1.xpose.msra.mxu0 %v1101
    %1135 = vmatprep.subr.mxu0 0.0
    %1136 = vmatpush2.xpose.msra.mxu0 0.0
    %1137 = vmatprep.subr.mxu0 0.0
    %1138 = vmatpush2.xpose.msra.mxu0 0.0
    %1139 = vmatprep.subr.mxu0 0.0
    %1140 = vmatpush2.xpose.msra.mxu0 0.0
    %1141 = vmatprep.subr.mxu0 0.0
    %1142 = vmatpush2.xpose.msra.mxu0 0.0
    %1143 = vmatprep.subr.mxu0 0.0
    %1144 = vmatpush2.xpose.msra.mxu0 0.0
    %1145 = vmatprep.subr.mxu0 0.0
    %1146 = vmatpush2.xpose.msra.mxu0 0.0
    %1147 = vmatprep.subr.mxu0 0.0
    %1148 = vmatpush2.xpose.msra.mxu0 0.0
    %1149 = vmatprep.subr.mxu0 0.0
    %1150 = vmatpush2.xpose.msra.mxu0 0.0
    %1151 = vmatprep.subr.mxu0 0.0
    %1152 = vmatpush2.xpose.msra.mxu0 0.0
    %1153 = vmatprep.subr.mxu0 0.0
    %1154 = vmatpush2.xpose.msra.mxu0 0.0
    %1155 = vmatprep.subr.mxu0 0.0
    %1156 = vmatpush2.xpose.msra.mxu0 0.0
    %1157 = vmatprep.subr.mxu0 0.0
    %1158 = vmatpush2.xpose.msra.mxu0 0.0
    %1159 = vmatprep.subr.mxu0 0.0
    %1160 = vmatpush2.xpose.msra.mxu0 0.0
    %1161 = vmatprep.subr.mxu0 0.0
    %1162 = vmatpush2.xpose.msra.mxu0 0.0
    %1163 = vmatprep.subr.mxu0 0.0
    %1164 = vmatpush2.xpose.msra.mxu0 0.0
    %1165 = vmatprep.subr.mxu0 0.0
    %1166 = vmatpush2.xpose.msra.mxu0 0.0
    %1167 = vmatprep.mubr.f32.mxu0 0.0
    %1168 = vmatmul.mubr.f32.gmra.mxu0 %v1099
    %v1169 = vpop.f32.mrf.mxu0
    %v1170 = vadd.f32 %v235, %v1169
    %v1171 = vpop.f32.mrf.mxu0
    %1172 = vdwg.mxu0
    %1173 = vrot.lane.b32.xlu0 %v217, 112
    %v1174 = vpop.permute.xlu0 %1173
    %1175 = vrot.lane.b32.xlu0 %v217, 80
    %v1176 = vpop.permute.xlu0 %1175
    %v1177 = vsel %vm245, %v1174, 0
    %v1179 = vsel %vm245, %v1176, 0
    %1181 = vmatprep.subr.mxu0 0.0
    %1182 = vmatpush1.xpose.msra.mxu0 0.0
    %1183 = vmatprep.subr.mxu0 0.0
    %1184 = vmatpush1.xpose.msra.mxu0 0.0
    %1185 = vmatprep.subr.mxu0 0.0
    %1186 = vmatpush1.xpose.msra.mxu0 0.0
    %1187 = vmatprep.subr.mxu0 0.0
    %1188 = vmatpush1.xpose.msra.mxu0 0.0
    %1189 = vmatprep.subr.mxu0 0.0
    %1190 = vmatpush1.xpose.msra.mxu0 0.0
    %1191 = vmatprep.subr.mxu0 0.0
    %1192 = vmatpush1.xpose.msra.mxu0 0.0
    %1193 = vmatprep.subr.mxu0 0.0
    %1194 = vmatpush1.xpose.msra.mxu0 0.0
    %1195 = vmatprep.subr.mxu0 0.0
    %1196 = vmatpush1.xpose.msra.mxu0 0.0
    %1197 = vmatprep.subr.mxu0 0.0
    %1198 = vmatpush1.xpose.msra.mxu0 0.0
    %1199 = vmatprep.subr.mxu0 0.0
    %1200 = vmatpush1.xpose.msra.mxu0 0.0
    %1201 = vmatprep.subr.mxu0 0.0
    %1202 = vmatpush1.xpose.msra.mxu0 0.0
    %1203 = vmatprep.subr.mxu0 0.0
    %1204 = vmatpush1.xpose.msra.mxu0 0.0
    %1205 = vmatprep.subr.mxu0 0.0
    %1206 = vmatpush1.xpose.msra.mxu0 0.0
    %1207 = vmatprep.subr.mxu0 0.0
    %1208 = vmatpush1.xpose.msra.mxu0 0.0
    %1209 = vmatprep.subr.mxu0 0.0
    %1210 = vmatpush1.xpose.msra.mxu0 0.0
    %1211 = vmatprep.subr.mxu0 0.0
    %1212 = vmatpush1.xpose.msra.mxu0 %v1179
    %1213 = vmatprep.subr.mxu0 0.0
    %1214 = vmatpush2.xpose.msra.mxu0 0.0
    %1215 = vmatprep.subr.mxu0 0.0
    %1216 = vmatpush2.xpose.msra.mxu0 0.0
    %1217 = vmatprep.subr.mxu0 0.0
    %1218 = vmatpush2.xpose.msra.mxu0 0.0
    %1219 = vmatprep.subr.mxu0 0.0
    %1220 = vmatpush2.xpose.msra.mxu0 0.0
    %1221 = vmatprep.subr.mxu0 0.0
    %1222 = vmatpush2.xpose.msra.mxu0 0.0
    %1223 = vmatprep.subr.mxu0 0.0
    %1224 = vmatpush2.xpose.msra.mxu0 0.0
    %1225 = vmatprep.subr.mxu0 0.0
    %1226 = vmatpush2.xpose.msra.mxu0 0.0
    %1227 = vmatprep.subr.mxu0 0.0
    %1228 = vmatpush2.xpose.msra.mxu0 0.0
    %1229 = vmatprep.subr.mxu0 0.0
    %1230 = vmatpush2.xpose.msra.mxu0 0.0
    %1231 = vmatprep.subr.mxu0 0.0
    %1232 = vmatpush2.xpose.msra.mxu0 0.0
    %1233 = vmatprep.subr.mxu0 0.0
    %1234 = vmatpush2.xpose.msra.mxu0 0.0
    %1235 = vmatprep.subr.mxu0 0.0
    %1236 = vmatpush2.xpose.msra.mxu0 0.0
    %1237 = vmatprep.subr.mxu0 0.0
    %1238 = vmatpush2.xpose.msra.mxu0 0.0
    %1239 = vmatprep.subr.mxu0 0.0
    %1240 = vmatpush2.xpose.msra.mxu0 0.0
    %1241 = vmatprep.subr.mxu0 0.0
    %1242 = vmatpush2.xpose.msra.mxu0 0.0
    %1243 = vmatprep.subr.mxu0 0.0
    %1244 = vmatpush2.xpose.msra.mxu0 0.0
    %1245 = vmatprep.mubr.f32.mxu0 0.0
    %1246 = vmatmul.mubr.f32.gmra.mxu0 %v1177
    %v1247 = vpop.f32.mrf.mxu0
    %v1248 = vadd.f32 %v239, %v1247
    %v1249 = vpop.f32.mrf.mxu0
    %1250 = vdwg.mxu0
    %v1251 = vsel %vm245, %v1170, -inf
    %1252 = vmax.xlane.f32.xlu0 %v1251
    %v1253 = vpop.xlane.xlu0 %1252
    %v1254 = vsel %vm245, %v1248, -inf
    %1255 = vmax.xlane.f32.xlu0 %v1254
    %v1256 = vpop.xlane.xlu0 %1255
    %v1257 = vsub.f32 %v1170, %v1253
    %v1258 = vsub.f32 %v1248, %v1256
    %v1259 = vmul.f32 %v1257, 1.442695
    %v1260 = vpow.pop %v1259
    %v1261 = vmul.f32 %v1258, 1.442695
    %v1262 = vpow.pop %v1261
    %v1263 = vsel %vm245, %v1260, 0.0
    %1264 = vadd.xlane.f32.xlu0 %v1263
    %v1265 = vpop.xlane.xlu0 %1264
    %v1266 = vsel %vm245, %v1262, 0.0
    %1267 = vadd.xlane.f32.xlu0 %v1266
    %v1268 = vpop.xlane.xlu0 %1267
    %v1269 = vrcp.pop %v1265
    %v1270 = vrcp.pop %v1268
    %v1271 = vmul.f32 %v1260, %v1269
    %v1272 = vmul.f32 %v1262, %v1270
    %1273 = vrot.lane.b32.xlu0 %v212, 48
    %v1274 = vpop.permute.xlu0 %1273
    %v1277 = vsel %vm245, %v1271, 0
    %1279 = vmatprep.subr.mxu0 0.0
    %1280 = vmatpush1.msra.mxu0 0.0
    %1281 = vmatprep.subr.mxu0 0.0
    %1282 = vmatpush1.msra.mxu0 0.0
    %1283 = vmatprep.subr.mxu0 0.0
    %1284 = vmatpush1.msra.mxu0 0.0
    %1285 = vmatprep.subr.mxu0 0.0
    %1286 = vmatpush1.msra.mxu0 0.0
    %1287 = vmatprep.subr.mxu0 0.0
    %1288 = vmatpush1.msra.mxu0 0.0
    %1289 = vmatprep.subr.mxu0 0.0
    %1290 = vmatpush1.msra.mxu0 0.0
    %1291 = vmatprep.subr.mxu0 0.0
    %1292 = vmatpush1.msra.mxu0 0.0
    %1293 = vmatprep.subr.mxu0 0.0
    %1294 = vmatpush1.msra.mxu0 0.0
    %1295 = vmatprep.subr.mxu0 0.0
    %1296 = vmatpush1.msra.mxu0 0.0
    %1297 = vmatprep.subr.mxu0 0.0
    %1298 = vmatpush1.msra.mxu0 0.0
    %1299 = vmatprep.subr.mxu0 0.0
    %1300 = vmatpush1.msra.mxu0 0.0
    %1301 = vmatprep.subr.mxu0 0.0
    %1302 = vmatpush1.msra.mxu0 0.0
    %1303 = vmatprep.subr.mxu0 0.0
    %1304 = vmatpush1.msra.mxu0 0.0
    %1305 = vmatprep.subr.mxu0 0.0
    %1306 = vmatpush1.msra.mxu0 0.0
    %1307 = vmatprep.subr.mxu0 0.0
    %1308 = vmatpush1.msra.mxu0 0.0
    %1309 = vmatprep.subr.mxu0 0.0
    %1310 = vmatpush1.msra.mxu0 %v1274
    %1311 = vmatprep.subr.mxu0 0.0
    %1312 = vmatpush2.msra.mxu0 0.0
    %1313 = vmatprep.subr.mxu0 0.0
    %1314 = vmatpush2.msra.mxu0 0.0
    %1315 = vmatprep.subr.mxu0 0.0
    %1316 = vmatpush2.msra.mxu0 0.0
    %1317 = vmatprep.subr.mxu0 0.0
    %1318 = vmatpush2.msra.mxu0 0.0
    %1319 = vmatprep.subr.mxu0 0.0
    %1320 = vmatpush2.msra.mxu0 0.0
    %1321 = vmatprep.subr.mxu0 0.0
    %1322 = vmatpush2.msra.mxu0 0.0
    %1323 = vmatprep.subr.mxu0 0.0
    %1324 = vmatpush2.msra.mxu0 0.0
    %1325 = vmatprep.subr.mxu0 0.0
    %1326 = vmatpush2.msra.mxu0 0.0
    %1327 = vmatprep.subr.mxu0 0.0
    %1328 = vmatpush2.msra.mxu0 0.0
    %1329 = vmatprep.subr.mxu0 0.0
    %1330 = vmatpush2.msra.mxu0 0.0
    %1331 = vmatprep.subr.mxu0 0.0
    %1332 = vmatpush2.msra.mxu0 0.0
    %1333 = vmatprep.subr.mxu0 0.0
    %1334 = vmatpush2.msra.mxu0 0.0
    %1335 = vmatprep.subr.mxu0 0.0
    %1336 = vmatpush2.msra.mxu0 0.0
    %1337 = vmatprep.subr.mxu0 0.0
    %1338 = vmatpush2.msra.mxu0 0.0
    %1339 = vmatprep.subr.mxu0 0.0
    %1340 = vmatpush2.msra.mxu0 0.0
    %1341 = vmatprep.subr.mxu0 0.0
    %1342 = vmatpush2.msra.mxu0 0.0
    %1343 = vmatprep.mubr.f32.mxu0 0.0
    %1344 = vmatmul.mubr.f32.gmra.mxu0 %v1277
    %v1345 = vpop.f32.mrf.mxu0
    %v1346 = vadd.f32 0.0, %v1345
    %v1347 = vpop.f32.mrf.mxu0
    %1348 = vdwg.mxu0
    %1349 = vrot.lane.b32.xlu0 %v217, 48
    %v1350 = vpop.permute.xlu0 %1349
    %v1353 = vsel %vm245, %v1272, 0
    %1355 = vmatprep.subr.mxu0 0.0
    %1356 = vmatpush1.msra.mxu0 0.0
    %1357 = vmatprep.subr.mxu0 0.0
    %1358 = vmatpush1.msra.mxu0 0.0
    %1359 = vmatprep.subr.mxu0 0.0
    %1360 = vmatpush1.msra.mxu0 0.0
    %1361 = vmatprep.subr.mxu0 0.0
    %1362 = vmatpush1.msra.mxu0 0.0
    %1363 = vmatprep.subr.mxu0 0.0
    %1364 = vmatpush1.msra.mxu0 0.0
    %1365 = vmatprep.subr.mxu0 0.0
    %1366 = vmatpush1.msra.mxu0 0.0
    %1367 = vmatprep.subr.mxu0 0.0
    %1368 = vmatpush1.msra.mxu0 0.0
    %1369 = vmatprep.subr.mxu0 0.0
    %1370 = vmatpush1.msra.mxu0 0.0
    %1371 = vmatprep.subr.mxu0 0.0
    %1372 = vmatpush1.msra.mxu0 0.0
    %1373 = vmatprep.subr.mxu0 0.0
    %1374 = vmatpush1.msra.mxu0 0.0
    %1375 = vmatprep.subr.mxu0 0.0
    %1376 = vmatpush1.msra.mxu0 0.0
    %1377 = vmatprep.subr.mxu0 0.0
    %1378 = vmatpush1.msra.mxu0 0.0
    %1379 = vmatprep.subr.mxu0 0.0
    %1380 = vmatpush1.msra.mxu0 0.0
    %1381 = vmatprep.subr.mxu0 0.0
    %1382 = vmatpush1.msra.mxu0 0.0
    %1383 = vmatprep.subr.mxu0 0.0
    %1384 = vmatpush1.msra.mxu0 0.0
    %1385 = vmatprep.subr.mxu0 0.0
    %1386 = vmatpush1.msra.mxu0 %v1350
    %1387 = vmatprep.subr.mxu0 0.0
    %1388 = vmatpush2.msra.mxu0 0.0
    %1389 = vmatprep.subr.mxu0 0.0
    %1390 = vmatpush2.msra.mxu0 0.0
    %1391 = vmatprep.subr.mxu0 0.0
    %1392 = vmatpush2.msra.mxu0 0.0
    %1393 = vmatprep.subr.mxu0 0.0
    %1394 = vmatpush2.msra.mxu0 0.0
    %1395 = vmatprep.subr.mxu0 0.0
    %1396 = vmatpush2.msra.mxu0 0.0
    %1397 = vmatprep.subr.mxu0 0.0
    %1398 = vmatpush2.msra.mxu0 0.0
    %1399 = vmatprep.subr.mxu0 0.0
    %1400 = vmatpush2.msra.mxu0 0.0
    %1401 = vmatprep.subr.mxu0 0.0
    %1402 = vmatpush2.msra.mxu0 0.0
    %1403 = vmatprep.subr.mxu0 0.0
    %1404 = vmatpush2.msra.mxu0 0.0
    %1405 = vmatprep.subr.mxu0 0.0
    %1406 = vmatpush2.msra.mxu0 0.0
    %1407 = vmatprep.subr.mxu0 0.0
    %1408 = vmatpush2.msra.mxu0 0.0
    %1409 = vmatprep.subr.mxu0 0.0
    %1410 = vmatpush2.msra.mxu0 0.0
    %1411 = vmatprep.subr.mxu0 0.0
    %1412 = vmatpush2.msra.mxu0 0.0
    %1413 = vmatprep.subr.mxu0 0.0
    %1414 = vmatpush2.msra.mxu0 0.0
    %1415 = vmatprep.subr.mxu0 0.0
    %1416 = vmatpush2.msra.mxu0 0.0
    %1417 = vmatprep.subr.mxu0 0.0
    %1418 = vmatpush2.msra.mxu0 0.0
    %1419 = vmatprep.mubr.f32.mxu0 0.0
    %1420 = vmatmul.mubr.f32.gmra.mxu0 %v1353
    %v1421 = vpop.f32.mrf.mxu0
    %v1422 = vadd.f32 0.0, %v1421
    %v1423 = vpop.f32.mrf.mxu0
    %1424 = vdwg.mxu0
    %1425 = vrot.lane.b32.xlu0 %v220, 112
    %v1426 = vpop.permute.xlu0 %1425
    %1427 = vrot.lane.b32.xlu0 %v221, 112
    %v1428 = vpop.permute.xlu0 %1427
    %1429 = vrot.lane.b32.xlu0 %v222, 112
    %v1430 = vpop.permute.xlu0 %1429
    %1431 = vrot.lane.b32.xlu0 %v223, 112
    %v1432 = vpop.permute.xlu0 %1431
    %v1434 = vsel %vm245, %v1346, 0
    %v1437 = vsel %vm245, %v1422, 0
    %v1439 = vsel %vm245, %v1426, 0
    %v1441 = vsel %vm245, %v1428, 0
    %v1443 = vsel %vm245, %v1430, 0
    %v1445 = vsel %vm245, %v1432, 0
    %1447 = vmatprep.subr.mxu0 0.0
    %1448 = vmatpush1.xpose.msra.mxu0 0.0
    %1449 = vmatprep.subr.mxu0 0.0
    %1450 = vmatpush1.xpose.msra.mxu0 0.0
    %1451 = vmatprep.subr.mxu0 0.0
    %1452 = vmatpush1.xpose.msra.mxu0 0.0
    %1453 = vmatprep.subr.mxu0 0.0
    %1454 = vmatpush1.xpose.msra.mxu0 0.0
    %1455 = vmatprep.subr.mxu0 0.0
    %1456 = vmatpush1.xpose.msra.mxu0 0.0
    %1457 = vmatprep.subr.mxu0 0.0
    %1458 = vmatpush1.xpose.msra.mxu0 0.0
    %1459 = vmatprep.subr.mxu0 0.0
    %1460 = vmatpush1.xpose.msra.mxu0 0.0
    %1461 = vmatprep.subr.mxu0 0.0
    %1462 = vmatpush1.xpose.msra.mxu0 0.0
    %1463 = vmatprep.subr.mxu0 0.0
    %1464 = vmatpush1.xpose.msra.mxu0 0.0
    %1465 = vmatprep.subr.mxu0 0.0
    %1466 = vmatpush1.xpose.msra.mxu0 0.0
    %1467 = vmatprep.subr.mxu0 0.0
    %1468 = vmatpush1.xpose.msra.mxu0 0.0
    %1469 = vmatprep.subr.mxu0 0.0
    %1470 = vmatpush1.xpose.msra.mxu0 0.0
    %1471 = vmatprep.subr.mxu0 0.0
    %1472 = vmatpush1.xpose.msra.mxu0 %v1445
    %1473 = vmatprep.subr.mxu0 0.0
    %1474 = vmatpush1.xpose.msra.mxu0 %v1443
    %1475 = vmatprep.subr.mxu0 0.0
    %1476 = vmatpush1.xpose.msra.mxu0 %v1441
    %1477 = vmatprep.subr.mxu0 0.0
    %1478 = vmatpush1.xpose.msra.mxu0 %v1439
    %1479 = vmatprep.subr.mxu0 0.0
    %1480 = vmatpush2.xpose.msra.mxu0 0.0
    %1481 = vmatprep.subr.mxu0 0.0
    %1482 = vmatpush2.xpose.msra.mxu0 0.0
    %1483 = vmatprep.subr.mxu0 0.0
    %1484 = vmatpush2.xpose.msra.mxu0 0.0
    %1485 = vmatprep.subr.mxu0 0.0
    %1486 = vmatpush2.xpose.msra.mxu0 0.0
    %1487 = vmatprep.subr.mxu0 0.0
    %1488 = vmatpush2.xpose.msra.mxu0 0.0
    %1489 = vmatprep.subr.mxu0 0.0
    %1490 = vmatpush2.xpose.msra.mxu0 0.0
    %1491 = vmatprep.subr.mxu0 0.0
    %1492 = vmatpush2.xpose.msra.mxu0 0.0
    %1493 = vmatprep.subr.mxu0 0.0
    %1494 = vmatpush2.xpose.msra.mxu0 0.0
    %1495 = vmatprep.subr.mxu0 0.0
    %1496 = vmatpush2.xpose.msra.mxu0 0.0
    %1497 = vmatprep.subr.mxu0 0.0
    %1498 = vmatpush2.xpose.msra.mxu0 0.0
    %1499 = vmatprep.subr.mxu0 0.0
    %1500 = vmatpush2.xpose.msra.mxu0 0.0
    %1501 = vmatprep.subr.mxu0 0.0
    %1502 = vmatpush2.xpose.msra.mxu0 0.0
    %1503 = vmatprep.subr.mxu0 0.0
    %1504 = vmatpush2.xpose.msra.mxu0 0.0
    %1505 = vmatprep.subr.mxu0 0.0
    %1506 = vmatpush2.xpose.msra.mxu0 0.0
    %1507 = vmatprep.subr.mxu0 0.0
    %1508 = vmatpush2.xpose.msra.mxu0 0.0
    %1509 = vmatprep.subr.mxu0 0.0
    %1510 = vmatpush2.xpose.msra.mxu0 0.0
    %1511 = vmatprep.mubr.f32.mxu0 0.0
    %1512 = vmatmul.mubr.f32.gmra.mxu0 %v1434
    %v1513 = vpop.f32.mrf.mxu0
    %v1514 = vadd.f32 0.0, %v1513
    %v1515 = vpop.f32.mrf.mxu0
    %1516 = vmatprep.mubr.f32.mxu0 0.0
    %1517 = vmatmul.mubr.f32.gmra.mxu0 %v1437
    %v1518 = vpop.f32.mrf.mxu0
    %v1519 = vadd.f32 0.0, %v1518
    %v1520 = vpop.f32.mrf.mxu0
    %1521 = vdwg.mxu0
    %v1522 = vadd.f32 %v1093, %v1514
    %v1523 = vadd.f32 %v1094, %v1519
    %1524 = vrot.lane.b32.xlu0 %v212, 104
    %v1525 = vpop.permute.xlu0 %1524
    %1526 = vrot.lane.b32.xlu0 %v212, 72
    %v1527 = vpop.permute.xlu0 %1526
    %v1528 = vsel %vm245, %v1525, 0
    %v1530 = vsel %vm245, %v1527, 0
    %1532 = vmatprep.subr.mxu0 0.0
    %1533 = vmatpush1.xpose.msra.mxu0 0.0
    %1534 = vmatprep.subr.mxu0 0.0
    %1535 = vmatpush1.xpose.msra.mxu0 0.0
    %1536 = vmatprep.subr.mxu0 0.0
    %1537 = vmatpush1.xpose.msra.mxu0 0.0
    %1538 = vmatprep.subr.mxu0 0.0
    %1539 = vmatpush1.xpose.msra.mxu0 0.0
    %1540 = vmatprep.subr.mxu0 0.0
    %1541 = vmatpush1.xpose.msra.mxu0 0.0
    %1542 = vmatprep.subr.mxu0 0.0
    %1543 = vmatpush1.xpose.msra.mxu0 0.0
    %1544 = vmatprep.subr.mxu0 0.0
    %1545 = vmatpush1.xpose.msra.mxu0 0.0
    %1546 = vmatprep.subr.mxu0 0.0
    %1547 = vmatpush1.xpose.msra.mxu0 0.0
    %1548 = vmatprep.subr.mxu0 0.0
    %1549 = vmatpush1.xpose.msra.mxu0 0.0
    %1550 = vmatprep.subr.mxu0 0.0
    %1551 = vmatpush1.xpose.msra.mxu0 0.0
    %1552 = vmatprep.subr.mxu0 0.0
    %1553 = vmatpush1.xpose.msra.mxu0 0.0
    %1554 = vmatprep.subr.mxu0 0.0
    %1555 = vmatpush1.xpose.msra.mxu0 0.0
    %1556 = vmatprep.subr.mxu0 0.0
    %1557 = vmatpush1.xpose.msra.mxu0 0.0
    %1558 = vmatprep.subr.mxu0 0.0
    %1559 = vmatpush1.xpose.msra.mxu0 0.0
    %1560 = vmatprep.subr.mxu0 0.0
    %1561 = vmatpush1.xpose.msra.mxu0 0.0
    %1562 = vmatprep.subr.mxu0 0.0
    %1563 = vmatpush1.xpose.msra.mxu0 %v1530
    %1564 = vmatprep.subr.mxu0 0.0
    %1565 = vmatpush2.xpose.msra.mxu0 0.0
    %1566 = vmatprep.subr.mxu0 0.0
    %1567 = vmatpush2.xpose.msra.mxu0 0.0
    %1568 = vmatprep.subr.mxu0 0.0
    %1569 = vmatpush2.xpose.msra.mxu0 0.0
    %1570 = vmatprep.subr.mxu0 0.0
    %1571 = vmatpush2.xpose.msra.mxu0 0.0
    %1572 = vmatprep.subr.mxu0 0.0
    %1573 = vmatpush2.xpose.msra.mxu0 0.0
    %1574 = vmatprep.subr.mxu0 0.0
    %1575 = vmatpush2.xpose.msra.mxu0 0.0
    %1576 = vmatprep.subr.mxu0 0.0
    %1577 = vmatpush2.xpose.msra.mxu0 0.0
    %1578 = vmatprep.subr.mxu0 0.0
    %1579 = vmatpush2.xpose.msra.mxu0 0.0
    %1580 = vmatprep.subr.mxu0 0.0
    %1581 = vmatpush2.xpose.msra.mxu0 0.0
    %1582 = vmatprep.subr.mxu0 0.0
    %1583 = vmatpush2.xpose.msra.mxu0 0.0
    %1584 = vmatprep.subr.mxu0 0.0
    %1585 = vmatpush2.xpose.msra.mxu0 0.0
    %1586 = vmatprep.subr.mxu0 0.0
    %1587 = vmatpush2.xpose.msra.mxu0 0.0
    %1588 = vmatprep.subr.mxu0 0.0
    %1589 = vmatpush2.xpose.msra.mxu0 0.0
    %1590 = vmatprep.subr.mxu0 0.0
    %1591 = vmatpush2.xpose.msra.mxu0 0.0
    %1592 = vmatprep.subr.mxu0 0.0
    %1593 = vmatpush2.xpose.msra.mxu0 0.0
    %1594 = vmatprep.subr.mxu0 0.0
    %1595 = vmatpush2.xpose.msra.mxu0 0.0
    %1596 = vmatprep.mubr.f32.mxu0 0.0
    %1597 = vmatmul.mubr.f32.gmra.mxu0 %v1528
    %v1598 = vpop.f32.mrf.mxu0
    %v1599 = vadd.f32 %v235, %v1598
    %v1600 = vpop.f32.mrf.mxu0
    %1601 = vdwg.mxu0
    %1602 = vrot.lane.b32.xlu0 %v217, 104
    %v1603 = vpop.permute.xlu0 %1602
    %1604 = vrot.lane.b32.xlu0 %v217, 72
    %v1605 = vpop.permute.xlu0 %1604
    %v1606 = vsel %vm245, %v1603, 0
    %v1608 = vsel %vm245, %v1605, 0
    %1610 = vmatprep.subr.mxu0 0.0
    %1611 = vmatpush1.xpose.msra.mxu0 0.0
    %1612 = vmatprep.subr.mxu0 0.0
    %1613 = vmatpush1.xpose.msra.mxu0 0.0
    %1614 = vmatprep.subr.mxu0 0.0
    %1615 = vmatpush1.xpose.msra.mxu0 0.0
    %1616 = vmatprep.subr.mxu0 0.0
    %1617 = vmatpush1.xpose.msra.mxu0 0.0
    %1618 = vmatprep.subr.mxu0 0.0
    %1619 = vmatpush1.xpose.msra.mxu0 0.0
    %1620 = vmatprep.subr.mxu0 0.0
    %1621 = vmatpush1.xpose.msra.mxu0 0.0
    %1622 = vmatprep.subr.mxu0 0.0
    %1623 = vmatpush1.xpose.msra.mxu0 0.0
    %1624 = vmatprep.subr.mxu0 0.0
    %1625 = vmatpush1.xpose.msra.mxu0 0.0
    %1626 = vmatprep.subr.mxu0 0.0
    %1627 = vmatpush1.xpose.msra.mxu0 0.0
    %1628 = vmatprep.subr.mxu0 0.0
    %1629 = vmatpush1.xpose.msra.mxu0 0.0
    %1630 = vmatprep.subr.mxu0 0.0
    %1631 = vmatpush1.xpose.msra.mxu0 0.0
    %1632 = vmatprep.subr.mxu0 0.0
    %1633 = vmatpush1.xpose.msra.mxu0 0.0
    %1634 = vmatprep.subr.mxu0 0.0
    %1635 = vmatpush1.xpose.msra.mxu0 0.0
    %1636 = vmatprep.subr.mxu0 0.0
    %1637 = vmatpush1.xpose.msra.mxu0 0.0
    %1638 = vmatprep.subr.mxu0 0.0
    %1639 = vmatpush1.xpose.msra.mxu0 0.0
    %1640 = vmatprep.subr.mxu0 0.0
    %1641 = vmatpush1.xpose.msra.mxu0 %v1608
    %1642 = vmatprep.subr.mxu0 0.0
    %1643 = vmatpush2.xpose.msra.mxu0 0.0
    %1644 = vmatprep.subr.mxu0 0.0
    %1645 = vmatpush2.xpose.msra.mxu0 0.0
    %1646 = vmatprep.subr.mxu0 0.0
    %1647 = vmatpush2.xpose.msra.mxu0 0.0
    %1648 = vmatprep.subr.mxu0 0.0
    %1649 = vmatpush2.xpose.msra.mxu0 0.0
    %1650 = vmatprep.subr.mxu0 0.0
    %1651 = vmatpush2.xpose.msra.mxu0 0.0
    %1652 = vmatprep.subr.mxu0 0.0
    %1653 = vmatpush2.xpose.msra.mxu0 0.0
    %1654 = vmatprep.subr.mxu0 0.0
    %1655 = vmatpush2.xpose.msra.mxu0 0.0
    %1656 = vmatprep.subr.mxu0 0.0
    %1657 = vmatpush2.xpose.msra.mxu0 0.0
    %1658 = vmatprep.subr.mxu0 0.0
    %1659 = vmatpush2.xpose.msra.mxu0 0.0
    %1660 = vmatprep.subr.mxu0 0.0
    %1661 = vmatpush2.xpose.msra.mxu0 0.0
    %1662 = vmatprep.subr.mxu0 0.0
    %1663 = vmatpush2.xpose.msra.mxu0 0.0
    %1664 = vmatprep.subr.mxu0 0.0
    %1665 = vmatpush2.xpose.msra.mxu0 0.0
    %1666 = vmatprep.subr.mxu0 0.0
    %1667 = vmatpush2.xpose.msra.mxu0 0.0
    %1668 = vmatprep.subr.mxu0 0.0
    %1669 = vmatpush2.xpose.msra.mxu0 0.0
    %1670 = vmatprep.subr.mxu0 0.0
    %1671 = vmatpush2.xpose.msra.mxu0 0.0
    %1672 = vmatprep.subr.mxu0 0.0
    %1673 = vmatpush2.xpose.msra.mxu0 0.0
    %1674 = vmatprep.mubr.f32.mxu0 0.0
    %1675 = vmatmul.mubr.f32.gmra.mxu0 %v1606
    %v1676 = vpop.f32.mrf.mxu0
    %v1677 = vadd.f32 %v239, %v1676
    %v1678 = vpop.f32.mrf.mxu0
    %1679 = vdwg.mxu0
    %v1680 = vsel %vm245, %v1599, -inf
    %1681 = vmax.xlane.f32.xlu0 %v1680
    %v1682 = vpop.xlane.xlu0 %1681
    %v1683 = vsel %vm245, %v1677, -inf
    %1684 = vmax.xlane.f32.xlu0 %v1683
    %v1685 = vpop.xlane.xlu0 %1684
    %v1686 = vsub.f32 %v1599, %v1682
    %v1687 = vsub.f32 %v1677, %v1685
    %v1688 = vmul.f32 %v1686, 1.442695
    %v1689 = vpow.pop %v1688
    %v1690 = vmul.f32 %v1687, 1.442695
    %v1691 = vpow.pop %v1690
    %v1692 = vsel %vm245, %v1689, 0.0
    %1693 = vadd.xlane.f32.xlu0 %v1692
    %v1694 = vpop.xlane.xlu0 %1693
    %v1695 = vsel %vm245, %v1691, 0.0
    %1696 = vadd.xlane.f32.xlu0 %v1695
    %v1697 = vpop.xlane.xlu0 %1696
    %v1698 = vrcp.pop %v1694
    %v1699 = vrcp.pop %v1697
    %v1700 = vmul.f32 %v1689, %v1698
    %v1701 = vmul.f32 %v1691, %v1699
    %1702 = vrot.lane.b32.xlu0 %v212, 40
    %v1703 = vpop.permute.xlu0 %1702
    %v1706 = vsel %vm245, %v1700, 0
    %1708 = vmatprep.subr.mxu0 0.0
    %1709 = vmatpush1.msra.mxu0 0.0
    %1710 = vmatprep.subr.mxu0 0.0
    %1711 = vmatpush1.msra.mxu0 0.0
    %1712 = vmatprep.subr.mxu0 0.0
    %1713 = vmatpush1.msra.mxu0 0.0
    %1714 = vmatprep.subr.mxu0 0.0
    %1715 = vmatpush1.msra.mxu0 0.0
    %1716 = vmatprep.subr.mxu0 0.0
    %1717 = vmatpush1.msra.mxu0 0.0
    %1718 = vmatprep.subr.mxu0 0.0
    %1719 = vmatpush1.msra.mxu0 0.0
    %1720 = vmatprep.subr.mxu0 0.0
    %1721 = vmatpush1.msra.mxu0 0.0
    %1722 = vmatprep.subr.mxu0 0.0
    %1723 = vmatpush1.msra.mxu0 0.0
    %1724 = vmatprep.subr.mxu0 0.0
    %1725 = vmatpush1.msra.mxu0 0.0
    %1726 = vmatprep.subr.mxu0 0.0
    %1727 = vmatpush1.msra.mxu0 0.0
    %1728 = vmatprep.subr.mxu0 0.0
    %1729 = vmatpush1.msra.mxu0 0.0
    %1730 = vmatprep.subr.mxu0 0.0
    %1731 = vmatpush1.msra.mxu0 0.0
    %1732 = vmatprep.subr.mxu0 0.0
    %1733 = vmatpush1.msra.mxu0 0.0
    %1734 = vmatprep.subr.mxu0 0.0
    %1735 = vmatpush1.msra.mxu0 0.0
    %1736 = vmatprep.subr.mxu0 0.0
    %1737 = vmatpush1.msra.mxu0 0.0
    %1738 = vmatprep.subr.mxu0 0.0
    %1739 = vmatpush1.msra.mxu0 %v1703
    %1740 = vmatprep.subr.mxu0 0.0
    %1741 = vmatpush2.msra.mxu0 0.0
    %1742 = vmatprep.subr.mxu0 0.0
    %1743 = vmatpush2.msra.mxu0 0.0
    %1744 = vmatprep.subr.mxu0 0.0
    %1745 = vmatpush2.msra.mxu0 0.0
    %1746 = vmatprep.subr.mxu0 0.0
    %1747 = vmatpush2.msra.mxu0 0.0
    %1748 = vmatprep.subr.mxu0 0.0
    %1749 = vmatpush2.msra.mxu0 0.0
    %1750 = vmatprep.subr.mxu0 0.0
    %1751 = vmatpush2.msra.mxu0 0.0
    %1752 = vmatprep.subr.mxu0 0.0
    %1753 = vmatpush2.msra.mxu0 0.0
    %1754 = vmatprep.subr.mxu0 0.0
    %1755 = vmatpush2.msra.mxu0 0.0
    %1756 = vmatprep.subr.mxu0 0.0
    %1757 = vmatpush2.msra.mxu0 0.0
    %1758 = vmatprep.subr.mxu0 0.0
    %1759 = vmatpush2.msra.mxu0 0.0
    %1760 = vmatprep.subr.mxu0 0.0
    %1761 = vmatpush2.msra.mxu0 0.0
    %1762 = vmatprep.subr.mxu0 0.0
    %1763 = vmatpush2.msra.mxu0 0.0
    %1764 = vmatprep.subr.mxu0 0.0
    %1765 = vmatpush2.msra.mxu0 0.0
    %1766 = vmatprep.subr.mxu0 0.0
    %1767 = vmatpush2.msra.mxu0 0.0
    %1768 = vmatprep.subr.mxu0 0.0
    %1769 = vmatpush2.msra.mxu0 0.0
    %1770 = vmatprep.subr.mxu0 0.0
    %1771 = vmatpush2.msra.mxu0 0.0
    %1772 = vmatprep.mubr.f32.mxu0 0.0
    %1773 = vmatmul.mubr.f32.gmra.mxu0 %v1706
    %v1774 = vpop.f32.mrf.mxu0
    %v1775 = vadd.f32 0.0, %v1774
    %v1776 = vpop.f32.mrf.mxu0
    %1777 = vdwg.mxu0
    %1778 = vrot.lane.b32.xlu0 %v217, 40
    %v1779 = vpop.permute.xlu0 %1778
    %v1782 = vsel %vm245, %v1701, 0
    %1784 = vmatprep.subr.mxu0 0.0
    %1785 = vmatpush1.msra.mxu0 0.0
    %1786 = vmatprep.subr.mxu0 0.0
    %1787 = vmatpush1.msra.mxu0 0.0
    %1788 = vmatprep.subr.mxu0 0.0
    %1789 = vmatpush1.msra.mxu0 0.0
    %1790 = vmatprep.subr.mxu0 0.0
    %1791 = vmatpush1.msra.mxu0 0.0
    %1792 = vmatprep.subr.mxu0 0.0
    %1793 = vmatpush1.msra.mxu0 0.0
    %1794 = vmatprep.subr.mxu0 0.0
    %1795 = vmatpush1.msra.mxu0 0.0
    %1796 = vmatprep.subr.mxu0 0.0
    %1797 = vmatpush1.msra.mxu0 0.0
    %1798 = vmatprep.subr.mxu0 0.0
    %1799 = vmatpush1.msra.mxu0 0.0
    %1800 = vmatprep.subr.mxu0 0.0
    %1801 = vmatpush1.msra.mxu0 0.0
    %1802 = vmatprep.subr.mxu0 0.0
    %1803 = vmatpush1.msra.mxu0 0.0
    %1804 = vmatprep.subr.mxu0 0.0
    %1805 = vmatpush1.msra.mxu0 0.0
    %1806 = vmatprep.subr.mxu0 0.0
    %1807 = vmatpush1.msra.mxu0 0.0
    %1808 = vmatprep.subr.mxu0 0.0
    %1809 = vmatpush1.msra.mxu0 0.0
    %1810 = vmatprep.subr.mxu0 0.0
    %1811 = vmatpush1.msra.mxu0 0.0
    %1812 = vmatprep.subr.mxu0 0.0
    %1813 = vmatpush1.msra.mxu0 0.0
    %1814 = vmatprep.subr.mxu0 0.0
    %1815 = vmatpush1.msra.mxu0 %v1779
    %1816 = vmatprep.subr.mxu0 0.0
    %1817 = vmatpush2.msra.mxu0 0.0
    %1818 = vmatprep.subr.mxu0 0.0
    %1819 = vmatpush2.msra.mxu0 0.0
    %1820 = vmatprep.subr.mxu0 0.0
    %1821 = vmatpush2.msra.mxu0 0.0
    %1822 = vmatprep.subr.mxu0 0.0
    %1823 = vmatpush2.msra.mxu0 0.0
    %1824 = vmatprep.subr.mxu0 0.0
    %1825 = vmatpush2.msra.mxu0 0.0
    %1826 = vmatprep.subr.mxu0 0.0
    %1827 = vmatpush2.msra.mxu0 0.0
    %1828 = vmatprep.subr.mxu0 0.0
    %1829 = vmatpush2.msra.mxu0 0.0
    %1830 = vmatprep.subr.mxu0 0.0
    %1831 = vmatpush2.msra.mxu0 0.0
    %1832 = vmatprep.subr.mxu0 0.0
    %1833 = vmatpush2.msra.mxu0 0.0
    %1834 = vmatprep.subr.mxu0 0.0
    %1835 = vmatpush2.msra.mxu0 0.0
    %1836 = vmatprep.subr.mxu0 0.0
    %1837 = vmatpush2.msra.mxu0 0.0
    %1838 = vmatprep.subr.mxu0 0.0
    %1839 = vmatpush2.msra.mxu0 0.0
    %1840 = vmatprep.subr.mxu0 0.0
    %1841 = vmatpush2.msra.mxu0 0.0
    %1842 = vmatprep.subr.mxu0 0.0
    %1843 = vmatpush2.msra.mxu0 0.0
    %1844 = vmatprep.subr.mxu0 0.0
    %1845 = vmatpush2.msra.mxu0 0.0
    %1846 = vmatprep.subr.mxu0 0.0
    %1847 = vmatpush2.msra.mxu0 0.0
    %1848 = vmatprep.mubr.f32.mxu0 0.0
    %1849 = vmatmul.mubr.f32.gmra.mxu0 %v1782
    %v1850 = vpop.f32.mrf.mxu0
    %v1851 = vadd.f32 0.0, %v1850
    %v1852 = vpop.f32.mrf.mxu0
    %1853 = vdwg.mxu0
    %1854 = vrot.lane.b32.xlu0 %v220, 104
    %v1855 = vpop.permute.xlu0 %1854
    %1856 = vrot.lane.b32.xlu0 %v221, 104
    %v1857 = vpop.permute.xlu0 %1856
    %1858 = vrot.lane.b32.xlu0 %v222, 104
    %v1859 = vpop.permute.xlu0 %1858
    %1860 = vrot.lane.b32.xlu0 %v223, 104
    %v1861 = vpop.permute.xlu0 %1860
    %v1863 = vsel %vm245, %v1775, 0
    %v1866 = vsel %vm245, %v1851, 0
    %v1868 = vsel %vm245, %v1855, 0
    %v1870 = vsel %vm245, %v1857, 0
    %v1872 = vsel %vm245, %v1859, 0
    %v1874 = vsel %vm245, %v1861, 0
    %1876 = vmatprep.subr.mxu0 0.0
    %1877 = vmatpush1.xpose.msra.mxu0 0.0
    %1878 = vmatprep.subr.mxu0 0.0
    %1879 = vmatpush1.xpose.msra.mxu0 0.0
    %1880 = vmatprep.subr.mxu0 0.0
    %1881 = vmatpush1.xpose.msra.mxu0 0.0
    %1882 = vmatprep.subr.mxu0 0.0
    %1883 = vmatpush1.xpose.msra.mxu0 0.0
    %1884 = vmatprep.subr.mxu0 0.0
    %1885 = vmatpush1.xpose.msra.mxu0 0.0
    %1886 = vmatprep.subr.mxu0 0.0
    %1887 = vmatpush1.xpose.msra.mxu0 0.0
    %1888 = vmatprep.subr.mxu0 0.0
    %1889 = vmatpush1.xpose.msra.mxu0 0.0
    %1890 = vmatprep.subr.mxu0 0.0
    %1891 = vmatpush1.xpose.msra.mxu0 0.0
    %1892 = vmatprep.subr.mxu0 0.0
    %1893 = vmatpush1.xpose.msra.mxu0 0.0
    %1894 = vmatprep.subr.mxu0 0.0
    %1895 = vmatpush1.xpose.msra.mxu0 0.0
    %1896 = vmatprep.subr.mxu0 0.0
    %1897 = vmatpush1.xpose.msra.mxu0 0.0
    %1898 = vmatprep.subr.mxu0 0.0
    %1899 = vmatpush1.xpose.msra.mxu0 0.0
    %1900 = vmatprep.subr.mxu0 0.0
    %1901 = vmatpush1.xpose.msra.mxu0 %v1874
    %1902 = vmatprep.subr.mxu0 0.0
    %1903 = vmatpush1.xpose.msra.mxu0 %v1872
    %1904 = vmatprep.subr.mxu0 0.0
    %1905 = vmatpush1.xpose.msra.mxu0 %v1870
    %1906 = vmatprep.subr.mxu0 0.0
    %1907 = vmatpush1.xpose.msra.mxu0 %v1868
    %1908 = vmatprep.subr.mxu0 0.0
    %1909 = vmatpush2.xpose.msra.mxu0 0.0
    %1910 = vmatprep.subr.mxu0 0.0
    %1911 = vmatpush2.xpose.msra.mxu0 0.0
    %1912 = vmatprep.subr.mxu0 0.0
    %1913 = vmatpush2.xpose.msra.mxu0 0.0
    %1914 = vmatprep.subr.mxu0 0.0
    %1915 = vmatpush2.xpose.msra.mxu0 0.0
    %1916 = vmatprep.subr.mxu0 0.0
    %1917 = vmatpush2.xpose.msra.mxu0 0.0
    %1918 = vmatprep.subr.mxu0 0.0
    %1919 = vmatpush2.xpose.msra.mxu0 0.0
    %1920 = vmatprep.subr.mxu0 0.0
    %1921 = vmatpush2.xpose.msra.mxu0 0.0
    %1922 = vmatprep.subr.mxu0 0.0
    %1923 = vmatpush2.xpose.msra.mxu0 0.0
    %1924 = vmatprep.subr.mxu0 0.0
    %1925 = vmatpush2.xpose.msra.mxu0 0.0
    %1926 = vmatprep.subr.mxu0 0.0
    %1927 = vmatpush2.xpose.msra.mxu0 0.0
    %1928 = vmatprep.subr.mxu0 0.0
    %1929 = vmatpush2.xpose.msra.mxu0 0.0
    %1930 = vmatprep.subr.mxu0 0.0
    %1931 = vmatpush2.xpose.msra.mxu0 0.0
    %1932 = vmatprep.subr.mxu0 0.0
    %1933 = vmatpush2.xpose.msra.mxu0 0.0
    %1934 = vmatprep.subr.mxu0 0.0
    %1935 = vmatpush2.xpose.msra.mxu0 0.0
    %1936 = vmatprep.subr.mxu0 0.0
    %1937 = vmatpush2.xpose.msra.mxu0 0.0
    %1938 = vmatprep.subr.mxu0 0.0
    %1939 = vmatpush2.xpose.msra.mxu0 0.0
    %1940 = vmatprep.mubr.f32.mxu0 0.0
    %1941 = vmatmul.mubr.f32.gmra.mxu0 %v1863
    %v1942 = vpop.f32.mrf.mxu0
    %v1943 = vadd.f32 0.0, %v1942
    %v1944 = vpop.f32.mrf.mxu0
    %1945 = vmatprep.mubr.f32.mxu0 0.0
    %1946 = vmatmul.mubr.f32.gmra.mxu0 %v1866
    %v1947 = vpop.f32.mrf.mxu0
    %v1948 = vadd.f32 0.0, %v1947
    %v1949 = vpop.f32.mrf.mxu0
    %1950 = vdwg.mxu0
    %v1951 = vadd.f32 %v1522, %v1943
    %v1952 = vadd.f32 %v1523, %v1948
    %v1953 = vadd.f32 %v54, %v1951
    %v1954 = vadd.f32 %v55, %v1952
    %v1955 = vld [vmem:[%s6] sm:$0x1]
    %v1956 = vld [vmem:[%s7] sm:$0x1]
    %v1957 = vsel %vm102, %v1953, 0.0
    %1958 = vadd.xlane.f32.xlu0 %v1957
    %v1959 = vpop.xlane.xlu0 %1958
    %v1960 = vsel %vm102, %v1954, 0.0
    %1961 = vadd.xlane.f32.xlu0 %v1960
    %v1962 = vpop.xlane.xlu0 %1961
    %v1963 = vrcp.pop 32.0
    %v1964 = vmul.f32 %v1959, %v1963
    %v1965 = vmul.f32 %v1962, %v1963
    %v1966 = vsub.f32 %v1953, %v1964
    %v1967 = vsub.f32 %v1954, %v1965
    %v1968 = vmul.f32 %v1966, %v1966
    %v1969 = vmul.f32 %v1967, %v1967
    %v1970 = vsel %vm102, %v1968, 0.0
    %1971 = vadd.xlane.f32.xlu0 %v1970
    %v1972 = vpop.xlane.xlu0 %1971
    %v1973 = vsel %vm102, %v1969, 0.0
    %1974 = vadd.xlane.f32.xlu0 %v1973
    %v1975 = vpop.xlane.xlu0 %1974
    %v1976 = vmul.f32 %v1972, %v1963
    %v1977 = vmul.f32 %v1975, %v1963
    %v1978 = vadd.f32 %v1976, 1e-05
    %v1979 = vadd.f32 %v1977, 1e-05
    %v1980 = vrsqrt.pop %v1978
    %v1981 = vrsqrt.pop %v1979
    %v1982 = vmul.f32 %v1966, %v1980
    %v1983 = vmul.f32 %v1967, %v1981
    %v1985 = vlaneseq
    %v1986 = vshrl.u32 %v1985, 7
    %v1987 = vsub.s32 0, %v1986
    %v1988 = vrot.slane %v1955, %v1987
    %v1990 = vmul.f32 %v1982, %v1988
    %v1991 = vmul.f32 %v1983, %v1988
    %v1993 = vlaneseq
    %v1994 = vshrl.u32 %v1993, 7
    %v1995 = vsub.s32 0, %v1994
    %v1996 = vrot.slane %v1956, %v1995
    %v1998 = vadd.f32 %v1990, %v1996
    %v1999 = vadd.f32 %v1991, %v1996
    %v2000 = vld [vmem:[%s8] sm:$0xff]
    %v2001 = vld [vmem:[%s8 + $0x8] sm:$0xff]
    %v2002 = vld [vmem:[%s8 + $0x10] sm:$0xff]
    %v2003 = vld [vmem:[%s8 + $0x18] sm:$0xff]
    %v2004 = vld [vmem:[%s8 + $0x20] sm:$0xff]
    %v2005 = vld [vmem:[%s8 + $0x28] sm:$0xff]
    %v2006 = vld [vmem:[%s8 + $0x30] sm:$0xff]
    %v2007 = vld [vmem:[%s8 + $0x38] sm:$0xff]
    %v2008 = vld [vmem:[%s9] sm:$0x1]
    %v2010 = vlaneseq
    %v2011 = vshrl.u32 %v2010, 7
    %v2012 = vsub.s32 0, %v2011
    %v2013 = vrot.slane %v2008, %v2012
    %v2016 = vsel %vm102, %v1998, 0
    %v2019 = vsel %vm102, %v1999, 0
    %v2022 = vsel %vm102, %v2000, 0
    %v2025 = vsel %vm102, %v2001, 0
    %v2028 = vsel %vm102, %v2002, 0
    %v2031 = vsel %vm102, %v2003, 0
    %v2034 = vsel %vm102, %v2004, 0
    %v2037 = vsel %vm102, %v2005, 0
    %v2040 = vsel %vm102, %v2006, 0
    %v2043 = vsel %vm102, %v2007, 0
    %2045 = vmatprep.subr.mxu0 0.0
    %2046 = vmatpush1.xpose.msra.mxu0 0.0
    %2047 = vmatprep.subr.mxu0 0.0
    %2048 = vmatpush1.xpose.msra.mxu0 0.0
    %2049 = vmatprep.subr.mxu0 0.0
    %2050 = vmatpush1.xpose.msra.mxu0 0.0
    %2051 = vmatprep.subr.mxu0 0.0
    %2052 = vmatpush1.xpose.msra.mxu0 0.0
    %2053 = vmatprep.subr.mxu0 0.0
    %2054 = vmatpush1.xpose.msra.mxu0 0.0
    %2055 = vmatprep.subr.mxu0 0.0
    %2056 = vmatpush1.xpose.msra.mxu0 0.0
    %2057 = vmatprep.subr.mxu0 0.0
    %2058 = vmatpush1.xpose.msra.mxu0 0.0
    %2059 = vmatprep.subr.mxu0 0.0
    %2060 = vmatpush1.xpose.msra.mxu0 0.0
    %2061 = vmatprep.subr.mxu0 0.0
    %2062 = vmatpush1.xpose.msra.mxu0 %v2043
    %2063 = vmatprep.subr.mxu0 0.0
    %2064 = vmatpush1.xpose.msra.mxu0 %v2040
    %2065 = vmatprep.subr.mxu0 0.0
    %2066 = vmatpush1.xpose.msra.mxu0 %v2037
    %2067 = vmatprep.subr.mxu0 0.0
    %2068 = vmatpush1.xpose.msra.mxu0 %v2034
    %2069 = vmatprep.subr.mxu0 0.0
    %2070 = vmatpush1.xpose.msra.mxu0 %v2031
    %2071 = vmatprep.subr.mxu0 0.0
    %2072 = vmatpush1.xpose.msra.mxu0 %v2028
    %2073 = vmatprep.subr.mxu0 0.0
    %2074 = vmatpush1.xpose.msra.mxu0 %v2025
    %2075 = vmatprep.subr.mxu0 0.0
    %2076 = vmatpush1.xpose.msra.mxu0 %v2022
    %2077 = vmatprep.subr.mxu0 0.0
    %2078 = vmatpush2.xpose.msra.mxu0 0.0
    %2079 = vmatprep.subr.mxu0 0.0
    %2080 = vmatpush2.xpose.msra.mxu0 0.0
    %2081 = vmatprep.subr.mxu0 0.0
    %2082 = vmatpush2.xpose.msra.mxu0 0.0
    %2083 = vmatprep.subr.mxu0 0.0
    %2084 = vmatpush2.xpose.msra.mxu0 0.0
    %2085 = vmatprep.subr.mxu0 0.0
    %2086 = vmatpush2.xpose.msra.mxu0 0.0
    %2087 = vmatprep.subr.mxu0 0.0
    %2088 = vmatpush2.xpose.msra.mxu0 0.0
    %2089 = vmatprep.subr.mxu0 0.0
    %2090 = vmatpush2.xpose.msra.mxu0 0.0
    %2091 = vmatprep.subr.mxu0 0.0
    %2092 = vmatpush2.xpose.msra.mxu0 0.0
    %2093 = vmatprep.subr.mxu0 0.0
    %2094 = vmatpush2.xpose.msra.mxu0 0.0
    %2095 = vmatprep.subr.mxu0 0.0
    %2096 = vmatpush2.xpose.msra.mxu0 0.0
    %2097 = vmatprep.subr.mxu0 0.0
    %2098 = vmatpush2.xpose.msra.mxu0 0.0
    %2099 = vmatprep.subr.mxu0 0.0
    %2100 = vmatpush2.xpose.msra.mxu0 0.0
    %2101 = vmatprep.subr.mxu0 0.0
    %2102 = vmatpush2.xpose.msra.mxu0 0.0
    %2103 = vmatprep.subr.mxu0 0.0
    %2104 = vmatpush2.xpose.msra.mxu0 0.0
    %2105 = vmatprep.subr.mxu0 0.0
    %2106 = vmatpush2.xpose.msra.mxu0 0.0
    %2107 = vmatprep.subr.mxu0 0.0
    %2108 = vmatpush2.xpose.msra.mxu0 0.0
    %2109 = vmatprep.mubr.f32.mxu0 0.0
    %2110 = vmatmul.mubr.f32.gmra.mxu0 %v2016
    %v2111 = vpop.f32.mrf.mxu0
    %v2112 = vadd.f32 %v2013, %v2111
    %v2113 = vpop.f32.mrf.mxu0
    %2114 = vmatprep.mubr.f32.mxu0 0.0
    %2115 = vmatmul.mubr.f32.gmra.mxu0 %v2019
    %v2116 = vpop.f32.mrf.mxu0
    %v2117 = vadd.f32 %v2013, %v2116
    %v2118 = vpop.f32.mrf.mxu0
    %2119 = vdwg.mxu0
    %v2120 = vmax.f32 %v2112, 0.0
    %v2121 = vmax.f32 %v2117, 0.0
    %v2122 = vld [vmem:[%s10] sm:$0xff]
    %v2123 = vld [vmem:[%s10 + $0x8] sm:$0xff]
    %v2124 = vld [vmem:[%s10 + $0x10] sm:$0xff]
    %v2125 = vld [vmem:[%s10 + $0x18] sm:$0xff]
    %v2126 = vld [vmem:[%s11] sm:$0x1]
    %v2128 = vlaneseq
    %v2129 = vshrl.u32 %v2128, 7
    %v2130 = vsub.s32 0, %v2129
    %v2131 = vrot.slane %v2126, %v2130
    %vm2133 = vcmask 523264
    %v2135 = vsel %vm2133, %v2120, 0
    %v2138 = vsel %vm2133, %v2121, 0
    %v2141 = vsel %vm2133, %v2122, 0
    %v2144 = vsel %vm2133, %v2123, 0
    %v2147 = vsel %vm2133, %v2124, 0
    %v2150 = vsel %vm2133, %v2125, 0
    %2152 = vmatprep.subr.mxu0 0.0
    %2153 = vmatpush1.xpose.msra.mxu0 0.0
    %2154 = vmatprep.subr.mxu0 0.0
    %2155 = vmatpush1.xpose.msra.mxu0 0.0
    %2156 = vmatprep.subr.mxu0 0.0
    %2157 = vmatpush1.xpose.msra.mxu0 0.0
    %2158 = vmatprep.subr.mxu0 0.0
    %2159 = vmatpush1.xpose.msra.mxu0 0.0
    %2160 = vmatprep.subr.mxu0 0.0
    %2161 = vmatpush1.xpose.msra.mxu0 0.0
    %2162 = vmatprep.subr.mxu0 0.0
    %2163 = vmatpush1.xpose.msra.mxu0 0.0
    %2164 = vmatprep.subr.mxu0 0.0
    %2165 = vmatpush1.xpose.msra.mxu0 0.0
    %2166 = vmatprep.subr.mxu0 0.0
    %2167 = vmatpush1.xpose.msra.mxu0 0.0
    %2168 = vmatprep.subr.mxu0 0.0
    %2169 = vmatpush1.xpose.msra.mxu0 0.0
    %2170 = vmatprep.subr.mxu0 0.0
    %2171 = vmatpush1.xpose.msra.mxu0 0.0
    %2172 = vmatprep.subr.mxu0 0.0
    %2173 = vmatpush1.xpose.msra.mxu0 0.0
    %2174 = vmatprep.subr.mxu0 0.0
    %2175 = vmatpush1.xpose.msra.mxu0 0.0
    %2176 = vmatprep.subr.mxu0 0.0
    %2177 = vmatpush1.xpose.msra.mxu0 %v2150
    %2178 = vmatprep.subr.mxu0 0.0
    %2179 = vmatpush1.xpose.msra.mxu0 %v2147
    %2180 = vmatprep.subr.mxu0 0.0
    %2181 = vmatpush1.xpose.msra.mxu0 %v2144
    %2182 = vmatprep.subr.mxu0 0.0
    %2183 = vmatpush1.xpose.msra.mxu0 %v2141
    %2184 = vmatprep.subr.mxu0 0.0
    %2185 = vmatpush2.xpose.msra.mxu0 0.0
    %2186 = vmatprep.subr.mxu0 0.0
    %2187 = vmatpush2.xpose.msra.mxu0 0.0
    %2188 = vmatprep.subr.mxu0 0.0
    %2189 = vmatpush2.xpose.msra.mxu0 0.0
    %2190 = vmatprep.subr.mxu0 0.0
    %2191 = vmatpush2.xpose.msra.mxu0 0.0
    %2192 = vmatprep.subr.mxu0 0.0
    %2193 = vmatpush2.xpose.msra.mxu0 0.0
    %2194 = vmatprep.subr.mxu0 0.0
    %2195 = vmatpush2.xpose.msra.mxu0 0.0
    %2196 = vmatprep.subr.mxu0 0.0
    %2197 = vmatpush2.xpose.msra.mxu0 0.0
    %2198 = vmatprep.subr.mxu0 0.0
    %2199 = vmatpush2.xpose.msra.mxu0 0.0
    %2200 = vmatprep.subr.mxu0 0.0
    %2201 = vmatpush2.xpose.msra.mxu0 0.0
    %2202 = vmatprep.subr.mxu0 0.0
    %2203 = vmatpush2.xpose.msra.mxu0 0.0
    %2204 = vmatprep.subr.mxu0 0.0
    %2205 = vmatpush2.xpose.msra.mxu0 0.0
    %2206 = vmatprep.subr.mxu0 0.0
    %2207 = vmatpush2.xpose.msra.mxu0 0.0
    %2208 = vmatprep.subr.mxu0 0.0
    %2209 = vmatpush2.xpose.msra.mxu0 0.0
    %2210 = vmatprep.subr.mxu0 0.0
    %2211 = vmatpush2.xpose.msra.mxu0 0.0
    %2212 = vmatprep.subr.mxu0 0.0
    %2213 = vmatpush2.xpose.msra.mxu0 0.0
    %2214 = vmatprep.subr.mxu0 0.0
    %2215 = vmatpush2.xpose.msra.mxu0 0.0
    %2216 = vmatprep.mubr.f32.mxu0 0.0
    %2217 = vmatmul.mubr.f32.gmra.mxu0 %v2135
    %v2218 = vpop.f32.mrf.mxu0
    %v2219 = vadd.f32 %v2131, %v2218
    %v2220 = vpop.f32.mrf.mxu0
    %2221 = vmatprep.mubr.f32.mxu0 0.0
    %2222 = vmatmul.mubr.f32.gmra.mxu0 %v2138
    %v2223 = vpop.f32.mrf.mxu0
    %v2224 = vadd.f32 %v2131, %v2223
    %v2225 = vpop.f32.mrf.mxu0
    %2226 = vdwg.mxu0
    %v2227 = vadd.f32 %v1998, %v2219
    %v2228 = vadd.f32 %v1999, %v2224
    %v2229 = vld [vmem:[%s12] sm:$0x1]
    %v2230 = vld [vmem:[%s13] sm:$0x1]
    %v2231 = vsel %vm102, %v2227, 0.0
    %2232 = vadd.xlane.f32.xlu0 %v2231
    %v2233 = vpop.xlane.xlu0 %2232
    %v2234 = vsel %vm102, %v2228, 0.0
    %2235 = vadd.xlane.f32.xlu0 %v2234
    %v2236 = vpop.xlane.xlu0 %2235
    %v2237 = vmul.f32 %v2233, %v1963
    %v2238 = vmul.f32 %v2236, %v1963
    %v2239 = vsub.f32 %v2227, %v2237
    %v2240 = vsub.f32 %v2228, %v2238
    %v2241 = vmul.f32 %v2239, %v2239
    %v2242 = vmul.f32 %v2240, %v2240
    %v2243 = vsel %vm102, %v2241, 0.0
    %2244 = vadd.xlane.f32.xlu0 %v2243
    %v2245 = vpop.xlane.xlu0 %2244
    %v2246 = vsel %vm102, %v2242, 0.0
    %2247 = vadd.xlane.f32.xlu0 %v2246
    %v2248 = vpop.xlane.xlu0 %2247
    %v2249 = vmul.f32 %v2245, %v1963
    %v2250 = vmul.f32 %v2248, %v1963
    %v2251 = vadd.f32 %v2249, 1e-05
    %v2252 = vadd.f32 %v2250, 1e-05
    %v2253 = vrsqrt.pop %v2251
    %v2254 = vrsqrt.pop %v2252
    %v2255 = vmul.f32 %v2239, %v2253
    %v2256 = vmul.f32 %v2240, %v2254
    %v2258 = vlaneseq
    %v2259 = vshrl.u32 %v2258, 7
    %v2260 = vsub.s32 0, %v2259
    %v2261 = vrot.slane %v2229, %v2260
    %v2263 = vmul.f32 %v2255, %v2261
    %v2264 = vmul.f32 %v2256, %v2261
    %v2266 = vlaneseq
    %v2267 = vshrl.u32 %v2266, 7
    %v2268 = vsub.s32 0, %v2267
    %v2269 = vrot.slane %v2230, %v2268
    %v2271 = vadd.f32 %v2263, %v2269
    %v2272 = vadd.f32 %v2264, %v2269
    %s2273 = scalar_lea.vmem %s2, 96
    %v2274 = vld [vmem:[%s2273] sm:$0xff]
    %v2275 = vld [vmem:[%s2273 + $0x8] sm:$0xff]
    %v2276 = vld [vmem:[%s2273 + $0x10] sm:$0xff]
    %v2277 = vld [vmem:[%s2273 + $0x18] sm:$0xff]
    %v2278 = vld [vmem:[%s2273 + $0x20] sm:$0xff]
    %v2279 = vld [vmem:[%s2273 + $0x28] sm:$0xff]
    %v2280 = vld [vmem:[%s2273 + $0x30] sm:$0xff]
    %v2281 = vld [vmem:[%s2273 + $0x38] sm:$0xff]
    %v2282 = vld [vmem:[%s2273 + $0x40] sm:$0xff]
    %v2283 = vld [vmem:[%s2273 + $0x48] sm:$0xff]
    %v2284 = vld [vmem:[%s2273 + $0x50] sm:$0xff]
    %v2285 = vld [vmem:[%s2273 + $0x58] sm:$0xff]
    %s2286 = scalar_lea.vmem %s3, 1
    %v2287 = vld [vmem:[%s2286] sm:$0x1]
    %v2289 = vlaneseq
    %v2290 = vshrl.u32 %v2289, 7
    %v2291 = vsub.s32 0, %v2290
    %v2292 = vrot.slane %v2287, %v2291
    %v2295 = vsel %vm102, %v2271, 0
    %v2298 = vsel %vm102, %v2272, 0
    %v2301 = vsel %vm102, %v2274, 0
    %v2304 = vsel %vm102, %v2275, 0
    %v2307 = vsel %vm102, %v2276, 0
    %v2310 = vsel %vm102, %v2277, 0
    %v2313 = vsel %vm102, %v2278, 0
    %v2316 = vsel %vm102, %v2279, 0
    %v2319 = vsel %vm102, %v2280, 0
    %v2322 = vsel %vm102, %v2281, 0
    %v2325 = vsel %vm102, %v2282, 0
    %v2328 = vsel %vm102, %v2283, 0
    %v2331 = vsel %vm102, %v2284, 0
    %v2334 = vsel %vm102, %v2285, 0
    %2336 = vmatprep.subr.mxu0 0.0
    %2337 = vmatpush1.xpose.msra.mxu0 0.0
    %2338 = vmatprep.subr.mxu0 0.0
    %2339 = vmatpush1.xpose.msra.mxu0 0.0
    %2340 = vmatprep.subr.mxu0 0.0
    %2341 = vmatpush1.xpose.msra.mxu0 0.0
    %2342 = vmatprep.subr.mxu0 0.0
    %2343 = vmatpush1.xpose.msra.mxu0 0.0
    %2344 = vmatprep.subr.mxu0 0.0
    %2345 = vmatpush1.xpose.msra.mxu0 %v2334
    %2346 = vmatprep.subr.mxu0 0.0
    %2347 = vmatpush1.xpose.msra.mxu0 %v2331
    %2348 = vmatprep.subr.mxu0 0.0
    %2349 = vmatpush1.xpose.msra.mxu0 %v2328
    %2350 = vmatprep.subr.mxu0 0.0
    %2351 = vmatpush1.xpose.msra.mxu0 %v2325
    %2352 = vmatprep.subr.mxu0 0.0
    %2353 = vmatpush1.xpose.msra.mxu0 %v2322
    %2354 = vmatprep.subr.mxu0 0.0
    %2355 = vmatpush1.xpose.msra.mxu0 %v2319
    %2356 = vmatprep.subr.mxu0 0.0
    %2357 = vmatpush1.xpose.msra.mxu0 %v2316
    %2358 = vmatprep.subr.mxu0 0.0
    %2359 = vmatpush1.xpose.msra.mxu0 %v2313
    %2360 = vmatprep.subr.mxu0 0.0
    %2361 = vmatpush1.xpose.msra.mxu0 %v2310
    %2362 = vmatprep.subr.mxu0 0.0
    %2363 = vmatpush1.xpose.msra.mxu0 %v2307
    %2364 = vmatprep.subr.mxu0 0.0
    %2365 = vmatpush1.xpose.msra.mxu0 %v2304
    %2366 = vmatprep.subr.mxu0 0.0
    %2367 = vmatpush1.xpose.msra.mxu0 %v2301
    %2368 = vmatprep.subr.mxu0 0.0
    %2369 = vmatpush2.xpose.msra.mxu0 0.0
    %2370 = vmatprep.subr.mxu0 0.0
    %2371 = vmatpush2.xpose.msra.mxu0 0.0
    %2372 = vmatprep.subr.mxu0 0.0
    %2373 = vmatpush2.xpose.msra.mxu0 0.0
    %2374 = vmatprep.subr.mxu0 0.0
    %2375 = vmatpush2.xpose.msra.mxu0 0.0
    %2376 = vmatprep.subr.mxu0 0.0
    %2377 = vmatpush2.xpose.msra.mxu0 0.0
    %2378 = vmatprep.subr.mxu0 0.0
    %2379 = vmatpush2.xpose.msra.mxu0 0.0
    %2380 = vmatprep.subr.mxu0 0.0
    %2381 = vmatpush2.xpose.msra.mxu0 0.0
    %2382 = vmatprep.subr.mxu0 0.0
    %2383 = vmatpush2.xpose.msra.mxu0 0.0
    %2384 = vmatprep.subr.mxu0 0.0
    %2385 = vmatpush2.xpose.msra.mxu0 0.0
    %2386 = vmatprep.subr.mxu0 0.0
    %2387 = vmatpush2.xpose.msra.mxu0 0.0
    %2388 = vmatprep.subr.mxu0 0.0
    %2389 = vmatpush2.xpose.msra.mxu0 0.0
    %2390 = vmatprep.subr.mxu0 0.0
    %2391 = vmatpush2.xpose.msra.mxu0 0.0
    %2392 = vmatprep.subr.mxu0 0.0
    %2393 = vmatpush2.xpose.msra.mxu0 0.0
    %2394 = vmatprep.subr.mxu0 0.0
    %2395 = vmatpush2.xpose.msra.mxu0 0.0
    %2396 = vmatprep.subr.mxu0 0.0
    %2397 = vmatpush2.xpose.msra.mxu0 0.0
    %2398 = vmatprep.subr.mxu0 0.0
    %2399 = vmatpush2.xpose.msra.mxu0 0.0
    %2400 = vmatprep.mubr.f32.mxu0 0.0
    %2401 = vmatmul.mubr.f32.gmra.mxu0 %v2295
    %v2402 = vpop.f32.mrf.mxu0
    %v2403 = vadd.f32 %v2292, %v2402
    %v2404 = vpop.f32.mrf.mxu0
    %2405 = vmatprep.mubr.f32.mxu0 0.0
    %2406 = vmatmul.mubr.f32.gmra.mxu0 %v2298
    %v2407 = vpop.f32.mrf.mxu0
    %v2408 = vadd.f32 %v2292, %v2407
    %v2409 = vpop.f32.mrf.mxu0
    %2410 = vdwg.mxu0
    %s2411 = scalar_lea.vmem %s4, 32
    %v2412 = vld [vmem:[%s2411] sm:$0xff]
    %v2413 = vld [vmem:[%s2411 + $0x8] sm:$0xff]
    %v2414 = vld [vmem:[%s2411 + $0x10] sm:$0xff]
    %v2415 = vld [vmem:[%s2411 + $0x18] sm:$0xff]
    %s2416 = scalar_lea.vmem %s5, 1
    %v2417 = vld [vmem:[%s2416] sm:$0x1]
    %v2419 = vlaneseq
    %v2420 = vshrl.u32 %v2419, 7
    %v2421 = vsub.s32 0, %v2420
    %v2422 = vrot.slane %v2417, %v2421
    %v2424 = vadd.f32 %v2422, 0.0
    %2426 = vrot.lane.b32.xlu0 %v2403, 96
    %v2427 = vpop.permute.xlu0 %2426
    %v2428 = vsel %vm245, %v2403, 0
    %v2430 = vsel %vm245, %v2427, 0
    %2432 = vmatprep.subr.mxu0 0.0
    %2433 = vmatpush1.xpose.msra.mxu0 0.0
    %2434 = vmatprep.subr.mxu0 0.0
    %2435 = vmatpush1.xpose.msra.mxu0 0.0
    %2436 = vmatprep.subr.mxu0 0.0
    %2437 = vmatpush1.xpose.msra.mxu0 0.0
    %2438 = vmatprep.subr.mxu0 0.0
    %2439 = vmatpush1.xpose.msra.mxu0 0.0
    %2440 = vmatprep.subr.mxu0 0.0
    %2441 = vmatpush1.xpose.msra.mxu0 0.0
    %2442 = vmatprep.subr.mxu0 0.0
    %2443 = vmatpush1.xpose.msra.mxu0 0.0
    %2444 = vmatprep.subr.mxu0 0.0
    %2445 = vmatpush1.xpose.msra.mxu0 0.0
    %2446 = vmatprep.subr.mxu0 0.0
    %2447 = vmatpush1.xpose.msra.mxu0 0.0
    %2448 = vmatprep.subr.mxu0 0.0
    %2449 = vmatpush1.xpose.msra.mxu0 0.0
    %2450 = vmatprep.subr.mxu0 0.0
    %2451 = vmatpush1.xpose.msra.mxu0 0.0
    %2452 = vmatprep.subr.mxu0 0.0
    %2453 = vmatpush1.xpose.msra.mxu0 0.0
    %2454 = vmatprep.subr.mxu0 0.0
    %2455 = vmatpush1.xpose.msra.mxu0 0.0
    %2456 = vmatprep.subr.mxu0 0.0
    %2457 = vmatpush1.xpose.msra.mxu0 0.0
    %2458 = vmatprep.subr.mxu0 0.0
    %2459 = vmatpush1.xpose.msra.mxu0 0.0
    %2460 = vmatprep.subr.mxu0 0.0
    %2461 = vmatpush1.xpose.msra.mxu0 0.0
    %2462 = vmatprep.subr.mxu0 0.0
    %2463 = vmatpush1.xpose.msra.mxu0 %v2430
    %2464 = vmatprep.subr.mxu0 0.0
    %2465 = vmatpush2.xpose.msra.mxu0 0.0
    %2466 = vmatprep.subr.mxu0 0.0
    %2467 = vmatpush2.xpose.msra.mxu0 0.0
    %2468 = vmatprep.subr.mxu0 0.0
    %2469 = vmatpush2.xpose.msra.mxu0 0.0
    %2470 = vmatprep.subr.mxu0 0.0
    %2471 = vmatpush2.xpose.msra.mxu0 0.0
    %2472 = vmatprep.subr.mxu0 0.0
    %2473 = vmatpush2.xpose.msra.mxu0 0.0
    %2474 = vmatprep.subr.mxu0 0.0
    %2475 = vmatpush2.xpose.msra.mxu0 0.0
    %2476 = vmatprep.subr.mxu0 0.0
    %2477 = vmatpush2.xpose.msra.mxu0 0.0
    %2478 = vmatprep.subr.mxu0 0.0
    %2479 = vmatpush2.xpose.msra.mxu0 0.0
    %2480 = vmatprep.subr.mxu0 0.0
    %2481 = vmatpush2.xpose.msra.mxu0 0.0
    %2482 = vmatprep.subr.mxu0 0.0
    %2483 = vmatpush2.xpose.msra.mxu0 0.0
    %2484 = vmatprep.subr.mxu0 0.0
    %2485 = vmatpush2.xpose.msra.mxu0 0.0
    %2486 = vmatprep.subr.mxu0 0.0
    %2487 = vmatpush2.xpose.msra.mxu0 0.0
    %2488 = vmatprep.subr.mxu0 0.0
    %2489 = vmatpush2.xpose.msra.mxu0 0.0
    %2490 = vmatprep.subr.mxu0 0.0
    %2491 = vmatpush2.xpose.msra.mxu0 0.0
    %2492 = vmatprep.subr.mxu0 0.0
    %2493 = vmatpush2.xpose.msra.mxu0 0.0
    %2494 = vmatprep.subr.mxu0 0.0
    %2495 = vmatpush2.xpose.msra.mxu0 0.0
    %2496 = vmatprep.mubr.f32.mxu0 0.0
    %2497 = vmatmul.mubr.f32.gmra.mxu0 %v2428
    %v2498 = vpop.f32.mrf.mxu0
    %v2499 = vadd.f32 %v235, %v2498
    %v2500 = vpop.f32.mrf.mxu0
    %2501 = vdwg.mxu0
    %2503 = vrot.lane.b32.xlu0 %v2408, 96
    %v2504 = vpop.permute.xlu0 %2503
    %v2505 = vsel %vm245, %v2408, 0
    %v2507 = vsel %vm245, %v2504, 0
    %2509 = vmatprep.subr.mxu0 0.0
    %2510 = vmatpush1.xpose.msra.mxu0 0.0
    %2511 = vmatprep.subr.mxu0 0.0
    %2512 = vmatpush1.xpose.msra.mxu0 0.0
    %2513 = vmatprep.subr.mxu0 0.0
    %2514 = vmatpush1.xpose.msra.mxu0 0.0
    %2515 = vmatprep.subr.mxu0 0.0
    %2516 = vmatpush1.xpose.msra.mxu0 0.0
    %2517 = vmatprep.subr.mxu0 0.0
    %2518 = vmatpush1.xpose.msra.mxu0 0.0
    %2519 = vmatprep.subr.mxu0 0.0
    %2520 = vmatpush1.xpose.msra.mxu0 0.0
    %2521 = vmatprep.subr.mxu0 0.0
    %2522 = vmatpush1.xpose.msra.mxu0 0.0
    %2523 = vmatprep.subr.mxu0 0.0
    %2524 = vmatpush1.xpose.msra.mxu0 0.0
    %2525 = vmatprep.subr.mxu0 0.0
    %2526 = vmatpush1.xpose.msra.mxu0 0.0
    %2527 = vmatprep.subr.mxu0 0.0
    %2528 = vmatpush1.xpose.msra.mxu0 0.0
    %2529 = vmatprep.subr.mxu0 0.0
    %2530 = vmatpush1.xpose.msra.mxu0 0.0
    %2531 = vmatprep.subr.mxu0 0.0
    %2532 = vmatpush1.xpose.msra.mxu0 0.0
    %2533 = vmatprep.subr.mxu0 0.0
    %2534 = vmatpush1.xpose.msra.mxu0 0.0
    %2535 = vmatprep.subr.mxu0 0.0
    %2536 = vmatpush1.xpose.msra.mxu0 0.0
    %2537 = vmatprep.subr.mxu0 0.0
    %2538 = vmatpush1.xpose.msra.mxu0 0.0
    %2539 = vmatprep.subr.mxu0 0.0
    %2540 = vmatpush1.xpose.msra.mxu0 %v2507
    %2541 = vmatprep.subr.mxu0 0.0
    %2542 = vmatpush2.xpose.msra.mxu0 0.0
    %2543 = vmatprep.subr.mxu0 0.0
    %2544 = vmatpush2.xpose.msra.mxu0 0.0
    %2545 = vmatprep.subr.mxu0 0.0
    %2546 = vmatpush2.xpose.msra.mxu0 0.0
    %2547 = vmatprep.subr.mxu0 0.0
    %2548 = vmatpush2.xpose.msra.mxu0 0.0
    %2549 = vmatprep.subr.mxu0 0.0
    %2550 = vmatpush2.xpose.msra.mxu0 0.0
    %2551 = vmatprep.subr.mxu0 0.0
    %2552 = vmatpush2.xpose.msra.mxu0 0.0
    %2553 = vmatprep.subr.mxu0 0.0
    %2554 = vmatpush2.xpose.msra.mxu0 0.0
    %2555 = vmatprep.subr.mxu0 0.0
    %2556 = vmatpush2.xpose.msra.mxu0 0.0
    %2557 = vmatprep.subr.mxu0 0.0
    %2558 = vmatpush2.xpose.msra.mxu0 0.0
    %2559 = vmatprep.subr.mxu0 0.0
    %2560 = vmatpush2.xpose.msra.mxu0 0.0
    %2561 = vmatprep.subr.mxu0 0.0
    %2562 = vmatpush2.xpose.msra.mxu0 0.0
    %2563 = vmatprep.subr.mxu0 0.0
    %2564 = vmatpush2.xpose.msra.mxu0 0.0
    %2565 = vmatprep.subr.mxu0 0.0
    %2566 = vmatpush2.xpose.msra.mxu0 0.0
    %2567 = vmatprep.subr.mxu0 0.0
    %2568 = vmatpush2.xpose.msra.mxu0 0.0
    %2569 = vmatprep.subr.mxu0 0.0
    %2570 = vmatpush2.xpose.msra.mxu0 0.0
    %2571 = vmatprep.subr.mxu0 0.0
    %2572 = vmatpush2.xpose.msra.mxu0 0.0
    %2573 = vmatprep.mubr.f32.mxu0 0.0
    %2574 = vmatmul.mubr.f32.gmra.mxu0 %v2505
    %v2575 = vpop.f32.mrf.mxu0
    %v2576 = vadd.f32 %v239, %v2575
    %v2577 = vpop.f32.mrf.mxu0
    %2578 = vdwg.mxu0
    %v2579 = vsel %vm245, %v2499, -inf
    %2580 = vmax.xlane.f32.xlu0 %v2579
    %v2581 = vpop.xlane.xlu0 %2580
    %v2582 = vsel %vm245, %v2576, -inf
    %2583 = vmax.xlane.f32.xlu0 %v2582
    %v2584 = vpop.xlane.xlu0 %2583
    %v2585 = vsub.f32 %v2499, %v2581
    %v2586 = vsub.f32 %v2576, %v2584
    %v2587 = vmul.f32 %v2585, 1.442695
    %v2588 = vpow.pop %v2587
    %v2589 = vmul.f32 %v2586, 1.442695
    %v2590 = vpow.pop %v2589
    %v2591 = vsel %vm245, %v2588, 0.0
    %2592 = vadd.xlane.f32.xlu0 %v2591
    %v2593 = vpop.xlane.xlu0 %2592
    %v2594 = vsel %vm245, %v2590, 0.0
    %2595 = vadd.xlane.f32.xlu0 %v2594
    %v2596 = vpop.xlane.xlu0 %2595
    %v2597 = vrcp.pop %v2593
    %v2598 = vrcp.pop %v2596
    %v2599 = vmul.f32 %v2588, %v2597
    %v2600 = vmul.f32 %v2590, %v2598
    %2601 = vrot.lane.b32.xlu0 %v2403, 64
    %v2602 = vpop.permute.xlu0 %2601
    %v2605 = vsel %vm245, %v2599, 0
    %2607 = vmatprep.subr.mxu0 0.0
    %2608 = vmatpush1.msra.mxu0 0.0
    %2609 = vmatprep.subr.mxu0 0.0
    %2610 = vmatpush1.msra.mxu0 0.0
    %2611 = vmatprep.subr.mxu0 0.0
    %2612 = vmatpush1.msra.mxu0 0.0
    %2613 = vmatprep.subr.mxu0 0.0
    %2614 = vmatpush1.msra.mxu0 0.0
    %2615 = vmatprep.subr.mxu0 0.0
    %2616 = vmatpush1.msra.mxu0 0.0
    %2617 = vmatprep.subr.mxu0 0.0
    %2618 = vmatpush1.msra.mxu0 0.0
    %2619 = vmatprep.subr.mxu0 0.0
    %2620 = vmatpush1.msra.mxu0 0.0
    %2621 = vmatprep.subr.mxu0 0.0
    %2622 = vmatpush1.msra.mxu0 0.0
    %2623 = vmatprep.subr.mxu0 0.0
    %2624 = vmatpush1.msra.mxu0 0.0
    %2625 = vmatprep.subr.mxu0 0.0
    %2626 = vmatpush1.msra.mxu0 0.0
    %2627 = vmatprep.subr.mxu0 0.0
    %2628 = vmatpush1.msra.mxu0 0.0
    %2629 = vmatprep.subr.mxu0 0.0
    %2630 = vmatpush1.msra.mxu0 0.0
    %2631 = vmatprep.subr.mxu0 0.0
    %2632 = vmatpush1.msra.mxu0 0.0
    %2633 = vmatprep.subr.mxu0 0.0
    %2634 = vmatpush1.msra.mxu0 0.0
    %2635 = vmatprep.subr.mxu0 0.0
    %2636 = vmatpush1.msra.mxu0 0.0
    %2637 = vmatprep.subr.mxu0 0.0
    %2638 = vmatpush1.msra.mxu0 %v2602
    %2639 = vmatprep.subr.mxu0 0.0
    %2640 = vmatpush2.msra.mxu0 0.0
    %2641 = vmatprep.subr.mxu0 0.0
    %2642 = vmatpush2.msra.mxu0 0.0
    %2643 = vmatprep.subr.mxu0 0.0
    %2644 = vmatpush2.msra.mxu0 0.0
    %2645 = vmatprep.subr.mxu0 0.0
    %2646 = vmatpush2.msra.mxu0 0.0
    %2647 = vmatprep.subr.mxu0 0.0
    %2648 = vmatpush2.msra.mxu0 0.0
    %2649 = vmatprep.subr.mxu0 0.0
    %2650 = vmatpush2.msra.mxu0 0.0
    %2651 = vmatprep.subr.mxu0 0.0
    %2652 = vmatpush2.msra.mxu0 0.0
    %2653 = vmatprep.subr.mxu0 0.0
    %2654 = vmatpush2.msra.mxu0 0.0
    %2655 = vmatprep.subr.mxu0 0.0
    %2656 = vmatpush2.msra.mxu0 0.0
    %2657 = vmatprep.subr.mxu0 0.0
    %2658 = vmatpush2.msra.mxu0 0.0
    %2659 = vmatprep.subr.mxu0 0.0
    %2660 = vmatpush2.msra.mxu0 0.0
    %2661 = vmatprep.subr.mxu0 0.0
    %2662 = vmatpush2.msra.mxu0 0.0
    %2663 = vmatprep.subr.mxu0 0.0
    %2664 = vmatpush2.msra.mxu0 0.0
    %2665 = vmatprep.subr.mxu0 0.0
    %2666 = vmatpush2.msra.mxu0 0.0
    %2667 = vmatprep.subr.mxu0 0.0
    %2668 = vmatpush2.msra.mxu0 0.0
    %2669 = vmatprep.subr.mxu0 0.0
    %2670 = vmatpush2.msra.mxu0 0.0
    %2671 = vmatprep.mubr.f32.mxu0 0.0
    %2672 = vmatmul.mubr.f32.gmra.mxu0 %v2605
    %v2673 = vpop.f32.mrf.mxu0
    %v2674 = vadd.f32 0.0, %v2673
    %v2675 = vpop.f32.mrf.mxu0
    %2676 = vdwg.mxu0
    %2677 = vrot.lane.b32.xlu0 %v2408, 64
    %v2678 = vpop.permute.xlu0 %2677
    %v2681 = vsel %vm245, %v2600, 0
    %2683 = vmatprep.subr.mxu0 0.0
    %2684 = vmatpush1.msra.mxu0 0.0
    %2685 = vmatprep.subr.mxu0 0.0
    %2686 = vmatpush1.msra.mxu0 0.0
    %2687 = vmatprep.subr.mxu0 0.0
    %2688 = vmatpush1.msra.mxu0 0.0
    %2689 = vmatprep.subr.mxu0 0.0
    %2690 = vmatpush1.msra.mxu0 0.0
    %2691 = vmatprep.subr.mxu0 0.0
    %2692 = vmatpush1.msra.mxu0 0.0
    %2693 = vmatprep.subr.mxu0 0.0
    %2694 = vmatpush1.msra.mxu0 0.0
    %2695 = vmatprep.subr.mxu0 0.0
    %2696 = vmatpush1.msra.mxu0 0.0
    %2697 = vmatprep.subr.mxu0 0.0
    %2698 = vmatpush1.msra.mxu0 0.0
    %2699 = vmatprep.subr.mxu0 0.0
    %2700 = vmatpush1.msra.mxu0 0.0
    %2701 = vmatprep.subr.mxu0 0.0
    %2702 = vmatpush1.msra.mxu0 0.0
    %2703 = vmatprep.subr.mxu0 0.0
    %2704 = vmatpush1.msra.mxu0 0.0
    %2705 = vmatprep.subr.mxu0 0.0
    %2706 = vmatpush1.msra.mxu0 0.0
    %2707 = vmatprep.subr.mxu0 0.0
    %2708 = vmatpush1.msra.mxu0 0.0
    %2709 = vmatprep.subr.mxu0 0.0
    %2710 = vmatpush1.msra.mxu0 0.0
    %2711 = vmatprep.subr.mxu0 0.0
    %2712 = vmatpush1.msra.mxu0 0.0
    %2713 = vmatprep.subr.mxu0 0.0
    %2714 = vmatpush1.msra.mxu0 %v2678
    %2715 = vmatprep.subr.mxu0 0.0
    %2716 = vmatpush2.msra.mxu0 0.0
    %2717 = vmatprep.subr.mxu0 0.0
    %2718 = vmatpush2.msra.mxu0 0.0
    %2719 = vmatprep.subr.mxu0 0.0
    %2720 = vmatpush2.msra.mxu0 0.0
    %2721 = vmatprep.subr.mxu0 0.0
    %2722 = vmatpush2.msra.mxu0 0.0
    %2723 = vmatprep.subr.mxu0 0.0
    %2724 = vmatpush2.msra.mxu0 0.0
    %2725 = vmatprep.subr.mxu0 0.0
    %2726 = vmatpush2.msra.mxu0 0.0
    %2727 = vmatprep.subr.mxu0 0.0
    %2728 = vmatpush2.msra.mxu0 0.0
    %2729 = vmatprep.subr.mxu0 0.0
    %2730 = vmatpush2.msra.mxu0 0.0
    %2731 = vmatprep.subr.mxu0 0.0
    %2732 = vmatpush2.msra.mxu0 0.0
    %2733 = vmatprep.subr.mxu0 0.0
    %2734 = vmatpush2.msra.mxu0 0.0
    %2735 = vmatprep.subr.mxu0 0.0
    %2736 = vmatpush2.msra.mxu0 0.0
    %2737 = vmatprep.subr.mxu0 0.0
    %2738 = vmatpush2.msra.mxu0 0.0
    %2739 = vmatprep.subr.mxu0 0.0
    %2740 = vmatpush2.msra.mxu0 0.0
    %2741 = vmatprep.subr.mxu0 0.0
    %2742 = vmatpush2.msra.mxu0 0.0
    %2743 = vmatprep.subr.mxu0 0.0
    %2744 = vmatpush2.msra.mxu0 0.0
    %2745 = vmatprep.subr.mxu0 0.0
    %2746 = vmatpush2.msra.mxu0 0.0
    %2747 = vmatprep.mubr.f32.mxu0 0.0
    %2748 = vmatmul.mubr.f32.gmra.mxu0 %v2681
    %v2749 = vpop.f32.mrf.mxu0
    %v2750 = vadd.f32 0.0, %v2749
    %v2751 = vpop.f32.mrf.mxu0
    %2752 = vdwg.mxu0
    %v2754 = vsel %vm245, %v2674, 0
    %v2757 = vsel %vm245, %v2750, 0
    %v2760 = vsel %vm245, %v2412, 0
    %v2763 = vsel %vm245, %v2413, 0
    %v2766 = vsel %vm245, %v2414, 0
    %v2769 = vsel %vm245, %v2415, 0
    %2771 = vmatprep.subr.mxu0 0.0
    %2772 = vmatpush1.xpose.msra.mxu0 0.0
    %2773 = vmatprep.subr.mxu0 0.0
    %2774 = vmatpush1.xpose.msra.mxu0 0.0
    %2775 = vmatprep.subr.mxu0 0.0
    %2776 = vmatpush1.xpose.msra.mxu0 0.0
    %2777 = vmatprep.subr.mxu0 0.0
    %2778 = vmatpush1.xpose.msra.mxu0 0.0
    %2779 = vmatprep.subr.mxu0 0.0
    %2780 = vmatpush1.xpose.msra.mxu0 0.0
    %2781 = vmatprep.subr.mxu0 0.0
    %2782 = vmatpush1.xpose.msra.mxu0 0.0
    %2783 = vmatprep.subr.mxu0 0.0
    %2784 = vmatpush1.xpose.msra.mxu0 0.0
    %2785 = vmatprep.subr.mxu0 0.0
    %2786 = vmatpush1.xpose.msra.mxu0 0.0
    %2787 = vmatprep.subr.mxu0 0.0
    %2788 = vmatpush1.xpose.msra.mxu0 0.0
    %2789 = vmatprep.subr.mxu0 0.0
    %2790 = vmatpush1.xpose.msra.mxu0 0.0
    %2791 = vmatprep.subr.mxu0 0.0
    %2792 = vmatpush1.xpose.msra.mxu0 0.0
    %2793 = vmatprep.subr.mxu0 0.0
    %2794 = vmatpush1.xpose.msra.mxu0 0.0
    %2795 = vmatprep.subr.mxu0 0.0
    %2796 = vmatpush1.xpose.msra.mxu0 %v2769
    %2797 = vmatprep.subr.mxu0 0.0
    %2798 = vmatpush1.xpose.msra.mxu0 %v2766
    %2799 = vmatprep.subr.mxu0 0.0
    %2800 = vmatpush1.xpose.msra.mxu0 %v2763
    %2801 = vmatprep.subr.mxu0 0.0
    %2802 = vmatpush1.xpose.msra.mxu0 %v2760
    %2803 = vmatprep.subr.mxu0 0.0
    %2804 = vmatpush2.xpose.msra.mxu0 0.0
    %2805 = vmatprep.subr.mxu0 0.0
    %2806 = vmatpush2.xpose.msra.mxu0 0.0
    %2807 = vmatprep.subr.mxu0 0.0
    %2808 = vmatpush2.xpose.msra.mxu0 0.0
    %2809 = vmatprep.subr.mxu0 0.0
    %2810 = vmatpush2.xpose.msra.mxu0 0.0
    %2811 = vmatprep.subr.mxu0 0.0
    %2812 = vmatpush2.xpose.msra.mxu0 0.0
    %2813 = vmatprep.subr.mxu0 0.0
    %2814 = vmatpush2.xpose.msra.mxu0 0.0
    %2815 = vmatprep.subr.mxu0 0.0
    %2816 = vmatpush2.xpose.msra.mxu0 0.0
    %2817 = vmatprep.subr.mxu0 0.0
    %2818 = vmatpush2.xpose.msra.mxu0 0.0
    %2819 = vmatprep.subr.mxu0 0.0
    %2820 = vmatpush2.xpose.msra.mxu0 0.0
    %2821 = vmatprep.subr.mxu0 0.0
    %2822 = vmatpush2.xpose.msra.mxu0 0.0
    %2823 = vmatprep.subr.mxu0 0.0
    %2824 = vmatpush2.xpose.msra.mxu0 0.0
    %2825 = vmatprep.subr.mxu0 0.0
    %2826 = vmatpush2.xpose.msra.mxu0 0.0
    %2827 = vmatprep.subr.mxu0 0.0
    %2828 = vmatpush2.xpose.msra.mxu0 0.0
    %2829 = vmatprep.subr.mxu0 0.0
    %2830 = vmatpush2.xpose.msra.mxu0 0.0
    %2831 = vmatprep.subr.mxu0 0.0
    %2832 = vmatpush2.xpose.msra.mxu0 0.0
    %2833 = vmatprep.subr.mxu0 0.0
    %2834 = vmatpush2.xpose.msra.mxu0 0.0
    %2835 = vmatprep.mubr.f32.mxu0 0.0
    %2836 = vmatmul.mubr.f32.gmra.mxu0 %v2754
    %v2837 = vpop.f32.mrf.mxu0
    %v2838 = vadd.f32 0.0, %v2837
    %v2839 = vpop.f32.mrf.mxu0
    %2840 = vmatprep.mubr.f32.mxu0 0.0
    %2841 = vmatmul.mubr.f32.gmra.mxu0 %v2757
    %v2842 = vpop.f32.mrf.mxu0
    %v2843 = vadd.f32 0.0, %v2842
    %v2844 = vpop.f32.mrf.mxu0
    %2845 = vdwg.mxu0
    %v2846 = vadd.f32 %v2424, %v2838
    %v2847 = vadd.f32 %v2424, %v2843
    %2848 = vrot.lane.b32.xlu0 %v2403, 120
    %v2849 = vpop.permute.xlu0 %2848
    %2850 = vrot.lane.b32.xlu0 %v2403, 88
    %v2851 = vpop.permute.xlu0 %2850
    %v2852 = vsel %vm245, %v2849, 0
    %v2854 = vsel %vm245, %v2851, 0
    %2856 = vmatprep.subr.mxu0 0.0
    %2857 = vmatpush1.xpose.msra.mxu0 0.0
    %2858 = vmatprep.subr.mxu0 0.0
    %2859 = vmatpush1.xpose.msra.mxu0 0.0
    %2860 = vmatprep.subr.mxu0 0.0
    %2861 = vmatpush1.xpose.msra.mxu0 0.0
    %2862 = vmatprep.subr.mxu0 0.0
    %2863 = vmatpush1.xpose.msra.mxu0 0.0
    %2864 = vmatprep.subr.mxu0 0.0
    %2865 = vmatpush1.xpose.msra.mxu0 0.0
    %2866 = vmatprep.subr.mxu0 0.0
    %2867 = vmatpush1.xpose.msra.mxu0 0.0
    %2868 = vmatprep.subr.mxu0 0.0
    %2869 = vmatpush1.xpose.msra.mxu0 0.0
    %2870 = vmatprep.subr.mxu0 0.0
    %2871 = vmatpush1.xpose.msra.mxu0 0.0
    %2872 = vmatprep.subr.mxu0 0.0
    %2873 = vmatpush1.xpose.msra.mxu0 0.0
    %2874 = vmatprep.subr.mxu0 0.0
    %2875 = vmatpush1.xpose.msra.mxu0 0.0
    %2876 = vmatprep.subr.mxu0 0.0
    %2877 = vmatpush1.xpose.msra.mxu0 0.0
    %2878 = vmatprep.subr.mxu0 0.0
    %2879 = vmatpush1.xpose.msra.mxu0 0.0
    %2880 = vmatprep.subr.mxu0 0.0
    %2881 = vmatpush1.xpose.msra.mxu0 0.0
    %2882 = vmatprep.subr.mxu0 0.0
    %2883 = vmatpush1.xpose.msra.mxu0 0.0
    %2884 = vmatprep.subr.mxu0 0.0
    %2885 = vmatpush1.xpose.msra.mxu0 0.0
    %2886 = vmatprep.subr.mxu0 0.0
    %2887 = vmatpush1.xpose.msra.mxu0 %v2854
    %2888 = vmatprep.subr.mxu0 0.0
    %2889 = vmatpush2.xpose.msra.mxu0 0.0
    %2890 = vmatprep.subr.mxu0 0.0
    %2891 = vmatpush2.xpose.msra.mxu0 0.0
    %2892 = vmatprep.subr.mxu0 0.0
    %2893 = vmatpush2.xpose.msra.mxu0 0.0
    %2894 = vmatprep.subr.mxu0 0.0
    %2895 = vmatpush2.xpose.msra.mxu0 0.0
    %2896 = vmatprep.subr.mxu0 0.0
    %2897 = vmatpush2.xpose.msra.mxu0 0.0
    %2898 = vmatprep.subr.mxu0 0.0
    %2899 = vmatpush2.xpose.msra.mxu0 0.0
    %2900 = vmatprep.subr.mxu0 0.0
    %2901 = vmatpush2.xpose.msra.mxu0 0.0
    %2902 = vmatprep.subr.mxu0 0.0
    %2903 = vmatpush2.xpose.msra.mxu0 0.0
    %2904 = vmatprep.subr.mxu0 0.0
    %2905 = vmatpush2.xpose.msra.mxu0 0.0
    %2906 = vmatprep.subr.mxu0 0.0
    %2907 = vmatpush2.xpose.msra.mxu0 0.0
    %2908 = vmatprep.subr.mxu0 0.0
    %2909 = vmatpush2.xpose.msra.mxu0 0.0
    %2910 = vmatprep.subr.mxu0 0.0
    %2911 = vmatpush2.xpose.msra.mxu0 0.0
    %2912 = vmatprep.subr.mxu0 0.0
    %2913 = vmatpush2.xpose.msra.mxu0 0.0
    %2914 = vmatprep.subr.mxu0 0.0
    %2915 = vmatpush2.xpose.msra.mxu0 0.0
    %2916 = vmatprep.subr.mxu0 0.0
    %2917 = vmatpush2.xpose.msra.mxu0 0.0
    %2918 = vmatprep.subr.mxu0 0.0
    %2919 = vmatpush2.xpose.msra.mxu0 0.0
    %2920 = vmatprep.mubr.f32.mxu0 0.0
    %2921 = vmatmul.mubr.f32.gmra.mxu0 %v2852
    %v2922 = vpop.f32.mrf.mxu0
    %v2923 = vadd.f32 %v235, %v2922
    %v2924 = vpop.f32.mrf.mxu0
    %2925 = vdwg.mxu0
    %2926 = vrot.lane.b32.xlu0 %v2408, 120
    %v2927 = vpop.permute.xlu0 %2926
    %2928 = vrot.lane.b32.xlu0 %v2408, 88
    %v2929 = vpop.permute.xlu0 %2928
    %v2930 = vsel %vm245, %v2927, 0
    %v2932 = vsel %vm245, %v2929, 0
    %2934 = vmatprep.subr.mxu0 0.0
    %2935 = vmatpush1.xpose.msra.mxu0 0.0
    %2936 = vmatprep.subr.mxu0 0.0
    %2937 = vmatpush1.xpose.msra.mxu0 0.0
    %2938 = vmatprep.subr.mxu0 0.0
    %2939 = vmatpush1.xpose.msra.mxu0 0.0
    %2940 = vmatprep.subr.mxu0 0.0
    %2941 = vmatpush1.xpose.msra.mxu0 0.0
    %2942 = vmatprep.subr.mxu0 0.0
    %2943 = vmatpush1.xpose.msra.mxu0 0.0
    %2944 = vmatprep.subr.mxu0 0.0
    %2945 = vmatpush1.xpose.msra.mxu0 0.0
    %2946 = vmatprep.subr.mxu0 0.0
    %2947 = vmatpush1.xpose.msra.mxu0 0.0
    %2948 = vmatprep.subr.mxu0 0.0
    %2949 = vmatpush1.xpose.msra.mxu0 0.0
    %2950 = vmatprep.subr.mxu0 0.0
    %2951 = vmatpush1.xpose.msra.mxu0 0.0
    %2952 = vmatprep.subr.mxu0 0.0
    %2953 = vmatpush1.xpose.msra.mxu0 0.0
    %2954 = vmatprep.subr.mxu0 0.0
    %2955 = vmatpush1.xpose.msra.mxu0 0.0
    %2956 = vmatprep.subr.mxu0 0.0
    %2957 = vmatpush1.xpose.msra.mxu0 0.0
    %2958 = vmatprep.subr.mxu0 0.0
    %2959 = vmatpush1.xpose.msra.mxu0 0.0
    %2960 = vmatprep.subr.mxu0 0.0
    %2961 = vmatpush1.xpose.msra.mxu0 0.0
    %2962 = vmatprep.subr.mxu0 0.0
    %2963 = vmatpush1.xpose.msra.mxu0 0.0
    %2964 = vmatprep.subr.mxu0 0.0
    %2965 = vmatpush1.xpose.msra.mxu0 %v2932
    %2966 = vmatprep.subr.mxu0 0.0
    %2967 = vmatpush2.xpose.msra.mxu0 0.0
    %2968 = vmatprep.subr.mxu0 0.0
    %2969 = vmatpush2.xpose.msra.mxu0 0.0
    %2970 = vmatprep.subr.mxu0 0.0
    %2971 = vmatpush2.xpose.msra.mxu0 0.0
    %2972 = vmatprep.subr.mxu0 0.0
    %2973 = vmatpush2.xpose.msra.mxu0 0.0
    %2974 = vmatprep.subr.mxu0 0.0
    %2975 = vmatpush2.xpose.msra.mxu0 0.0
    %2976 = vmatprep.subr.mxu0 0.0
    %2977 = vmatpush2.xpose.msra.mxu0 0.0
    %2978 = vmatprep.subr.mxu0 0.0
    %2979 = vmatpush2.xpose.msra.mxu0 0.0
    %2980 = vmatprep.subr.mxu0 0.0
    %2981 = vmatpush2.xpose.msra.mxu0 0.0
    %2982 = vmatprep.subr.mxu0 0.0
    %2983 = vmatpush2.xpose.msra.mxu0 0.0
    %2984 = vmatprep.subr.mxu0 0.0
    %2985 = vmatpush2.xpose.msra.mxu0 0.0
    %2986 = vmatprep.subr.mxu0 0.0
    %2987 = vmatpush2.xpose.msra.mxu0 0.0
    %2988 = vmatprep.subr.mxu0 0.0
    %2989 = vmatpush2.xpose.msra.mxu0 0.0
    %2990 = vmatprep.subr.mxu0 0.0
    %2991 = vmatpush2.xpose.msra.mxu0 0.0
    %2992 = vmatprep.subr.mxu0 0.0
    %2993 = vmatpush2.xpose.msra.mxu0 0.0
    %2994 = vmatprep.subr.mxu0 0.0
    %2995 = vmatpush2.xpose.msra.mxu0 0.0
    %2996 = vmatprep.subr.mxu0 0.0
    %2997 = vmatpush2.xpose.msra.mxu0 0.0
    %2998 = vmatprep.mubr.f32.mxu0 0.0
    %2999 = vmatmul.mubr.f32.gmra.mxu0 %v2930
    %v3000 = vpop.f32.mrf.mxu0
    %v3001 = vadd.f32 %v239, %v3000
    %v3002 = vpop.f32.mrf.mxu0
    %3003 = vdwg.mxu0
    %v3004 = vsel %vm245, %v2923, -inf
    %3005 = vmax.xlane.f32.xlu0 %v3004
    %v3006 = vpop.xlane.xlu0 %3005
    %v3007 = vsel %vm245, %v3001, -inf
    %3008 = vmax.xlane.f32.xlu0 %v3007
    %v3009 = vpop.xlane.xlu0 %3008
    %v3010 = vsub.f32 %v2923, %v3006
    %v3011 = vsub.f32 %v3001, %v3009
    %v3012 = vmul.f32 %v3010, 1.442695
    %v3013 = vpow.pop %v3012
    %v3014 = vmul.f32 %v3011, 1.442695
    %v3015 = vpow.pop %v3014
    %v3016 = vsel %vm245, %v3013, 0.0
    %3017 = vadd.xlane.f32.xlu0 %v3016
    %v3018 = vpop.xlane.xlu0 %3017
    %v3019 = vsel %vm245, %v3015, 0.0
    %3020 = vadd.xlane.f32.xlu0 %v3019
    %v3021 = vpop.xlane.xlu0 %3020
    %v3022 = vrcp.pop %v3018
    %v3023 = vrcp.pop %v3021
    %v3024 = vmul.f32 %v3013, %v3022
    %v3025 = vmul.f32 %v3015, %v3023
    %3026 = vrot.lane.b32.xlu0 %v2403, 56
    %v3027 = vpop.permute.xlu0 %3026
    %v3030 = vsel %vm245, %v3024, 0
    %3032 = vmatprep.subr.mxu0 0.0
    %3033 = vmatpush1.msra.mxu0 0.0
    %3034 = vmatprep.subr.mxu0 0.0
    %3035 = vmatpush1.msra.mxu0 0.0
    %3036 = vmatprep.subr.mxu0 0.0
    %3037 = vmatpush1.msra.mxu0 0.0
    %3038 = vmatprep.subr.mxu0 0.0
    %3039 = vmatpush1.msra.mxu0 0.0
    %3040 = vmatprep.subr.mxu0 0.0
    %3041 = vmatpush1.msra.mxu0 0.0
    %3042 = vmatprep.subr.mxu0 0.0
    %3043 = vmatpush1.msra.mxu0 0.0
    %3044 = vmatprep.subr.mxu0 0.0
    %3045 = vmatpush1.msra.mxu0 0.0
    %3046 = vmatprep.subr.mxu0 0.0
    %3047 = vmatpush1.msra.mxu0 0.0
    %3048 = vmatprep.subr.mxu0 0.0
    %3049 = vmatpush1.msra.mxu0 0.0
    %3050 = vmatprep.subr.mxu0 0.0
    %3051 = vmatpush1.msra.mxu0 0.0
    %3052 = vmatprep.subr.mxu0 0.0
    %3053 = vmatpush1.msra.mxu0 0.0
    %3054 = vmatprep.subr.mxu0 0.0
    %3055 = vmatpush1.msra.mxu0 0.0
    %3056 = vmatprep.subr.mxu0 0.0
    %3057 = vmatpush1.msra.mxu0 0.0
    %3058 = vmatprep.subr.mxu0 0.0
    %3059 = vmatpush1.msra.mxu0 0.0
    %3060 = vmatprep.subr.mxu0 0.0
    %3061 = vmatpush1.msra.mxu0 0.0
    %3062 = vmatprep.subr.mxu0 0.0
    %3063 = vmatpush1.msra.mxu0 %v3027
    %3064 = vmatprep.subr.mxu0 0.0
    %3065 = vmatpush2.msra.mxu0 0.0
    %3066 = vmatprep.subr.mxu0 0.0
    %3067 = vmatpush2.msra.mxu0 0.0
    %3068 = vmatprep.subr.mxu0 0.0
    %3069 = vmatpush2.msra.mxu0 0.0
    %3070 = vmatprep.subr.mxu0 0.0
    %3071 = vmatpush2.msra.mxu0 0.0
    %3072 = vmatprep.subr.mxu0 0.0
    %3073 = vmatpush2.msra.mxu0 0.0
    %3074 = vmatprep.subr.mxu0 0.0
    %3075 = vmatpush2.msra.mxu0 0.0
    %3076 = vmatprep.subr.mxu0 0.0
    %3077 = vmatpush2.msra.mxu0 0.0
    %3078 = vmatprep.subr.mxu0 0.0
    %3079 = vmatpush2.msra.mxu0 0.0
    %3080 = vmatprep.subr.mxu0 0.0
    %3081 = vmatpush2.msra.mxu0 0.0
    %3082 = vmatprep.subr.mxu0 0.0
    %3083 = vmatpush2.msra.mxu0 0.0
    %3084 = vmatprep.subr.mxu0 0.0
    %3085 = vmatpush2.msra.mxu0 0.0
    %3086 = vmatprep.subr.mxu0 0.0
    %3087 = vmatpush2.msra.mxu0 0.0
    %3088 = vmatprep.subr.mxu0 0.0
    %3089 = vmatpush2.msra.mxu0 0.0
    %3090 = vmatprep.subr.mxu0 0.0
    %3091 = vmatpush2.msra.mxu0 0.0
    %3092 = vmatprep.subr.mxu0 0.0
    %3093 = vmatpush2.msra.mxu0 0.0
    %3094 = vmatprep.subr.mxu0 0.0
    %3095 = vmatpush2.msra.mxu0 0.0
    %3096 = vmatprep.mubr.f32.mxu0 0.0
    %3097 = vmatmul.mubr.f32.gmra.mxu0 %v3030
    %v3098 = vpop.f32.mrf.mxu0
    %v3099 = vadd.f32 0.0, %v3098
    %v3100 = vpop.f32.mrf.mxu0
    %3101 = vdwg.mxu0
    %3102 = vrot.lane.b32.xlu0 %v2408, 56
    %v3103 = vpop.permute.xlu0 %3102
    %v3106 = vsel %vm245, %v3025, 0
    %3108 = vmatprep.subr.mxu0 0.0
    %3109 = vmatpush1.msra.mxu0 0.0
    %3110 = vmatprep.subr.mxu0 0.0
    %3111 = vmatpush1.msra.mxu0 0.0
    %3112 = vmatprep.subr.mxu0 0.0
    %3113 = vmatpush1.msra.mxu0 0.0
    %3114 = vmatprep.subr.mxu0 0.0
    %3115 = vmatpush1.msra.mxu0 0.0
    %3116 = vmatprep.subr.mxu0 0.0
    %3117 = vmatpush1.msra.mxu0 0.0
    %3118 = vmatprep.subr.mxu0 0.0
    %3119 = vmatpush1.msra.mxu0 0.0
    %3120 = vmatprep.subr.mxu0 0.0
    %3121 = vmatpush1.msra.mxu0 0.0
    %3122 = vmatprep.subr.mxu0 0.0
    %3123 = vmatpush1.msra.mxu0 0.0
    %3124 = vmatprep.subr.mxu0 0.0
    %3125 = vmatpush1.msra.mxu0 0.0
    %3126 = vmatprep.subr.mxu0 0.0
    %3127 = vmatpush1.msra.mxu0 0.0
    %3128 = vmatprep.subr.mxu0 0.0
    %3129 = vmatpush1.msra.mxu0 0.0
    %3130 = vmatprep.subr.mxu0 0.0
    %3131 = vmatpush1.msra.mxu0 0.0
    %3132 = vmatprep.subr.mxu0 0.0
    %3133 = vmatpush1.msra.mxu0 0.0
    %3134 = vmatprep.subr.mxu0 0.0
    %3135 = vmatpush1.msra.mxu0 0.0
    %3136 = vmatprep.subr.mxu0 0.0
    %3137 = vmatpush1.msra.mxu0 0.0
    %3138 = vmatprep.subr.mxu0 0.0
    %3139 = vmatpush1.msra.mxu0 %v3103
    %3140 = vmatprep.subr.mxu0 0.0
    %3141 = vmatpush2.msra.mxu0 0.0
    %3142 = vmatprep.subr.mxu0 0.0
    %3143 = vmatpush2.msra.mxu0 0.0
    %3144 = vmatprep.subr.mxu0 0.0
    %3145 = vmatpush2.msra.mxu0 0.0
    %3146 = vmatprep.subr.mxu0 0.0
    %3147 = vmatpush2.msra.mxu0 0.0
    %3148 = vmatprep.subr.mxu0 0.0
    %3149 = vmatpush2.msra.mxu0 0.0
    %3150 = vmatprep.subr.mxu0 0.0
    %3151 = vmatpush2.msra.mxu0 0.0
    %3152 = vmatprep.subr.mxu0 0.0
    %3153 = vmatpush2.msra.mxu0 0.0
    %3154 = vmatprep.subr.mxu0 0.0
    %3155 = vmatpush2.msra.mxu0 0.0
    %3156 = vmatprep.subr.mxu0 0.0
    %3157 = vmatpush2.msra.mxu0 0.0
    %3158 = vmatprep.subr.mxu0 0.0
    %3159 = vmatpush2.msra.mxu0 0.0
    %3160 = vmatprep.subr.mxu0 0.0
    %3161 = vmatpush2.msra.mxu0 0.0
    %3162 = vmatprep.subr.mxu0 0.0
    %3163 = vmatpush2.msra.mxu0 0.0
    %3164 = vmatprep.subr.mxu0 0.0
    %3165 = vmatpush2.msra.mxu0 0.0
    %3166 = vmatprep.subr.mxu0 0.0
    %3167 = vmatpush2.msra.mxu0 0.0
    %3168 = vmatprep.subr.mxu0 0.0
    %3169 = vmatpush2.msra.mxu0 0.0
    %3170 = vmatprep.subr.mxu0 0.0
    %3171 = vmatpush2.msra.mxu0 0.0
    %3172 = vmatprep.mubr.f32.mxu0 0.0
    %3173 = vmatmul.mubr.f32.gmra.mxu0 %v3106
    %v3174 = vpop.f32.mrf.mxu0
    %v3175 = vadd.f32 0.0, %v3174
    %v3176 = vpop.f32.mrf.mxu0
    %3177 = vdwg.mxu0
    %3178 = vrot.lane.b32.xlu0 %v2412, 120
    %v3179 = vpop.permute.xlu0 %3178
    %3180 = vrot.lane.b32.xlu0 %v2413, 120
    %v3181 = vpop.permute.xlu0 %3180
    %3182 = vrot.lane.b32.xlu0 %v2414, 120
    %v3183 = vpop.permute.xlu0 %3182
    %3184 = vrot.lane.b32.xlu0 %v2415, 120
    %v3185 = vpop.permute.xlu0 %3184
    %v3187 = vsel %vm245, %v3099, 0
    %v3190 = vsel %vm245, %v3175, 0
    %v3192 = vsel %vm245, %v3179, 0
    %v3194 = vsel %vm245, %v3181, 0
    %v3196 = vsel %vm245, %v3183, 0
    %v3198 = vsel %vm245, %v3185, 0
    %3200 = vmatprep.subr.mxu0 0.0
    %3201 = vmatpush1.xpose.msra.mxu0 0.0
    %3202 = vmatprep.subr.mxu0 0.0
    %3203 = vmatpush1.xpose.msra.mxu0 0.0
    %3204 = vmatprep.subr.mxu0 0.0
    %3205 = vmatpush1.xpose.msra.mxu0 0.0
    %3206 = vmatprep.subr.mxu0 0.0
    %3207 = vmatpush1.xpose.msra.mxu0 0.0
    %3208 = vmatprep.subr.mxu0 0.0
    %3209 = vmatpush1.xpose.msra.mxu0 0.0
    %3210 = vmatprep.subr.mxu0 0.0
    %3211 = vmatpush1.xpose.msra.mxu0 0.0
    %3212 = vmatprep.subr.mxu0 0.0
    %3213 = vmatpush1.xpose.msra.mxu0 0.0
    %3214 = vmatprep.subr.mxu0 0.0
    %3215 = vmatpush1.xpose.msra.mxu0 0.0
    %3216 = vmatprep.subr.mxu0 0.0
    %3217 = vmatpush1.xpose.msra.mxu0 0.0
    %3218 = vmatprep.subr.mxu0 0.0
    %3219 = vmatpush1.xpose.msra.mxu0 0.0
    %3220 = vmatprep.subr.mxu0 0.0
    %3221 = vmatpush1.xpose.msra.mxu0 0.0
    %3222 = vmatprep.subr.mxu0 0.0
    %3223 = vmatpush1.xpose.msra.mxu0 0.0
    %3224 = vmatprep.subr.mxu0 0.0
    %3225 = vmatpush1.xpose.msra.mxu0 %v3198
    %3226 = vmatprep.subr.mxu0 0.0
    %3227 = vmatpush1.xpose.msra.mxu0 %v3196
    %3228 = vmatprep.subr.mxu0 0.0
    %3229 = vmatpush1.xpose.msra.mxu0 %v3194
    %3230 = vmatprep.subr.mxu0 0.0
    %3231 = vmatpush1.xpose.msra.mxu0 %v3192
    %3232 = vmatprep.subr.mxu0 0.0
    %3233 = vmatpush2.xpose.msra.mxu0 0.0
    %3234 = vmatprep.subr.mxu0 0.0
    %3235 = vmatpush2.xpose.msra.mxu0 0.0
    %3236 = vmatprep.subr.mxu0 0.0
    %3237 = vmatpush2.xpose.msra.mxu0 0.0
    %3238 = vmatprep.subr.mxu0 0.0
    %3239 = vmatpush2.xpose.msra.mxu0 0.0
    %3240 = vmatprep.subr.mxu0 0.0
    %3241 = vmatpush2.xpose.msra.mxu0 0.0
    %3242 = vmatprep.subr.mxu0 0.0
    %3243 = vmatpush2.xpose.msra.mxu0 0.0
    %3244 = vmatprep.subr.mxu0 0.0
    %3245 = vmatpush2.xpose.msra.mxu0 0.0
    %3246 = vmatprep.subr.mxu0 0.0
    %3247 = vmatpush2.xpose.msra.mxu0 0.0
    %3248 = vmatprep.subr.mxu0 0.0
    %3249 = vmatpush2.xpose.msra.mxu0 0.0
    %3250 = vmatprep.subr.mxu0 0.0
    %3251 = vmatpush2.xpose.msra.mxu0 0.0
    %3252 = vmatprep.subr.mxu0 0.0
    %3253 = vmatpush2.xpose.msra.mxu0 0.0
    %3254 = vmatprep.subr.mxu0 0.0
    %3255 = vmatpush2.xpose.msra.mxu0 0.0
    %3256 = vmatprep.subr.mxu0 0.0
    %3257 = vmatpush2.xpose.msra.mxu0 0.0
    %3258 = vmatprep.subr.mxu0 0.0
    %3259 = vmatpush2.xpose.msra.mxu0 0.0
    %3260 = vmatprep.subr.mxu0 0.0
    %3261 = vmatpush2.xpose.msra.mxu0 0.0
    %3262 = vmatprep.subr.mxu0 0.0
    %3263 = vmatpush2.xpose.msra.mxu0 0.0
    %3264 = vmatprep.mubr.f32.mxu0 0.0
    %3265 = vmatmul.mubr.f32.gmra.mxu0 %v3187
    %v3266 = vpop.f32.mrf.mxu0
    %v3267 = vadd.f32 0.0, %v3266
    %v3268 = vpop.f32.mrf.mxu0
    %3269 = vmatprep.mubr.f32.mxu0 0.0
    %3270 = vmatmul.mubr.f32.gmra.mxu0 %v3190
    %v3271 = vpop.f32.mrf.mxu0
    %v3272 = vadd.f32 0.0, %v3271
    %v3273 = vpop.f32.mrf.mxu0
    %3274 = vdwg.mxu0
    %v3275 = vadd.f32 %v2846, %v3267
    %v3276 = vadd.f32 %v2847, %v3272
    %3277 = vrot.lane.b32.xlu0 %v2403, 112
    %v3278 = vpop.permute.xlu0 %3277
    %3279 = vrot.lane.b32.xlu0 %v2403, 80
    %v3280 = vpop.permute.xlu0 %3279
    %v3281 = vsel %vm245, %v3278, 0
    %v3283 = vsel %vm245, %v3280, 0
    %3285 = vmatprep.subr.mxu0 0.0
    %3286 = vmatpush1.xpose.msra.mxu0 0.0
    %3287 = vmatprep.subr.mxu0 0.0
    %3288 = vmatpush1.xpose.msra.mxu0 0.0
    %3289 = vmatprep.subr.mxu0 0.0
    %3290 = vmatpush1.xpose.msra.mxu0 0.0
    %3291 = vmatprep.subr.mxu0 0.0
    %3292 = vmatpush1.xpose.msra.mxu0 0.0
    %3293 = vmatprep.subr.mxu0 0.0
    %3294 = vmatpush1.xpose.msra.mxu0 0.0
    %3295 = vmatprep.subr.mxu0 0.0
    %3296 = vmatpush1.xpose.msra.mxu0 0.0
    %3297 = vmatprep.subr.mxu0 0.0
    %3298 = vmatpush1.xpose.msra.mxu0 0.0
    %3299 = vmatprep.subr.mxu0 0.0
    %3300 = vmatpush1.xpose.msra.mxu0 0.0
    %3301 = vmatprep.subr.mxu0 0.0
    %3302 = vmatpush1.xpose.msra.mxu0 0.0
    %3303 = vmatprep.subr.mxu0 0.0
    %3304 = vmatpush1.xpose.msra.mxu0 0.0
    %3305 = vmatprep.subr.mxu0 0.0
    %3306 = vmatpush1.xpose.msra.mxu0 0.0
    %3307 = vmatprep.subr.mxu0 0.0
    %3308 = vmatpush1.xpose.msra.mxu0 0.0
    %3309 = vmatprep.subr.mxu0 0.0
    %3310 = vmatpush1.xpose.msra.mxu0 0.0
    %3311 = vmatprep.subr.mxu0 0.0
    %3312 = vmatpush1.xpose.msra.mxu0 0.0
    %3313 = vmatprep.subr.mxu0 0.0
    %3314 = vmatpush1.xpose.msra.mxu0 0.0
    %3315 = vmatprep.subr.mxu0 0.0
    %3316 = vmatpush1.xpose.msra.mxu0 %v3283
    %3317 = vmatprep.subr.mxu0 0.0
    %3318 = vmatpush2.xpose.msra.mxu0 0.0
    %3319 = vmatprep.subr.mxu0 0.0
    %3320 = vmatpush2.xpose.msra.mxu0 0.0
    %3321 = vmatprep.subr.mxu0 0.0
    %3322 = vmatpush2.xpose.msra.mxu0 0.0
    %3323 = vmatprep.subr.mxu0 0.0
    %3324 = vmatpush2.xpose.msra.mxu0 0.0
    %3325 = vmatprep.subr.mxu0 0.0
    %3326 = vmatpush2.xpose.msra.mxu0 0.0
    %3327 = vmatprep.subr.mxu0 0.0
    %3328 = vmatpush2.xpose.msra.mxu0 0.0
    %3329 = vmatprep.subr.mxu0 0.0
    %3330 = vmatpush2.xpose.msra.mxu0 0.0
    %3331 = vmatprep.subr.mxu0 0.0
    %3332 = vmatpush2.xpose.msra.mxu0 0.0
    %3333 = vmatprep.subr.mxu0 0.0
    %3334 = vmatpush2.xpose.msra.mxu0 0.0
    %3335 = vmatprep.subr.mxu0 0.0
    %3336 = vmatpush2.xpose.msra.mxu0 0.0
    %3337 = vmatprep.subr.mxu0 0.0
    %3338 = vmatpush2.xpose.msra.mxu0 0.0
    %3339 = vmatprep.subr.mxu0 0.0
    %3340 = vmatpush2.xpose.msra.mxu0 0.0
    %3341 = vmatprep.subr.mxu0 0.0
    %3342 = vmatpush2.xpose.msra.mxu0 0.0
    %3343 = vmatprep.subr.mxu0 0.0
    %3344 = vmatpush2.xpose.msra.mxu0 0.0
    %3345 = vmatprep.subr.mxu0 0.0
    %3346 = vmatpush2.xpose.msra.mxu0 0.0
    %3347 = vmatprep.subr.mxu0 0.0
    %3348 = vmatpush2.xpose.msra.mxu0 0.0
    %3349 = vmatprep.mubr.f32.mxu0 0.0
    %3350 = vmatmul.mubr.f32.gmra.mxu0 %v3281
    %v3351 = vpop.f32.mrf.mxu0
    %v3352 = vadd.f32 %v235, %v3351
    %v3353 = vpop.f32.mrf.mxu0
    %3354 = vdwg.mxu0
    %3355 = vrot.lane.b32.xlu0 %v2408, 112
    %v3356 = vpop.permute.xlu0 %3355
    %3357 = vrot.lane.b32.xlu0 %v2408, 80
    %v3358 = vpop.permute.xlu0 %3357
    %v3359 = vsel %vm245, %v3356, 0
    %v3361 = vsel %vm245, %v3358, 0
    %3363 = vmatprep.subr.mxu0 0.0
    %3364 = vmatpush1.xpose.msra.mxu0 0.0
    %3365 = vmatprep.subr.mxu0 0.0
    %3366 = vmatpush1.xpose.msra.mxu0 0.0
    %3367 = vmatprep.subr.mxu0 0.0
    %3368 = vmatpush1.xpose.msra.mxu0 0.0
    %3369 = vmatprep.subr.mxu0 0.0
    %3370 = vmatpush1.xpose.msra.mxu0 0.0
    %3371 = vmatprep.subr.mxu0 0.0
    %3372 = vmatpush1.xpose.msra.mxu0 0.0
    %3373 = vmatprep.subr.mxu0 0.0
    %3374 = vmatpush1.xpose.msra.mxu0 0.0
    %3375 = vmatprep.subr.mxu0 0.0
    %3376 = vmatpush1.xpose.msra.mxu0 0.0
    %3377 = vmatprep.subr.mxu0 0.0
    %3378 = vmatpush1.xpose.msra.mxu0 0.0
    %3379 = vmatprep.subr.mxu0 0.0
    %3380 = vmatpush1.xpose.msra.mxu0 0.0
    %3381 = vmatprep.subr.mxu0 0.0
    %3382 = vmatpush1.xpose.msra.mxu0 0.0
    %3383 = vmatprep.subr.mxu0 0.0
    %3384 = vmatpush1.xpose.msra.mxu0 0.0
    %3385 = vmatprep.subr.mxu0 0.0
    %3386 = vmatpush1.xpose.msra.mxu0 0.0
    %3387 = vmatprep.subr.mxu0 0.0
    %3388 = vmatpush1.xpose.msra.mxu0 0.0
    %3389 = vmatprep.subr.mxu0 0.0
    %3390 = vmatpush1.xpose.msra.mxu0 0.0
    %3391 = vmatprep.subr.mxu0 0.0
    %3392 = vmatpush1.xpose.msra.mxu0 0.0
    %3393 = vmatprep.subr.mxu0 0.0
    %3394 = vmatpush1.xpose.msra.mxu0 %v3361
    %3395 = vmatprep.subr.mxu0 0.0
    %3396 = vmatpush2.xpose.msra.mxu0 0.0
    %3397 = vmatprep.subr.mxu0 0.0
    %3398 = vmatpush2.xpose.msra.mxu0 0.0
    %3399 = vmatprep.subr.mxu0 0.0
    %3400 = vmatpush2.xpose.msra.mxu0 0.0
    %3401 = vmatprep.subr.mxu0 0.0
    %3402 = vmatpush2.xpose.msra.mxu0 0.0
    %3403 = vmatprep.subr.mxu0 0.0
    %3404 = vmatpush2.xpose.msra.mxu0 0.0
    %3405 = vmatprep.subr.mxu0 0.0
    %3406 = vmatpush2.xpose.msra.mxu0 0.0
    %3407 = vmatprep.subr.mxu0 0.0
    %3408 = vmatpush2.xpose.msra.mxu0 0.0
    %3409 = vmatprep.subr.mxu0 0.0
    %3410 = vmatpush2.xpose.msra.mxu0 0.0
    %3411 = vmatprep.subr.mxu0 0.0
    %3412 = vmatpush2.xpose.msra.mxu0 0.0
    %3413 = vmatprep.subr.mxu0 0.0
    %3414 = vmatpush2.xpose.msra.mxu0 0.0
    %3415 = vmatprep.subr.mxu0 0.0
    %3416 = vmatpush2.xpose.msra.mxu0 0.0
    %3417 = vmatprep.subr.mxu0 0.0
    %3418 = vmatpush2.xpose.msra.mxu0 0.0
    %3419 = vmatprep.subr.mxu0 0.0
    %3420 = vmatpush2.xpose.msra.mxu0 0.0
    %3421 = vmatprep.subr.mxu0 0.0
    %3422 = vmatpush2.xpose.msra.mxu0 0.0
    %3423 = vmatprep.subr.mxu0 0.0
    %3424 = vmatpush2.xpose.msra.mxu0 0.0
    %3425 = vmatprep.subr.mxu0 0.0
    %3426 = vmatpush2.xpose.msra.mxu0 0.0
    %3427 = vmatprep.mubr.f32.mxu0 0.0
    %3428 = vmatmul.mubr.f32.gmra.mxu0 %v3359
    %v3429 = vpop.f32.mrf.mxu0
    %v3430 = vadd.f32 %v239, %v3429
    %v3431 = vpop.f32.mrf.mxu0
    %3432 = vdwg.mxu0
    %v3433 = vsel %vm245, %v3352, -inf
    %3434 = vmax.xlane.f32.xlu0 %v3433
    %v3435 = vpop.xlane.xlu0 %3434
    %v3436 = vsel %vm245, %v3430, -inf
    %3437 = vmax.xlane.f32.xlu0 %v3436
    %v3438 = vpop.xlane.xlu0 %3437
    %v3439 = vsub.f32 %v3352, %v3435
    %v3440 = vsub.f32 %v3430, %v3438
    %v3441 = vmul.f32 %v3439, 1.442695
    %v3442 = vpow.pop %v3441
    %v3443 = vmul.f32 %v3440, 1.442695
    %v3444 = vpow.pop %v3443
    %v3445 = vsel %vm245, %v3442, 0.0
    %3446 = vadd.xlane.f32.xlu0 %v3445
    %v3447 = vpop.xlane.xlu0 %3446
    %v3448 = vsel %vm245, %v3444, 0.0
    %3449 = vadd.xlane.f32.xlu0 %v3448
    %v3450 = vpop.xlane.xlu0 %3449
    %v3451 = vrcp.pop %v3447
    %v3452 = vrcp.pop %v3450
    %v3453 = vmul.f32 %v3442, %v3451
    %v3454 = vmul.f32 %v3444, %v3452
    %3455 = vrot.lane.b32.xlu0 %v2403, 48
    %v3456 = vpop.permute.xlu0 %3455
    %v3459 = vsel %vm245, %v3453, 0
    %3461 = vmatprep.subr.mxu0 0.0
    %3462 = vmatpush1.msra.mxu0 0.0
    %3463 = vmatprep.subr.mxu0 0.0
    %3464 = vmatpush1.msra.mxu0 0.0
    %3465 = vmatprep.subr.mxu0 0.0
    %3466 = vmatpush1.msra.mxu0 0.0
    %3467 = vmatprep.subr.mxu0 0.0
    %3468 = vmatpush1.msra.mxu0 0.0
    %3469 = vmatprep.subr.mxu0 0.0
    %3470 = vmatpush1.msra.mxu0 0.0
    %3471 = vmatprep.subr.mxu0 0.0
    %3472 = vmatpush1.msra.mxu0 0.0
    %3473 = vmatprep.subr.mxu0 0.0
    %3474 = vmatpush1.msra.mxu0 0.0
    %3475 = vmatprep.subr.mxu0 0.0
    %3476 = vmatpush1.msra.mxu0 0.0
    %3477 = vmatprep.subr.mxu0 0.0
    %3478 = vmatpush1.msra.mxu0 0.0
    %3479 = vmatprep.subr.mxu0 0.0
    %3480 = vmatpush1.msra.mxu0 0.0
    %3481 = vmatprep.subr.mxu0 0.0
    %3482 = vmatpush1.msra.mxu0 0.0
    %3483 = vmatprep.subr.mxu0 0.0
    %3484 = vmatpush1.msra.mxu0 0.0
    %3485 = vmatprep.subr.mxu0 0.0
    %3486 = vmatpush1.msra.mxu0 0.0
    %3487 = vmatprep.subr.mxu0 0.0
    %3488 = vmatpush1.msra.mxu0 0.0
    %3489 = vmatprep.subr.mxu0 0.0
    %3490 = vmatpush1.msra.mxu0 0.0
    %3491 = vmatprep.subr.mxu0 0.0
    %3492 = vmatpush1.msra.mxu0 %v3456
    %3493 = vmatprep.subr.mxu0 0.0
    %3494 = vmatpush2.msra.mxu0 0.0
    %3495 = vmatprep.subr.mxu0 0.0
    %3496 = vmatpush2.msra.mxu0 0.0
    %3497 = vmatprep.subr.mxu0 0.0
    %3498 = vmatpush2.msra.mxu0 0.0
    %3499 = vmatprep.subr.mxu0 0.0
    %3500 = vmatpush2.msra.mxu0 0.0
    %3501 = vmatprep.subr.mxu0 0.0
    %3502 = vmatpush2.msra.mxu0 0.0
    %3503 = vmatprep.subr.mxu0 0.0
    %3504 = vmatpush2.msra.mxu0 0.0
    %3505 = vmatprep.subr.mxu0 0.0
    %3506 = vmatpush2.msra.mxu0 0.0
    %3507 = vmatprep.subr.mxu0 0.0
    %3508 = vmatpush2.msra.mxu0 0.0
    %3509 = vmatprep.subr.mxu0 0.0
    %3510 = vmatpush2.msra.mxu0 0.0
    %3511 = vmatprep.subr.mxu0 0.0
    %3512 = vmatpush2.msra.mxu0 0.0
    %3513 = vmatprep.subr.mxu0 0.0
    %3514 = vmatpush2.msra.mxu0 0.0
    %3515 = vmatprep.subr.mxu0 0.0
    %3516 = vmatpush2.msra.mxu0 0.0
    %3517 = vmatprep.subr.mxu0 0.0
    %3518 = vmatpush2.msra.mxu0 0.0
    %3519 = vmatprep.subr.mxu0 0.0
    %3520 = vmatpush2.msra.mxu0 0.0
    %3521 = vmatprep.subr.mxu0 0.0
    %3522 = vmatpush2.msra.mxu0 0.0
    %3523 = vmatprep.subr.mxu0 0.0
    %3524 = vmatpush2.msra.mxu0 0.0
    %3525 = vmatprep.mubr.f32.mxu0 0.0
    %3526 = vmatmul.mubr.f32.gmra.mxu0 %v3459
    %v3527 = vpop.f32.mrf.mxu0
    %v3528 = vadd.f32 0.0, %v3527
    %v3529 = vpop.f32.mrf.mxu0
    %3530 = vdwg.mxu0
    %3531 = vrot.lane.b32.xlu0 %v2408, 48
    %v3532 = vpop.permute.xlu0 %3531
    %v3535 = vsel %vm245, %v3454, 0
    %3537 = vmatprep.subr.mxu0 0.0
    %3538 = vmatpush1.msra.mxu0 0.0
    %3539 = vmatprep.subr.mxu0 0.0
    %3540 = vmatpush1.msra.mxu0 0.0
    %3541 = vmatprep.subr.mxu0 0.0
    %3542 = vmatpush1.msra.mxu0 0.0
    %3543 = vmatprep.subr.mxu0 0.0
    %3544 = vmatpush1.msra.mxu0 0.0
    %3545 = vmatprep.subr.mxu0 0.0
    %3546 = vmatpush1.msra.mxu0 0.0
    %3547 = vmatprep.subr.mxu0 0.0
    %3548 = vmatpush1.msra.mxu0 0.0
    %3549 = vmatprep.subr.mxu0 0.0
    %3550 = vmatpush1.msra.mxu0 0.0
    %3551 = vmatprep.subr.mxu0 0.0
    %3552 = vmatpush1.msra.mxu0 0.0
    %3553 = vmatprep.subr.mxu0 0.0
    %3554 = vmatpush1.msra.mxu0 0.0
    %3555 = vmatprep.subr.mxu0 0.0
    %3556 = vmatpush1.msra.mxu0 0.0
    %3557 = vmatprep.subr.mxu0 0.0
    %3558 = vmatpush1.msra.mxu0 0.0
    %3559 = vmatprep.subr.mxu0 0.0
    %3560 = vmatpush1.msra.mxu0 0.0
    %3561 = vmatprep.subr.mxu0 0.0
    %3562 = vmatpush1.msra.mxu0 0.0
    %3563 = vmatprep.subr.mxu0 0.0
    %3564 = vmatpush1.msra.mxu0 0.0
    %3565 = vmatprep.subr.mxu0 0.0
    %3566 = vmatpush1.msra.mxu0 0.0
    %3567 = vmatprep.subr.mxu0 0.0
    %3568 = vmatpush1.msra.mxu0 %v3532
    %3569 = vmatprep.subr.mxu0 0.0
    %3570 = vmatpush2.msra.mxu0 0.0
    %3571 = vmatprep.subr.mxu0 0.0
    %3572 = vmatpush2.msra.mxu0 0.0
    %3573 = vmatprep.subr.mxu0 0.0
    %3574 = vmatpush2.msra.mxu0 0.0
    %3575 = vmatprep.subr.mxu0 0.0
    %3576 = vmatpush2.msra.mxu0 0.0
    %3577 = vmatprep.subr.mxu0 0.0
    %3578 = vmatpush2.msra.mxu0 0.0
    %3579 = vmatprep.subr.mxu0 0.0
    %3580 = vmatpush2.msra.mxu0 0.0
    %3581 = vmatprep.subr.mxu0 0.0
    %3582 = vmatpush2.msra.mxu0 0.0
    %3583 = vmatprep.subr.mxu0 0.0
    %3584 = vmatpush2.msra.mxu0 0.0
    %3585 = vmatprep.subr.mxu0 0.0
    %3586 = vmatpush2.msra.mxu0 0.0
    %3587 = vmatprep.subr.mxu0 0.0
    %3588 = vmatpush2.msra.mxu0 0.0
    %3589 = vmatprep.subr.mxu0 0.0
    %3590 = vmatpush2.msra.mxu0 0.0
    %3591 = vmatprep.subr.mxu0 0.0
    %3592 = vmatpush2.msra.mxu0 0.0
    %3593 = vmatprep.subr.mxu0 0.0
    %3594 = vmatpush2.msra.mxu0 0.0
    %3595 = vmatprep.subr.mxu0 0.0
    %3596 = vmatpush2.msra.mxu0 0.0
    %3597 = vmatprep.subr.mxu0 0.0
    %3598 = vmatpush2.msra.mxu0 0.0
    %3599 = vmatprep.subr.mxu0 0.0
    %3600 = vmatpush2.msra.mxu0 0.0
    %3601 = vmatprep.mubr.f32.mxu0 0.0
    %3602 = vmatmul.mubr.f32.gmra.mxu0 %v3535
    %v3603 = vpop.f32.mrf.mxu0
    %v3604 = vadd.f32 0.0, %v3603
    %v3605 = vpop.f32.mrf.mxu0
    %3606 = vdwg.mxu0
    %3607 = vrot.lane.b32.xlu0 %v2412, 112
    %v3608 = vpop.permute.xlu0 %3607
    %3609 = vrot.lane.b32.xlu0 %v2413, 112
    %v3610 = vpop.permute.xlu0 %3609
    %3611 = vrot.lane.b32.xlu0 %v2414, 112
    %v3612 = vpop.permute.xlu0 %3611
    %3613 = vrot.lane.b32.xlu0 %v2415, 112
    %v3614 = vpop.permute.xlu0 %3613
    %v3616 = vsel %vm245, %v3528, 0
    %v3619 = vsel %vm245, %v3604, 0
    %v3621 = vsel %vm245, %v3608, 0
    %v3623 = vsel %vm245, %v3610, 0
    %v3625 = vsel %vm245, %v3612, 0
    %v3627 = vsel %vm245, %v3614, 0
    %3629 = vmatprep.subr.mxu0 0.0
    %3630 = vmatpush1.xpose.msra.mxu0 0.0
    %3631 = vmatprep.subr.mxu0 0.0
    %3632 = vmatpush1.xpose.msra.mxu0 0.0
    %3633 = vmatprep.subr.mxu0 0.0
    %3634 = vmatpush1.xpose.msra.mxu0 0.0
    %3635 = vmatprep.subr.mxu0 0.0
    %3636 = vmatpush1.xpose.msra.mxu0 0.0
    %3637 = vmatprep.subr.mxu0 0.0
    %3638 = vmatpush1.xpose.msra.mxu0 0.0
    %3639 = vmatprep.subr.mxu0 0.0
    %3640 = vmatpush1.xpose.msra.mxu0 0.0
    %3641 = vmatprep.subr.mxu0 0.0
    %3642 = vmatpush1.xpose.msra.mxu0 0.0
    %3643 = vmatprep.subr.mxu0 0.0
    %3644 = vmatpush1.xpose.msra.mxu0 0.0
    %3645 = vmatprep.subr.mxu0 0.0
    %3646 = vmatpush1.xpose.msra.mxu0 0.0
    %3647 = vmatprep.subr.mxu0 0.0
    %3648 = vmatpush1.xpose.msra.mxu0 0.0
    %3649 = vmatprep.subr.mxu0 0.0
    %3650 = vmatpush1.xpose.msra.mxu0 0.0
    %3651 = vmatprep.subr.mxu0 0.0
    %3652 = vmatpush1.xpose.msra.mxu0 0.0
    %3653 = vmatprep.subr.mxu0 0.0
    %3654 = vmatpush1.xpose.msra.mxu0 %v3627
    %3655 = vmatprep.subr.mxu0 0.0
    %3656 = vmatpush1.xpose.msra.mxu0 %v3625
    %3657 = vmatprep.subr.mxu0 0.0
    %3658 = vmatpush1.xpose.msra.mxu0 %v3623
    %3659 = vmatprep.subr.mxu0 0.0
    %3660 = vmatpush1.xpose.msra.mxu0 %v3621
    %3661 = vmatprep.subr.mxu0 0.0
    %3662 = vmatpush2.xpose.msra.mxu0 0.0
    %3663 = vmatprep.subr.mxu0 0.0
    %3664 = vmatpush2.xpose.msra.mxu0 0.0
    %3665 = vmatprep.subr.mxu0 0.0
    %3666 = vmatpush2.xpose.msra.mxu0 0.0
    %3667 = vmatprep.subr.mxu0 0.0
    %3668 = vmatpush2.xpose.msra.mxu0 0.0
    %3669 = vmatprep.subr.mxu0 0.0
    %3670 = vmatpush2.xpose.msra.mxu0 0.0
    %3671 = vmatprep.subr.mxu0 0.0
    %3672 = vmatpush2.xpose.msra.mxu0 0.0
    %3673 = vmatprep.subr.mxu0 0.0
    %3674 = vmatpush2.xpose.msra.mxu0 0.0
    %3675 = vmatprep.subr.mxu0 0.0
    %3676 = vmatpush2.xpose.msra.mxu0 0.0
    %3677 = vmatprep.subr.mxu0 0.0
    %3678 = vmatpush2.xpose.msra.mxu0 0.0
    %3679 = vmatprep.subr.mxu0 0.0
    %3680 = vmatpush2.xpose.msra.mxu0 0.0
    %3681 = vmatprep.subr.mxu0 0.0
    %3682 = vmatpush2.xpose.msra.mxu0 0.0
    %3683 = vmatprep.subr.mxu0 0.0
    %3684 = vmatpush2.xpose.msra.mxu0 0.0
    %3685 = vmatprep.subr.mxu0 0.0
    %3686 = vmatpush2.xpose.msra.mxu0 0.0
    %3687 = vmatprep.subr.mxu0 0.0
    %3688 = vmatpush2.xpose.msra.mxu0 0.0
    %3689 = vmatprep.subr.mxu0 0.0
    %3690 = vmatpush2.xpose.msra.mxu0 0.0
    %3691 = vmatprep.subr.mxu0 0.0
    %3692 = vmatpush2.xpose.msra.mxu0 0.0
    %3693 = vmatprep.mubr.f32.mxu0 0.0
    %3694 = vmatmul.mubr.f32.gmra.mxu0 %v3616
    %v3695 = vpop.f32.mrf.mxu0
    %v3696 = vadd.f32 0.0, %v3695
    %v3697 = vpop.f32.mrf.mxu0
    %3698 = vmatprep.mubr.f32.mxu0 0.0
    %3699 = vmatmul.mubr.f32.gmra.mxu0 %v3619
    %v3700 = vpop.f32.mrf.mxu0
    %v3701 = vadd.f32 0.0, %v3700
    %v3702 = vpop.f32.mrf.mxu0
    %3703 = vdwg.mxu0
    %v3704 = vadd.f32 %v3275, %v3696
    %v3705 = vadd.f32 %v3276, %v3701
    %3706 = vrot.lane.b32.xlu0 %v2403, 104
    %v3707 = vpop.permute.xlu0 %3706
    %3708 = vrot.lane.b32.xlu0 %v2403, 72
    %v3709 = vpop.permute.xlu0 %3708
    %v3710 = vsel %vm245, %v3707, 0
    %v3712 = vsel %vm245, %v3709, 0
    %3714 = vmatprep.subr.mxu0 0.0
    %3715 = vmatpush1.xpose.msra.mxu0 0.0
    %3716 = vmatprep.subr.mxu0 0.0
    %3717 = vmatpush1.xpose.msra.mxu0 0.0
    %3718 = vmatprep.subr.mxu0 0.0
    %3719 = vmatpush1.xpose.msra.mxu0 0.0
    %3720 = vmatprep.subr.mxu0 0.0
    %3721 = vmatpush1.xpose.msra.mxu0 0.0
    %3722 = vmatprep.subr.mxu0 0.0
    %3723 = vmatpush1.xpose.msra.mxu0 0.0
    %3724 = vmatprep.subr.mxu0 0.0
    %3725 = vmatpush1.xpose.msra.mxu0 0.0
    %3726 = vmatprep.subr.mxu0 0.0
    %3727 = vmatpush1.xpose.msra.mxu0 0.0
    %3728 = vmatprep.subr.mxu0 0.0
    %3729 = vmatpush1.xpose.msra.mxu0 0.0
    %3730 = vmatprep.subr.mxu0 0.0
    %3731 = vmatpush1.xpose.msra.mxu0 0.0
    %3732 = vmatprep.subr.mxu0 0.0
    %3733 = vmatpush1.xpose.msra.mxu0 0.0
    %3734 = vmatprep.subr.mxu0 0.0
    %3735 = vmatpush1.xpose.msra.mxu0 0.0
    %3736 = vmatprep.subr.mxu0 0.0
    %3737 = vmatpush1.xpose.msra.mxu0 0.0
    %3738 = vmatprep.subr.mxu0 0.0
    %3739 = vmatpush1.xpose.msra.mxu0 0.0
    %3740 = vmatprep.subr.mxu0 0.0
    %3741 = vmatpush1.xpose.msra.mxu0 0.0
    %3742 = vmatprep.subr.mxu0 0.0
    %3743 = vmatpush1.xpose.msra.mxu0 0.0
    %3744 = vmatprep.subr.mxu0 0.0
    %3745 = vmatpush1.xpose.msra.mxu0 %v3712
    %3746 = vmatprep.subr.mxu0 0.0
    %3747 = vmatpush2.xpose.msra.mxu0 0.0
    %3748 = vmatprep.subr.mxu0 0.0
    %3749 = vmatpush2.xpose.msra.mxu0 0.0
    %3750 = vmatprep.subr.mxu0 0.0
    %3751 = vmatpush2.xpose.msra.mxu0 0.0
    %3752 = vmatprep.subr.mxu0 0.0
    %3753 = vmatpush2.xpose.msra.mxu0 0.0
    %3754 = vmatprep.subr.mxu0 0.0
    %3755 = vmatpush2.xpose.msra.mxu0 0.0
    %3756 = vmatprep.subr.mxu0 0.0
    %3757 = vmatpush2.xpose.msra.mxu0 0.0
    %3758 = vmatprep.subr.mxu0 0.0
    %3759 = vmatpush2.xpose.msra.mxu0 0.0
    %3760 = vmatprep.subr.mxu0 0.0
    %3761 = vmatpush2.xpose.msra.mxu0 0.0
    %3762 = vmatprep.subr.mxu0 0.0
    %3763 = vmatpush2.xpose.msra.mxu0 0.0
    %3764 = vmatprep.subr.mxu0 0.0
    %3765 = vmatpush2.xpose.msra.mxu0 0.0
    %3766 = vmatprep.subr.mxu0 0.0
    %3767 = vmatpush2.xpose.msra.mxu0 0.0
    %3768 = vmatprep.subr.mxu0 0.0
    %3769 = vmatpush2.xpose.msra.mxu0 0.0
    %3770 = vmatprep.subr.mxu0 0.0
    %3771 = vmatpush2.xpose.msra.mxu0 0.0
    %3772 = vmatprep.subr.mxu0 0.0
    %3773 = vmatpush2.xpose.msra.mxu0 0.0
    %3774 = vmatprep.subr.mxu0 0.0
    %3775 = vmatpush2.xpose.msra.mxu0 0.0
    %3776 = vmatprep.subr.mxu0 0.0
    %3777 = vmatpush2.xpose.msra.mxu0 0.0
    %3778 = vmatprep.mubr.f32.mxu0 0.0
    %3779 = vmatmul.mubr.f32.gmra.mxu0 %v3710
    %v3780 = vpop.f32.mrf.mxu0
    %v3781 = vadd.f32 %v235, %v3780
    %v3782 = vpop.f32.mrf.mxu0
    %3783 = vdwg.mxu0
    %3784 = vrot.lane.b32.xlu0 %v2408, 104
    %v3785 = vpop.permute.xlu0 %3784
    %3786 = vrot.lane.b32.xlu0 %v2408, 72
    %v3787 = vpop.permute.xlu0 %3786
    %v3788 = vsel %vm245, %v3785, 0
    %v3790 = vsel %vm245, %v3787, 0
    %3792 = vmatprep.subr.mxu0 0.0
    %3793 = vmatpush1.xpose.msra.mxu0 0.0
    %3794 = vmatprep.subr.mxu0 0.0
    %3795 = vmatpush1.xpose.msra.mxu0 0.0
    %3796 = vmatprep.subr.mxu0 0.0
    %3797 = vmatpush1.xpose.msra.mxu0 0.0
    %3798 = vmatprep.subr.mxu0 0.0
    %3799 = vmatpush1.xpose.msra.mxu0 0.0
    %3800 = vmatprep.subr.mxu0 0.0
    %3801 = vmatpush1.xpose.msra.mxu0 0.0
    %3802 = vmatprep.subr.mxu0 0.0
    %3803 = vmatpush1.xpose.msra.mxu0 0.0
    %3804 = vmatprep.subr.mxu0 0.0
    %3805 = vmatpush1.xpose.msra.mxu0 0.0
    %3806 = vmatprep.subr.mxu0 0.0
    %3807 = vmatpush1.xpose.msra.mxu0 0.0
    %3808 = vmatprep.subr.mxu0 0.0
    %3809 = vmatpush1.xpose.msra.mxu0 0.0
    %3810 = vmatprep.subr.mxu0 0.0
    %3811 = vmatpush1.xpose.msra.mxu0 0.0
    %3812 = vmatprep.subr.mxu0 0.0
    %3813 = vmatpush1.xpose.msra.mxu0 0.0
    %3814 = vmatprep.subr.mxu0 0.0
    %3815 = vmatpush1.xpose.msra.mxu0 0.0
    %3816 = vmatprep.subr.mxu0 0.0
    %3817 = vmatpush1.xpose.msra.mxu0 0.0
    %3818 = vmatprep.subr.mxu0 0.0
    %3819 = vmatpush1.xpose.msra.mxu0 0.0
    %3820 = vmatprep.subr.mxu0 0.0
    %3821 = vmatpush1.xpose.msra.mxu0 0.0
    %3822 = vmatprep.subr.mxu0 0.0
    %3823 = vmatpush1.xpose.msra.mxu0 %v3790
    %3824 = vmatprep.subr.mxu0 0.0
    %3825 = vmatpush2.xpose.msra.mxu0 0.0
    %3826 = vmatprep.subr.mxu0 0.0
    %3827 = vmatpush2.xpose.msra.mxu0 0.0
    %3828 = vmatprep.subr.mxu0 0.0
    %3829 = vmatpush2.xpose.msra.mxu0 0.0
    %3830 = vmatprep.subr.mxu0 0.0
    %3831 = vmatpush2.xpose.msra.mxu0 0.0
    %3832 = vmatprep.subr.mxu0 0.0
    %3833 = vmatpush2.xpose.msra.mxu0 0.0
    %3834 = vmatprep.subr.mxu0 0.0
    %3835 = vmatpush2.xpose.msra.mxu0 0.0
    %3836 = vmatprep.subr.mxu0 0.0
    %3837 = vmatpush2.xpose.msra.mxu0 0.0
    %3838 = vmatprep.subr.mxu0 0.0
    %3839 = vmatpush2.xpose.msra.mxu0 0.0
    %3840 = vmatprep.subr.mxu0 0.0
    %3841 = vmatpush2.xpose.msra.mxu0 0.0
    %3842 = vmatprep.subr.mxu0 0.0
    %3843 = vmatpush2.xpose.msra.mxu0 0.0
    %3844 = vmatprep.subr.mxu0 0.0
    %3845 = vmatpush2.xpose.msra.mxu0 0.0
    %3846 = vmatprep.subr.mxu0 0.0
    %3847 = vmatpush2.xpose.msra.mxu0 0.0
    %3848 = vmatprep.subr.mxu0 0.0
    %3849 = vmatpush2.xpose.msra.mxu0 0.0
    %3850 = vmatprep.subr.mxu0 0.0
    %3851 = vmatpush2.xpose.msra.mxu0 0.0
    %3852 = vmatprep.subr.mxu0 0.0
    %3853 = vmatpush2.xpose.msra.mxu0 0.0
    %3854 = vmatprep.subr.mxu0 0.0
    %3855 = vmatpush2.xpose.msra.mxu0 0.0
    %3856 = vmatprep.mubr.f32.mxu0 0.0
    %3857 = vmatmul.mubr.f32.gmra.mxu0 %v3788
    %v3858 = vpop.f32.mrf.mxu0
    %v3859 = vadd.f32 %v239, %v3858
    %v3860 = vpop.f32.mrf.mxu0
    %3861 = vdwg.mxu0
    %v3862 = vsel %vm245, %v3781, -inf
    %3863 = vmax.xlane.f32.xlu0 %v3862
    %v3864 = vpop.xlane.xlu0 %3863
    %v3865 = vsel %vm245, %v3859, -inf
    %3866 = vmax.xlane.f32.xlu0 %v3865
    %v3867 = vpop.xlane.xlu0 %3866
    %v3868 = vsub.f32 %v3781, %v3864
    %v3869 = vsub.f32 %v3859, %v3867
    %v3870 = vmul.f32 %v3868, 1.442695
    %v3871 = vpow.pop %v3870
    %v3872 = vmul.f32 %v3869, 1.442695
    %v3873 = vpow.pop %v3872
    %v3874 = vsel %vm245, %v3871, 0.0
    %3875 = vadd.xlane.f32.xlu0 %v3874
    %v3876 = vpop.xlane.xlu0 %3875
    %v3877 = vsel %vm245, %v3873, 0.0
    %3878 = vadd.xlane.f32.xlu0 %v3877
    %v3879 = vpop.xlane.xlu0 %3878
    %v3880 = vrcp.pop %v3876
    %v3881 = vrcp.pop %v3879
    %v3882 = vmul.f32 %v3871, %v3880
    %v3883 = vmul.f32 %v3873, %v3881
    %3884 = vrot.lane.b32.xlu0 %v2403, 40
    %v3885 = vpop.permute.xlu0 %3884
    %v3888 = vsel %vm245, %v3882, 0
    %3890 = vmatprep.subr.mxu0 0.0
    %3891 = vmatpush1.msra.mxu0 0.0
    %3892 = vmatprep.subr.mxu0 0.0
    %3893 = vmatpush1.msra.mxu0 0.0
    %3894 = vmatprep.subr.mxu0 0.0
    %3895 = vmatpush1.msra.mxu0 0.0
    %3896 = vmatprep.subr.mxu0 0.0
    %3897 = vmatpush1.msra.mxu0 0.0
    %3898 = vmatprep.subr.mxu0 0.0
    %3899 = vmatpush1.msra.mxu0 0.0
    %3900 = vmatprep.subr.mxu0 0.0
    %3901 = vmatpush1.msra.mxu0 0.0
    %3902 = vmatprep.subr.mxu0 0.0
    %3903 = vmatpush1.msra.mxu0 0.0
    %3904 = vmatprep.subr.mxu0 0.0
    %3905 = vmatpush1.msra.mxu0 0.0
    %3906 = vmatprep.subr.mxu0 0.0
    %3907 = vmatpush1.msra.mxu0 0.0
    %3908 = vmatprep.subr.mxu0 0.0
    %3909 = vmatpush1.msra.mxu0 0.0
    %3910 = vmatprep.subr.mxu0 0.0
    %3911 = vmatpush1.msra.mxu0 0.0
    %3912 = vmatprep.subr.mxu0 0.0
    %3913 = vmatpush1.msra.mxu0 0.0
    %3914 = vmatprep.subr.mxu0 0.0
    %3915 = vmatpush1.msra.mxu0 0.0
    %3916 = vmatprep.subr.mxu0 0.0
    %3917 = vmatpush1.msra.mxu0 0.0
    %3918 = vmatprep.subr.mxu0 0.0
    %3919 = vmatpush1.msra.mxu0 0.0
    %3920 = vmatprep.subr.mxu0 0.0
    %3921 = vmatpush1.msra.mxu0 %v3885
    %3922 = vmatprep.subr.mxu0 0.0
    %3923 = vmatpush2.msra.mxu0 0.0
    %3924 = vmatprep.subr.mxu0 0.0
    %3925 = vmatpush2.msra.mxu0 0.0
    %3926 = vmatprep.subr.mxu0 0.0
    %3927 = vmatpush2.msra.mxu0 0.0
    %3928 = vmatprep.subr.mxu0 0.0
    %3929 = vmatpush2.msra.mxu0 0.0
    %3930 = vmatprep.subr.mxu0 0.0
    %3931 = vmatpush2.msra.mxu0 0.0
    %3932 = vmatprep.subr.mxu0 0.0
    %3933 = vmatpush2.msra.mxu0 0.0
    %3934 = vmatprep.subr.mxu0 0.0
    %3935 = vmatpush2.msra.mxu0 0.0
    %3936 = vmatprep.subr.mxu0 0.0
    %3937 = vmatpush2.msra.mxu0 0.0
    %3938 = vmatprep.subr.mxu0 0.0
    %3939 = vmatpush2.msra.mxu0 0.0
    %3940 = vmatprep.subr.mxu0 0.0
    %3941 = vmatpush2.msra.mxu0 0.0
    %3942 = vmatprep.subr.mxu0 0.0
    %3943 = vmatpush2.msra.mxu0 0.0
    %3944 = vmatprep.subr.mxu0 0.0
    %3945 = vmatpush2.msra.mxu0 0.0
    %3946 = vmatprep.subr.mxu0 0.0
    %3947 = vmatpush2.msra.mxu0 0.0
    %3948 = vmatprep.subr.mxu0 0.0
    %3949 = vmatpush2.msra.mxu0 0.0
    %3950 = vmatprep.subr.mxu0 0.0
    %3951 = vmatpush2.msra.mxu0 0.0
    %3952 = vmatprep.subr.mxu0 0.0
    %3953 = vmatpush2.msra.mxu0 0.0
    %3954 = vmatprep.mubr.f32.mxu0 0.0
    %3955 = vmatmul.mubr.f32.gmra.mxu0 %v3888
    %v3956 = vpop.f32.mrf.mxu0
    %v3957 = vadd.f32 0.0, %v3956
    %v3958 = vpop.f32.mrf.mxu0
    %3959 = vdwg.mxu0
    %3960 = vrot.lane.b32.xlu0 %v2408, 40
    %v3961 = vpop.permute.xlu0 %3960
    %v3964 = vsel %vm245, %v3883, 0
    %3966 = vmatprep.subr.mxu0 0.0
    %3967 = vmatpush1.msra.mxu0 0.0
    %3968 = vmatprep.subr.mxu0 0.0
    %3969 = vmatpush1.msra.mxu0 0.0
    %3970 = vmatprep.subr.mxu0 0.0
    %3971 = vmatpush1.msra.mxu0 0.0
    %3972 = vmatprep.subr.mxu0 0.0
    %3973 = vmatpush1.msra.mxu0 0.0
    %3974 = vmatprep.subr.mxu0 0.0
    %3975 = vmatpush1.msra.mxu0 0.0
    %3976 = vmatprep.subr.mxu0 0.0
    %3977 = vmatpush1.msra.mxu0 0.0
    %3978 = vmatprep.subr.mxu0 0.0
    %3979 = vmatpush1.msra.mxu0 0.0
    %3980 = vmatprep.subr.mxu0 0.0
    %3981 = vmatpush1.msra.mxu0 0.0
    %3982 = vmatprep.subr.mxu0 0.0
    %3983 = vmatpush1.msra.mxu0 0.0
    %3984 = vmatprep.subr.mxu0 0.0
    %3985 = vmatpush1.msra.mxu0 0.0
    %3986 = vmatprep.subr.mxu0 0.0
    %3987 = vmatpush1.msra.mxu0 0.0
    %3988 = vmatprep.subr.mxu0 0.0
    %3989 = vmatpush1.msra.mxu0 0.0
    %3990 = vmatprep.subr.mxu0 0.0
    %3991 = vmatpush1.msra.mxu0 0.0
    %3992 = vmatprep.subr.mxu0 0.0
    %3993 = vmatpush1.msra.mxu0 0.0
    %3994 = vmatprep.subr.mxu0 0.0
    %3995 = vmatpush1.msra.mxu0 0.0
    %3996 = vmatprep.subr.mxu0 0.0
    %3997 = vmatpush1.msra.mxu0 %v3961
    %3998 = vmatprep.subr.mxu0 0.0
    %3999 = vmatpush2.msra.mxu0 0.0
    %4000 = vmatprep.subr.mxu0 0.0
    %4001 = vmatpush2.msra.mxu0 0.0
    %4002 = vmatprep.subr.mxu0 0.0
    %4003 = vmatpush2.msra.mxu0 0.0
    %4004 = vmatprep.subr.mxu0 0.0
    %4005 = vmatpush2.msra.mxu0 0.0
    %4006 = vmatprep.subr.mxu0 0.0
    %4007 = vmatpush2.msra.mxu0 0.0
    %4008 = vmatprep.subr.mxu0 0.0
    %4009 = vmatpush2.msra.mxu0 0.0
    %4010 = vmatprep.subr.mxu0 0.0
    %4011 = vmatpush2.msra.mxu0 0.0
    %4012 = vmatprep.subr.mxu0 0.0
    %4013 = vmatpush2.msra.mxu0 0.0
    %4014 = vmatprep.subr.mxu0 0.0
    %4015 = vmatpush2.msra.mxu0 0.0
    %4016 = vmatprep.subr.mxu0 0.0
    %4017 = vmatpush2.msra.mxu0 0.0
    %4018 = vmatprep.subr.mxu0 0.0
    %4019 = vmatpush2.msra.mxu0 0.0
    %4020 = vmatprep.subr.mxu0 0.0
    %4021 = vmatpush2.msra.mxu0 0.0
    %4022 = vmatprep.subr.mxu0 0.0
    %4023 = vmatpush2.msra.mxu0 0.0
    %4024 = vmatprep.subr.mxu0 0.0
    %4025 = vmatpush2.msra.mxu0 0.0
    %4026 = vmatprep.subr.mxu0 0.0
    %4027 = vmatpush2.msra.mxu0 0.0
    %4028 = vmatprep.subr.mxu0 0.0
    %4029 = vmatpush2.msra.mxu0 0.0
    %4030 = vmatprep.mubr.f32.mxu0 0.0
    %4031 = vmatmul.mubr.f32.gmra.mxu0 %v3964
    %v4032 = vpop.f32.mrf.mxu0
    %v4033 = vadd.f32 0.0, %v4032
    %v4034 = vpop.f32.mrf.mxu0
    %4035 = vdwg.mxu0
    %4036 = vrot.lane.b32.xlu0 %v2412, 104
    %v4037 = vpop.permute.xlu0 %4036
    %4038 = vrot.lane.b32.xlu0 %v2413, 104
    %v4039 = vpop.permute.xlu0 %4038
    %4040 = vrot.lane.b32.xlu0 %v2414, 104
    %v4041 = vpop.permute.xlu0 %4040
    %4042 = vrot.lane.b32.xlu0 %v2415, 104
    %v4043 = vpop.permute.xlu0 %4042
    %v4045 = vsel %vm245, %v3957, 0
    %v4048 = vsel %vm245, %v4033, 0
    %v4050 = vsel %vm245, %v4037, 0
    %v4052 = vsel %vm245, %v4039, 0
    %v4054 = vsel %vm245, %v4041, 0
    %v4056 = vsel %vm245, %v4043, 0
    %4058 = vmatprep.subr.mxu0 0.0
    %4059 = vmatpush1.xpose.msra.mxu0 0.0
    %4060 = vmatprep.subr.mxu0 0.0
    %4061 = vmatpush1.xpose.msra.mxu0 0.0
    %4062 = vmatprep.subr.mxu0 0.0
    %4063 = vmatpush1.xpose.msra.mxu0 0.0
    %4064 = vmatprep.subr.mxu0 0.0
    %4065 = vmatpush1.xpose.msra.mxu0 0.0
    %4066 = vmatprep.subr.mxu0 0.0
    %4067 = vmatpush1.xpose.msra.mxu0 0.0
    %4068 = vmatprep.subr.mxu0 0.0
    %4069 = vmatpush1.xpose.msra.mxu0 0.0
    %4070 = vmatprep.subr.mxu0 0.0
    %4071 = vmatpush1.xpose.msra.mxu0 0.0
    %4072 = vmatprep.subr.mxu0 0.0
    %4073 = vmatpush1.xpose.msra.mxu0 0.0
    %4074 = vmatprep.subr.mxu0 0.0
    %4075 = vmatpush1.xpose.msra.mxu0 0.0
    %4076 = vmatprep.subr.mxu0 0.0
    %4077 = vmatpush1.xpose.msra.mxu0 0.0
    %4078 = vmatprep.subr.mxu0 0.0
    %4079 = vmatpush1.xpose.msra.mxu0 0.0
    %4080 = vmatprep.subr.mxu0 0.0
    %4081 = vmatpush1.xpose.msra.mxu0 0.0
    %4082 = vmatprep.subr.mxu0 0.0
    %4083 = vmatpush1.xpose.msra.mxu0 %v4056
    %4084 = vmatprep.subr.mxu0 0.0
    %4085 = vmatpush1.xpose.msra.mxu0 %v4054
    %4086 = vmatprep.subr.mxu0 0.0
    %4087 = vmatpush1.xpose.msra.mxu0 %v4052
    %4088 = vmatprep.subr.mxu0 0.0
    %4089 = vmatpush1.xpose.msra.mxu0 %v4050
    %4090 = vmatprep.subr.mxu0 0.0
    %4091 = vmatpush2.xpose.msra.mxu0 0.0
    %4092 = vmatprep.subr.mxu0 0.0
    %4093 = vmatpush2.xpose.msra.mxu0 0.0
    %4094 = vmatprep.subr.mxu0 0.0
    %4095 = vmatpush2.xpose.msra.mxu0 0.0
    %4096 = vmatprep.subr.mxu0 0.0
    %4097 = vmatpush2.xpose.msra.mxu0 0.0
    %4098 = vmatprep.subr.mxu0 0.0
    %4099 = vmatpush2.xpose.msra.mxu0 0.0
    %4100 = vmatprep.subr.mxu0 0.0
    %4101 = vmatpush2.xpose.msra.mxu0 0.0
    %4102 = vmatprep.subr.mxu0 0.0
    %4103 = vmatpush2.xpose.msra.mxu0 0.0
    %4104 = vmatprep.subr.mxu0 0.0
    %4105 = vmatpush2.xpose.msra.mxu0 0.0
    %4106 = vmatprep.subr.mxu0 0.0
    %4107 = vmatpush2.xpose.msra.mxu0 0.0
    %4108 = vmatprep.subr.mxu0 0.0
    %4109 = vmatpush2.xpose.msra.mxu0 0.0
    %4110 = vmatprep.subr.mxu0 0.0
    %4111 = vmatpush2.xpose.msra.mxu0 0.0
    %4112 = vmatprep.subr.mxu0 0.0
    %4113 = vmatpush2.xpose.msra.mxu0 0.0
    %4114 = vmatprep.subr.mxu0 0.0
    %4115 = vmatpush2.xpose.msra.mxu0 0.0
    %4116 = vmatprep.subr.mxu0 0.0
    %4117 = vmatpush2.xpose.msra.mxu0 0.0
    %4118 = vmatprep.subr.mxu0 0.0
    %4119 = vmatpush2.xpose.msra.mxu0 0.0
    %4120 = vmatprep.subr.mxu0 0.0
    %4121 = vmatpush2.xpose.msra.mxu0 0.0
    %4122 = vmatprep.mubr.f32.mxu0 0.0
    %4123 = vmatmul.mubr.f32.gmra.mxu0 %v4045
    %v4124 = vpop.f32.mrf.mxu0
    %v4125 = vadd.f32 0.0, %v4124
    %v4126 = vpop.f32.mrf.mxu0
    %4127 = vmatprep.mubr.f32.mxu0 0.0
    %4128 = vmatmul.mubr.f32.gmra.mxu0 %v4048
    %v4129 = vpop.f32.mrf.mxu0
    %v4130 = vadd.f32 0.0, %v4129
    %v4131 = vpop.f32.mrf.mxu0
    %4132 = vdwg.mxu0
    %v4133 = vadd.f32 %v3704, %v4125
    %v4134 = vadd.f32 %v3705, %v4130
    %v4135 = vadd.f32 %v2271, %v4133
    %v4136 = vadd.f32 %v2272, %v4134
    %s4137 = scalar_lea.vmem %s6, 1
    %v4138 = vld [vmem:[%s4137] sm:$0x1]
    %s4139 = scalar_lea.vmem %s7, 1
    %v4140 = vld [vmem:[%s4139] sm:$0x1]
    %v4141 = vsel %vm102, %v4135, 0.0
    %4142 = vadd.xlane.f32.xlu0 %v4141
    %v4143 = vpop.xlane.xlu0 %4142
    %v4144 = vsel %vm102, %v4136, 0.0
    %4145 = vadd.xlane.f32.xlu0 %v4144
    %v4146 = vpop.xlane.xlu0 %4145
    %v4147 = vmul.f32 %v4143, %v1963
    %v4148 = vmul.f32 %v4146, %v1963
    %v4149 = vsub.f32 %v4135, %v4147
    %v4150 = vsub.f32 %v4136, %v4148
    %v4151 = vmul.f32 %v4149, %v4149
    %v4152 = vmul.f32 %v4150, %v4150
    %v4153 = vsel %vm102, %v4151, 0.0
    %4154 = vadd.xlane.f32.xlu0 %v4153
    %v4155 = vpop.xlane.xlu0 %4154
    %v4156 = vsel %vm102, %v4152, 0.0
    %4157 = vadd.xlane.f32.xlu0 %v4156
    %v4158 = vpop.xlane.xlu0 %4157
    %v4159 = vmul.f32 %v4155, %v1963
    %v4160 = vmul.f32 %v4158, %v1963
    %v4161 = vadd.f32 %v4159, 1e-05
    %v4162 = vadd.f32 %v4160, 1e-05
    %v4163 = vrsqrt.pop %v4161
    %v4164 = vrsqrt.pop %v4162
    %v4165 = vmul.f32 %v4149, %v4163
    %v4166 = vmul.f32 %v4150, %v4164
    %v4168 = vlaneseq
    %v4169 = vshrl.u32 %v4168, 7
    %v4170 = vsub.s32 0, %v4169
    %v4171 = vrot.slane %v4138, %v4170
    %v4173 = vmul.f32 %v4165, %v4171
    %v4174 = vmul.f32 %v4166, %v4171
    %v4176 = vlaneseq
    %v4177 = vshrl.u32 %v4176, 7
    %v4178 = vsub.s32 0, %v4177
    %v4179 = vrot.slane %v4140, %v4178
    %v4181 = vadd.f32 %v4173, %v4179
    %v4182 = vadd.f32 %v4174, %v4179
    %s4183 = scalar_lea.vmem %s8, 64
    %v4184 = vld [vmem:[%s4183] sm:$0xff]
    %v4185 = vld [vmem:[%s4183 + $0x8] sm:$0xff]
    %v4186 = vld [vmem:[%s4183 + $0x10] sm:$0xff]
    %v4187 = vld [vmem:[%s4183 + $0x18] sm:$0xff]
    %v4188 = vld [vmem:[%s4183 + $0x20] sm:$0xff]
    %v4189 = vld [vmem:[%s4183 + $0x28] sm:$0xff]
    %v4190 = vld [vmem:[%s4183 + $0x30] sm:$0xff]
    %v4191 = vld [vmem:[%s4183 + $0x38] sm:$0xff]
    %s4192 = scalar_lea.vmem %s9, 1
    %v4193 = vld [vmem:[%s4192] sm:$0x1]
    %v4195 = vlaneseq
    %v4196 = vshrl.u32 %v4195, 7
    %v4197 = vsub.s32 0, %v4196
    %v4198 = vrot.slane %v4193, %v4197
    %v4201 = vsel %vm102, %v4181, 0
    %v4204 = vsel %vm102, %v4182, 0
    %v4207 = vsel %vm102, %v4184, 0
    %v4210 = vsel %vm102, %v4185, 0
    %v4213 = vsel %vm102, %v4186, 0
    %v4216 = vsel %vm102, %v4187, 0
    %v4219 = vsel %vm102, %v4188, 0
    %v4222 = vsel %vm102, %v4189, 0
    %v4225 = vsel %vm102, %v4190, 0
    %v4228 = vsel %vm102, %v4191, 0
    %4230 = vmatprep.subr.mxu0 0.0
    %4231 = vmatpush1.xpose.msra.mxu0 0.0
    %4232 = vmatprep.subr.mxu0 0.0
    %4233 = vmatpush1.xpose.msra.mxu0 0.0
    %4234 = vmatprep.subr.mxu0 0.0
    %4235 = vmatpush1.xpose.msra.mxu0 0.0
    %4236 = vmatprep.subr.mxu0 0.0
    %4237 = vmatpush1.xpose.msra.mxu0 0.0
    %4238 = vmatprep.subr.mxu0 0.0
    %4239 = vmatpush1.xpose.msra.mxu0 0.0
    %4240 = vmatprep.subr.mxu0 0.0
    %4241 = vmatpush1.xpose.msra.mxu0 0.0
    %4242 = vmatprep.subr.mxu0 0.0
    %4243 = vmatpush1.xpose.msra.mxu0 0.0
    %4244 = vmatprep.subr.mxu0 0.0
    %4245 = vmatpush1.xpose.msra.mxu0 0.0
    %4246 = vmatprep.subr.mxu0 0.0
    %4247 = vmatpush1.xpose.msra.mxu0 %v4228
    %4248 = vmatprep.subr.mxu0 0.0
    %4249 = vmatpush1.xpose.msra.mxu0 %v4225
    %4250 = vmatprep.subr.mxu0 0.0
    %4251 = vmatpush1.xpose.msra.mxu0 %v4222
    %4252 = vmatprep.subr.mxu0 0.0
    %4253 = vmatpush1.xpose.msra.mxu0 %v4219
    %4254 = vmatprep.subr.mxu0 0.0
    %4255 = vmatpush1.xpose.msra.mxu0 %v4216
    %4256 = vmatprep.subr.mxu0 0.0
    %4257 = vmatpush1.xpose.msra.mxu0 %v4213
    %4258 = vmatprep.subr.mxu0 0.0
    %4259 = vmatpush1.xpose.msra.mxu0 %v4210
    %4260 = vmatprep.subr.mxu0 0.0
    %4261 = vmatpush1.xpose.msra.mxu0 %v4207
    %4262 = vmatprep.subr.mxu0 0.0
    %4263 = vmatpush2.xpose.msra.mxu0 0.0
    %4264 = vmatprep.subr.mxu0 0.0
    %4265 = vmatpush2.xpose.msra.mxu0 0.0
    %4266 = vmatprep.subr.mxu0 0.0
    %4267 = vmatpush2.xpose.msra.mxu0 0.0
    %4268 = vmatprep.subr.mxu0 0.0
    %4269 = vmatpush2.xpose.msra.mxu0 0.0
    %4270 = vmatprep.subr.mxu0 0.0
    %4271 = vmatpush2.xpose.msra.mxu0 0.0
    %4272 = vmatprep.subr.mxu0 0.0
    %4273 = vmatpush2.xpose.msra.mxu0 0.0
    %4274 = vmatprep.subr.mxu0 0.0
    %4275 = vmatpush2.xpose.msra.mxu0 0.0
    %4276 = vmatprep.subr.mxu0 0.0
    %4277 = vmatpush2.xpose.msra.mxu0 0.0
    %4278 = vmatprep.subr.mxu0 0.0
    %4279 = vmatpush2.xpose.msra.mxu0 0.0
    %4280 = vmatprep.subr.mxu0 0.0
    %4281 = vmatpush2.xpose.msra.mxu0 0.0
    %4282 = vmatprep.subr.mxu0 0.0
    %4283 = vmatpush2.xpose.msra.mxu0 0.0
    %4284 = vmatprep.subr.mxu0 0.0
    %4285 = vmatpush2.xpose.msra.mxu0 0.0
    %4286 = vmatprep.subr.mxu0 0.0
    %4287 = vmatpush2.xpose.msra.mxu0 0.0
    %4288 = vmatprep.subr.mxu0 0.0
    %4289 = vmatpush2.xpose.msra.mxu0 0.0
    %4290 = vmatprep.subr.mxu0 0.0
    %4291 = vmatpush2.xpose.msra.mxu0 0.0
    %4292 = vmatprep.subr.mxu0 0.0
    %4293 = vmatpush2.xpose.msra.mxu0 0.0
    %4294 = vmatprep.mubr.f32.mxu0 0.0
    %4295 = vmatmul.mubr.f32.gmra.mxu0 %v4201
    %v4296 = vpop.f32.mrf.mxu0
    %v4297 = vadd.f32 %v4198, %v4296
    %v4298 = vpop.f32.mrf.mxu0
    %4299 = vmatprep.mubr.f32.mxu0 0.0
    %4300 = vmatmul.mubr.f32.gmra.mxu0 %v4204
    %v4301 = vpop.f32.mrf.mxu0
    %v4302 = vadd.f32 %v4198, %v4301
    %v4303 = vpop.f32.mrf.mxu0
    %4304 = vdwg.mxu0
    %v4305 = vmax.f32 %v4297, 0.0
    %v4306 = vmax.f32 %v4302, 0.0
    %s4307 = scalar_lea.vmem %s10, 32
    %v4308 = vld [vmem:[%s4307] sm:$0xff]
    %v4309 = vld [vmem:[%s4307 + $0x8] sm:$0xff]
    %v4310 = vld [vmem:[%s4307 + $0x10] sm:$0xff]
    %v4311 = vld [vmem:[%s4307 + $0x18] sm:$0xff]
    %s4312 = scalar_lea.vmem %s11, 1
    %v4313 = vld [vmem:[%s4312] sm:$0x1]
    %v4315 = vlaneseq
    %v4316 = vshrl.u32 %v4315, 7
    %v4317 = vsub.s32 0, %v4316
    %v4318 = vrot.slane %v4313, %v4317
    %v4321 = vsel %vm2133, %v4305, 0
    %v4324 = vsel %vm2133, %v4306, 0
    %v4327 = vsel %vm2133, %v4308, 0
    %v4330 = vsel %vm2133, %v4309, 0
    %v4333 = vsel %vm2133, %v4310, 0
    %v4336 = vsel %vm2133, %v4311, 0
    %4338 = vmatprep.subr.mxu0 0.0
    %4339 = vmatpush1.xpose.msra.mxu0 0.0
    %4340 = vmatprep.subr.mxu0 0.0
    %4341 = vmatpush1.xpose.msra.mxu0 0.0
    %4342 = vmatprep.subr.mxu0 0.0
    %4343 = vmatpush1.xpose.msra.mxu0 0.0
    %4344 = vmatprep.subr.mxu0 0.0
    %4345 = vmatpush1.xpose.msra.mxu0 0.0
    %4346 = vmatprep.subr.mxu0 0.0
    %4347 = vmatpush1.xpose.msra.mxu0 0.0
    %4348 = vmatprep.subr.mxu0 0.0
    %4349 = vmatpush1.xpose.msra.mxu0 0.0
    %4350 = vmatprep.subr.mxu0 0.0
    %4351 = vmatpush1.xpose.msra.mxu0 0.0
    %4352 = vmatprep.subr.mxu0 0.0
    %4353 = vmatpush1.xpose.msra.mxu0 0.0
    %4354 = vmatprep.subr.mxu0 0.0
    %4355 = vmatpush1.xpose.msra.mxu0 0.0
    %4356 = vmatprep.subr.mxu0 0.0
    %4357 = vmatpush1.xpose.msra.mxu0 0.0
    %4358 = vmatprep.subr.mxu0 0.0
    %4359 = vmatpush1.xpose.msra.mxu0 0.0
    %4360 = vmatprep.subr.mxu0 0.0
    %4361 = vmatpush1.xpose.msra.mxu0 0.0
    %4362 = vmatprep.subr.mxu0 0.0
    %4363 = vmatpush1.xpose.msra.mxu0 %v4336
    %4364 = vmatprep.subr.mxu0 0.0
    %4365 = vmatpush1.xpose.msra.mxu0 %v4333
    %4366 = vmatprep.subr.mxu0 0.0
    %4367 = vmatpush1.xpose.msra.mxu0 %v4330
    %4368 = vmatprep.subr.mxu0 0.0
    %4369 = vmatpush1.xpose.msra.mxu0 %v4327
    %4370 = vmatprep.subr.mxu0 0.0
    %4371 = vmatpush2.xpose.msra.mxu0 0.0
    %4372 = vmatprep.subr.mxu0 0.0
    %4373 = vmatpush2.xpose.msra.mxu0 0.0
    %4374 = vmatprep.subr.mxu0 0.0
    %4375 = vmatpush2.xpose.msra.mxu0 0.0
    %4376 = vmatprep.subr.mxu0 0.0
    %4377 = vmatpush2.xpose.msra.mxu0 0.0
    %4378 = vmatprep.subr.mxu0 0.0
    %4379 = vmatpush2.xpose.msra.mxu0 0.0
    %4380 = vmatprep.subr.mxu0 0.0
    %4381 = vmatpush2.xpose.msra.mxu0 0.0
    %4382 = vmatprep.subr.mxu0 0.0
    %4383 = vmatpush2.xpose.msra.mxu0 0.0
    %4384 = vmatprep.subr.mxu0 0.0
    %4385 = vmatpush2.xpose.msra.mxu0 0.0
    %4386 = vmatprep.subr.mxu0 0.0
    %4387 = vmatpush2.xpose.msra.mxu0 0.0
    %4388 = vmatprep.subr.mxu0 0.0
    %4389 = vmatpush2.xpose.msra.mxu0 0.0
    %4390 = vmatprep.subr.mxu0 0.0
    %4391 = vmatpush2.xpose.msra.mxu0 0.0
    %4392 = vmatprep.subr.mxu0 0.0
    %4393 = vmatpush2.xpose.msra.mxu0 0.0
    %4394 = vmatprep.subr.mxu0 0.0
    %4395 = vmatpush2.xpose.msra.mxu0 0.0
    %4396 = vmatprep.subr.mxu0 0.0
    %4397 = vmatpush2.xpose.msra.mxu0 0.0
    %4398 = vmatprep.subr.mxu0 0.0
    %4399 = vmatpush2.xpose.msra.mxu0 0.0
    %4400 = vmatprep.subr.mxu0 0.0
    %4401 = vmatpush2.xpose.msra.mxu0 0.0
    %4402 = vmatprep.mubr.f32.mxu0 0.0
    %4403 = vmatmul.mubr.f32.gmra.mxu0 %v4321
    %v4404 = vpop.f32.mrf.mxu0
    %v4405 = vadd.f32 %v4318, %v4404
    %v4406 = vpop.f32.mrf.mxu0
    %4407 = vmatprep.mubr.f32.mxu0 0.0
    %4408 = vmatmul.mubr.f32.gmra.mxu0 %v4324
    %v4409 = vpop.f32.mrf.mxu0
    %v4410 = vadd.f32 %v4318, %v4409
    %v4411 = vpop.f32.mrf.mxu0
    %4412 = vdwg.mxu0
    %v4413 = vadd.f32 %v4181, %v4405
    %v4414 = vadd.f32 %v4182, %v4410
    %s4415 = scalar_lea.vmem %s12, 1
    %v4416 = vld [vmem:[%s4415] sm:$0x1]
    %s4417 = scalar_lea.vmem %s13, 1
    %v4418 = vld [vmem:[%s4417] sm:$0x1]
    %v4419 = vsel %vm102, %v4413, 0.0
    %4420 = vadd.xlane.f32.xlu0 %v4419
    %v4421 = vpop.xlane.xlu0 %4420
    %v4422 = vsel %vm102, %v4414, 0.0
    %4423 = vadd.xlane.f32.xlu0 %v4422
    %v4424 = vpop.xlane.xlu0 %4423
    %v4425 = vmul.f32 %v4421, %v1963
    %v4426 = vmul.f32 %v4424, %v1963
    %v4427 = vsub.f32 %v4413, %v4425
    %v4428 = vsub.f32 %v4414, %v4426
    %v4429 = vmul.f32 %v4427, %v4427
    %v4430 = vmul.f32 %v4428, %v4428
    %v4431 = vsel %vm102, %v4429, 0.0
    %4432 = vadd.xlane.f32.xlu0 %v4431
    %v4433 = vpop.xlane.xlu0 %4432
    %v4434 = vsel %vm102, %v4430, 0.0
    %4435 = vadd.xlane.f32.xlu0 %v4434
    %v4436 = vpop.xlane.xlu0 %4435
    %v4437 = vmul.f32 %v4433, %v1963
    %v4438 = vmul.f32 %v4436, %v1963
    %v4439 = vadd.f32 %v4437, 1e-05
    %v4440 = vadd.f32 %v4438, 1e-05
    %v4441 = vrsqrt.pop %v4439
    %v4442 = vrsqrt.pop %v4440
    %v4443 = vmul.f32 %v4427, %v4441
    %v4444 = vmul.f32 %v4428, %v4442
    %v4446 = vlaneseq
    %v4447 = vshrl.u32 %v4446, 7
    %v4448 = vsub.s32 0, %v4447
    %v4449 = vrot.slane %v4416, %v4448
    %v4451 = vmul.f32 %v4443, %v4449
    %v4452 = vmul.f32 %v4444, %v4449
    %v4454 = vlaneseq
    %v4455 = vshrl.u32 %v4454, 7
    %v4456 = vsub.s32 0, %v4455
    %v4457 = vrot.slane %v4418, %v4456
    %v4459 = vadd.f32 %v4451, %v4457
    %v4460 = vadd.f32 %v4452, %v4457
    %v4461 = vlaneseq
    %v4462 = vshrl.u32 %v4461, 7
    %v4463 = vsub.s32 0, %v4462
    %v4464 = vrot.slane %v57, %v4463
    %4466 = vbcast.lane.b32.xlu0 %v4464, 256
    %v4467 = vpop.permute.xlu0 %4466
    %v4468 = vlaneseq
    %v4469 = vshrl.u32 %v4468, 7
    %v4470 = vsub.s32 1, %v4469
    %v4471 = vrot.slane %v57, %v4470
    %4473 = vbcast.lane.b32.xlu0 %v4471, 256
    %v4474 = vpop.permute.xlu0 %4473
    %v4475 = vmul.f32 %v4459, %v4467
    %v4476 = vmul.f32 %v4460, %v4474
    %v4477 = vsel %vm102, %v4475, 0.0
    %v4478 = vrot.slane %v4477, 4
    %v4479 = vadd.f32 %v4477, %v4478
    %v4480 = vrot.slane %v4479, 2
    %v4481 = vadd.f32 %v4479, %v4480
    %v4482 = vrot.slane %v4481, 1
    %v4483 = vadd.f32 %v4481, %v4482
    %v4484 = vsel %vm102, %v4476, 0.0
    %v4485 = vrot.slane %v4484, 4
    %v4486 = vadd.f32 %v4484, %v4485
    %v4487 = vrot.slane %v4486, 2
    %v4488 = vadd.f32 %v4486, %v4487
    %v4489 = vrot.slane %v4488, 1
    %v4490 = vadd.f32 %v4488, %v4489
    %vm4491 = vcmask 58368
    %v4492 = vsel %vm4491, %v57, 0.0
    %4493 = vadd.xlane.f32.xlu0 %v4492
    %v4494 = vpop.xlane.xlu0 %4493
    %v4495 = vmax.f32 %v4494, 1e-09
    %v4496 = vrcp.pop %v4495
    %v4498 = vrot.slane %v4496, 1
    %v4501 = vmul.f32 %v4483, %v4496
    %v4502 = vmul.f32 %v4490, %v4498
    %v4503 = vld [vmem:[%s14] sm:$0xff]
    %v4504 = vld [vmem:[%s14 + $0x8] sm:$0xff]
    %v4505 = vld [vmem:[%s14 + $0x10] sm:$0xff]
    %v4506 = vld [vmem:[%s14 + $0x18] sm:$0xff]
    %v4507 = vld [vmem:[%s14 + $0x20] sm:$0xff]
    %v4508 = vld [vmem:[%s14 + $0x28] sm:$0xff]
    %v4509 = vld [vmem:[%s14 + $0x30] sm:$0xff]
    %v4510 = vld [vmem:[%s14 + $0x38] sm:$0xff]
    %v4511 = vld [vmem:[%s14 + $0x40] sm:$0xff]
    %v4512 = vld [vmem:[%s14 + $0x48] sm:$0xff]
    %v4513 = vld [vmem:[%s14 + $0x50] sm:$0xff]
    %v4514 = vld [vmem:[%s14 + $0x58] sm:$0xff]
    %v4515 = vld [vmem:[%s14 + $0x60] sm:$0xff]
    %v4516 = vld [vmem:[%s14 + $0x68] sm:$0xff]
    %v4517 = vld [vmem:[%s14 + $0x70] sm:$0xff]
    %v4518 = vld [vmem:[%s14 + $0x78] sm:$0xff]
    %v4519 = vld [vmem:[%s15] sm:$0x1]
    %v4521 = vlaneseq
    %v4522 = vshrl.u32 %v4521, 7
    %v4523 = vsub.s32 0, %v4522
    %v4524 = vrot.slane %v4519, %v4523
    %v4528 = vrot.slane %v4502, 7
    %vm4529 = vcmask 1041409
    %v4530 = vsel %vm4529, %v4528, %v4501
    %v4531 = vsel %vm102, %v4530, 0
    %v4534 = vsel %vm102, %v4503, 0
    %v4537 = vsel %vm102, %v4504, 0
    %v4540 = vsel %vm102, %v4505, 0
    %v4543 = vsel %vm102, %v4506, 0
    %v4546 = vsel %vm102, %v4507, 0
    %v4549 = vsel %vm102, %v4508, 0
    %v4552 = vsel %vm102, %v4509, 0
    %v4555 = vsel %vm102, %v4510, 0
    %v4558 = vsel %vm102, %v4511, 0
    %v4561 = vsel %vm102, %v4512, 0
    %v4564 = vsel %vm102, %v4513, 0
    %v4567 = vsel %vm102, %v4514, 0
    %v4570 = vsel %vm102, %v4515, 0
    %v4573 = vsel %vm102, %v4516, 0
    %v4576 = vsel %vm102, %v4517, 0
    %v4579 = vsel %vm102, %v4518, 0
    %4581 = vmatprep.subr.mxu0 0.0
    %4582 = vmatpush1.xpose.msra.mxu0 %v4579
    %4583 = vmatprep.subr.mxu0 0.0
    %4584 = vmatpush1.xpose.msra.mxu0 %v4576
    %4585 = vmatprep.subr.mxu0 0.0
    %4586 = vmatpush1.xpose.msra.mxu0 %v4573
    %4587 = vmatprep.subr.mxu0 0.0
    %4588 = vmatpush1.xpose.msra.mxu0 %v4570
    %4589 = vmatprep.subr.mxu0 0.0
    %4590 = vmatpush1.xpose.msra.mxu0 %v4567
    %4591 = vmatprep.subr.mxu0 0.0
    %4592 = vmatpush1.xpose.msra.mxu0 %v4564
    %4593 = vmatprep.subr.mxu0 0.0
    %4594 = vmatpush1.xpose.msra.mxu0 %v4561
    %4595 = vmatprep.subr.mxu0 0.0
    %4596 = vmatpush1.xpose.msra.mxu0 %v4558
    %4597 = vmatprep.subr.mxu0 0.0
    %4598 = vmatpush1.xpose.msra.mxu0 %v4555
    %4599 = vmatprep.subr.mxu0 0.0
    %4600 = vmatpush1.xpose.msra.mxu0 %v4552
    %4601 = vmatprep.subr.mxu0 0.0
    %4602 = vmatpush1.xpose.msra.mxu0 %v4549
    %4603 = vmatprep.subr.mxu0 0.0
    %4604 = vmatpush1.xpose.msra.mxu0 %v4546
    %4605 = vmatprep.subr.mxu0 0.0
    %4606 = vmatpush1.xpose.msra.mxu0 %v4543
    %4607 = vmatprep.subr.mxu0 0.0
    %4608 = vmatpush1.xpose.msra.mxu0 %v4540
    %4609 = vmatprep.subr.mxu0 0.0
    %4610 = vmatpush1.xpose.msra.mxu0 %v4537
    %4611 = vmatprep.subr.mxu0 0.0
    %4612 = vmatpush1.xpose.msra.mxu0 %v4534
    %4613 = vmatprep.subr.mxu0 0.0
    %4614 = vmatpush2.xpose.msra.mxu0 0.0
    %4615 = vmatprep.subr.mxu0 0.0
    %4616 = vmatpush2.xpose.msra.mxu0 0.0
    %4617 = vmatprep.subr.mxu0 0.0
    %4618 = vmatpush2.xpose.msra.mxu0 0.0
    %4619 = vmatprep.subr.mxu0 0.0
    %4620 = vmatpush2.xpose.msra.mxu0 0.0
    %4621 = vmatprep.subr.mxu0 0.0
    %4622 = vmatpush2.xpose.msra.mxu0 0.0
    %4623 = vmatprep.subr.mxu0 0.0
    %4624 = vmatpush2.xpose.msra.mxu0 0.0
    %4625 = vmatprep.subr.mxu0 0.0
    %4626 = vmatpush2.xpose.msra.mxu0 0.0
    %4627 = vmatprep.subr.mxu0 0.0
    %4628 = vmatpush2.xpose.msra.mxu0 0.0
    %4629 = vmatprep.subr.mxu0 0.0
    %4630 = vmatpush2.xpose.msra.mxu0 0.0
    %4631 = vmatprep.subr.mxu0 0.0
    %4632 = vmatpush2.xpose.msra.mxu0 0.0
    %4633 = vmatprep.subr.mxu0 0.0
    %4634 = vmatpush2.xpose.msra.mxu0 0.0
    %4635 = vmatprep.subr.mxu0 0.0
    %4636 = vmatpush2.xpose.msra.mxu0 0.0
    %4637 = vmatprep.subr.mxu0 0.0
    %4638 = vmatpush2.xpose.msra.mxu0 0.0
    %4639 = vmatprep.subr.mxu0 0.0
    %4640 = vmatpush2.xpose.msra.mxu0 0.0
    %4641 = vmatprep.subr.mxu0 0.0
    %4642 = vmatpush2.xpose.msra.mxu0 0.0
    %4643 = vmatprep.subr.mxu0 0.0
    %4644 = vmatpush2.xpose.msra.mxu0 0.0
    %4645 = vmatprep.mubr.f32.mxu0 0.0
    %4646 = vmatmul.mubr.f32.gmra.mxu0 %v4531
    %v4647 = vpop.f32.mrf.mxu0
    %v4648 = vadd.f32 %v4524, %v4647
    %v4649 = vpop.f32.mrf.mxu0
    %4650 = vdwg.mxu0
    %4651 = vst [vmem:[#allocation2] sm:$0x3] %v4648
    // Predicated region
    $region66: #{tpu_custom_call.1} parent=1 // pred_check
      _
    $region67: #{tpu_custom_call.1} parent=1 // pred_check_branch
      %4653 = sbr.rel (0) target = $region69
    $region68: #{tpu_custom_call.1} parent=1 // pred_region
      %s4655 = ssub.s32 32, 32
      %4656 = vsyncadd [#allocation3], %s4655
      %s4658 = sshll.u32 [#allocation2], 4
      %s4659 = int_to_ptr.vmem [resolvable:$true] %s4658
      %4661 = dma.vmem_to_hbm [thread:$0]  %s4659, 32, %s16, [#allocation3]
    $region69: #{tpu_custom_call.1} parent=1 // pred_fallthru
      _
    // Predicated region
    $region70: #{tpu_custom_call.1} parent=1 // pred_check
      _
    $region71: #{tpu_custom_call.1} parent=1 // pred_check_branch
      %4663 = sbr.rel (0) target = $region73
    $region72: #{tpu_custom_call.1} parent=1 // pred_region
      %4664 = dma.done [#allocation3], 32
    $region73: #{tpu_custom_call.1} parent=1 // pred_fallthru
      _
    %4665 = vsyncpa [#allocation3], 1

</llo_original>
